<compile_context>
chip_gen: v7x
topology: tpu7x:2x2x1
jax: 0.10.0
libtpu: 0.0.40
codegen_flags: <defaults>
</compile_context>

<pallas_src>
import functools

import jax
import jax.numpy as jnp
from jax.experimental import pallas as pl
from jax.experimental.pallas import tpu as pltpu

NUM_ROUTING_ITERATIONS = 3


def _routing_kernel(x_ref, w_ref, o_ref, *, num_iterations, num_capsules,
                    out_channels, r_block):
    """One grid step = one batch tile, all capsules, the full routing loop.

    x_ref : (R, I, Bt)  route-nodes-major input, in_channels in sublanes,
                        batch in lanes
    w_ref : (R, I, N)   route weights, capsules folded into N = C * O
    o_ref : (Bt, N)     squashed capsule outputs, flattened (lane-dense)
    """
    R, _I, Bt = x_ref.shape
    N = w_ref.shape[-1]
    C, O = num_capsules, out_channels

    r_starts = list(range(0, R, r_block))
    single_tile = len(r_starts) == 1

    def compute_priors(r0, rt):
        # priors[r, b, n] = sum_i x[r, i, b] * w[r, i, n]   (batched MXU matmul)
        if rt == R:
            xm, wm = x_ref[...], w_ref[...]
        else:
            xm = x_ref[pl.ds(r0, rt), :, :]
            wm = w_ref[pl.ds(r0, rt), :, :]
        return jax.lax.dot_general(
            xm, wm, dimension_numbers=(((1,), (1,)), ((0,), (0,))),
            preferred_element_type=jnp.float32)                    # (rt, Bt, N)

    # Single tile: priors fit in VMEM, compute once and reuse across the three
    # routing iterations.  Streamed: recompute per tile (priors are cheap).
    pri_cache = compute_priors(0, R) if single_tile else None

    def get_priors(r0, rt):
        return pri_cache if single_tile else compute_priors(r0, rt)

    # One-hot capsule selectors, built with iota (no gathers / transposes):
    #   e_nc[n, c] = 1 iff flat column n belongs to capsule c;  e_cn = e_nc^T
    n_nc = jax.lax.broadcasted_iota(jnp.int32, (N, C), 0)
    c_nc = jax.lax.broadcasted_iota(jnp.int32, (N, C), 1)
    e_nc = ((n_nc >= c_nc * O) & (n_nc < (c_nc + 1) * O)).astype(jnp.float32)
    c_cn = jax.lax.broadcasted_iota(jnp.int32, (C, N), 0)
    n_cn = jax.lax.broadcasted_iota(jnp.int32, (C, N), 1)
    e_cn = ((n_cn >= c_cn * O) & (n_cn < (c_cn + 1) * O)).astype(jnp.float32)

    def to_caps(t, rt):    # (rt, Bt, N) -> (rt, Bt, C): segmented sum over O (MXU)
        return jnp.dot(t.reshape(rt * Bt, N), e_nc,
                       preferred_element_type=jnp.float32).reshape(rt, Bt, C)

    def from_caps(t, rt):  # (rt, Bt, C) -> (rt, Bt, N): broadcast over O (MXU)
        return jnp.dot(t.reshape(rt * Bt, C), e_cn,
                       preferred_element_type=jnp.float32).reshape(rt, Bt, N)

    def bcast_n(t):        # (Bt, C) -> (Bt, N): per-capsule value to its O lanes
        return jnp.dot(t, e_cn, preferred_element_type=jnp.float32)

    out = jnp.zeros((Bt, N), jnp.float32)
    out_acc = jnp.zeros((Bt, N), jnp.float32)  # sum of previous iterations' outputs
    inv_r = jnp.float32(1.0 / R)

    for it in range(num_iterations):
        if it == 0:
            # logits are identically zero -> probs = 1/R for every route node.
            s = jnp.zeros((Bt, N), jnp.float32)
            for r0 in r_starts:
                rt = min(r_block, R - r0)
                s = s + jnp.sum(get_priors(r0, rt), axis=0)
            s = s * inv_r
        else:
            # logits_k[r,b,c] = sum_o priors[r,b,(c,o)] * out_acc[b,(c,o)]
            # (== cumulative delta_logits of the reference), recomputed per
            # R tile; softmax over R via flash-style online accumulation.
            m = None
            l = None
            num = jnp.zeros((Bt, N), jnp.float32)
            for ti, r0 in enumerate(r_starts):
                rt = min(r_block, R - r0)
                pri = get_priors(r0, rt)                           # (rt, Bt, N)
                lg = to_caps(pri * out_acc[None, :, :], rt)        # (rt, Bt, C)
                tile_max = jnp.max(lg, axis=0, keepdims=True)      # (1, Bt, C)
                mt = tile_max if ti == 0 else jnp.maximum(m, tile_max)
                p = jnp.exp(lg - mt)                               # (rt, Bt, C)
                contrib_l = jnp.sum(p, axis=0, keepdims=True)      # (1, Bt, C)
                contrib_n = jnp.sum(from_caps(p, rt) * pri, axis=0)  # (Bt, N)
                if ti == 0:
                    l, num = contrib_l, contrib_n
                else:
                    a = jnp.exp(m - mt)                            # (1, Bt, C)
                    l = a * l + contrib_l
                    num = bcast_n(a[0]) * num + contrib_n
                m = mt
            # s[b, n] = sum_r softmax_r(logits)[r, b, cap(n)] * priors[r, b, n]
            s = num * bcast_n(pl.reciprocal(l[0], approx=False))   # (Bt, N)

        # squash per capsule: out = s * sqrt(|s_c|^2) / (1 + |s_c|^2)
        # (eps inside the sqrt avoids the reference's 0/0 at |s| == 0)
        sq = jnp.dot(s * s, e_nc, preferred_element_type=jnp.float32)   # (Bt, C)
        scale = jnp.sqrt(sq + 1e-12) * pl.reciprocal(1.0 + sq, approx=False)
        out = bcast_n(scale) * s                                   # (Bt, N)

        if it != num_iterations - 1:
            out_acc = out_acc + out

    o_ref[...] = out.astype(o_ref.dtype)


def capsule_layer_routing(x, route_weights,
                          num_iterations=NUM_ROUTING_ITERATIONS,
                          block_b=128, r_block=None, matmul_dtype=None,
                          vmem_limit_bytes=None):
    """Pallas TPU implementation of CapsuleLayer.forward (num_route_nodes != -1).

    x:             (B, R, I) float32
    route_weights: (C, R, I, O) float32
    returns:       (C, B, 1, 1, O) float32   (same as the PyTorch module)

    matmul_dtype=jnp.bfloat16 casts x / route_weights on the wrapper side
    (halves HBM DMA and input VMEM, f32 accumulation kept) but carries ~1e-3
    relative error, so it will not meet a 1e-4 allclose vs. an f32 reference.
    """
    B, R, I = x.shape
    C, R2, I2, O = route_weights.shape
    assert (R, I) == (R2, I2), (x.shape, route_weights.shape)
    N = C * O

    in_dtype = jnp.dtype(matmul_dtype) if matmul_dtype is not None else x.dtype

    # Wrapper-side layout prep: route-nodes major, in_channels in sublanes,
    # batch in lanes; capsules folded into the matmul N axis of the weights.
    x_t = jnp.transpose(x, (1, 2, 0)).astype(in_dtype)                    # (R, I, B)
    w_t = (jnp.transpose(route_weights, (1, 2, 0, 3))
           .reshape(R, I, N).astype(in_dtype))                            # (R, I, N)

    def _pad_up(v, m):
        return ((v + m - 1) // m) * m

    # Batch tile: it is the lane dim of the x block, so it must be a multiple
    # of 128 or span the whole (padded) batch.  For large batches prefer >= 2
    # grid steps so both v7x TensorCores get work.
    if B > 128 and block_b >= 128:
        bt = (min(block_b, max(128, B // 2)) // 128) * 128
        bt = max(bt, 128)
        b_padded = _pad_up(B, bt)
    else:
        bt = b_padded = _pad_up(B, 8)
    if b_padded != B:
        x_t = jnp.pad(x_t, ((0, 0), (0, 0), (0, b_padded - B)))
    grid_b = b_padded // bt

    # Device-aware VMEM limit (don't hard-code 32 MiB: v5e/v6e have 128 MiB
    # physical, v7x 64 MiB).
    if vmem_limit_bytes is None:
        vmem_cap = 128 * 1024 * 1024
        try:
            vmem_cap = int(pltpu.get_tpu_info().vmem_capacity_bytes)
        except Exception:
            pass
        vmem_limit_bytes = min(int(0.7 * vmem_cap), 100 * 1024 * 1024)

    # R tile: the biggest tile whose routing-loop working set (physical, i.e.
    # lane/sublane padded) fits the budget; otherwise stream R.
    itemsize = jnp.dtype(in_dtype).itemsize
    n_lanes = _pad_up(N, 128)
    c_lanes = _pad_up(C, 128)
    i_sub = _pad_up(I, 8)
    if r_block is None:
        fixed = (2 * R * i_sub * _pad_up(bt, 128) * itemsize   # x tile (2 buffers)
                 + 2 * R * i_sub * n_lanes * itemsize          # w      (2 buffers)
                 + 8 * bt * n_lanes * 4)                       # s/out/out_acc/num/...
        budget = int(0.75 * vmem_limit_bytes) - fixed
        # f32 working set per R row inside the routing loop:
        #   priors + N-wide temps (probs broadcast, priors*out_acc) + compact (.,Bt,C)
        per_row = bt * (3 * n_lanes + 2 * c_lanes) * 4
        r_fit = max(budget // per_row, 0)
        if r_fit >= R:
            r_block = R
        else:
            # Stream R; keep the (fully unrolled) tile loop to <= ~32 tiles.
            r_block = max(int(r_fit) // 8 * 8, _pad_up(-(-R // 32), 8), 8)
    r_block = int(min(max(int(r_block), 1), R))

    kernel = functools.partial(
        _routing_kernel, num_iterations=num_iterations,
        num_capsules=C, out_channels=O, r_block=r_block)

    out_flat = pl.pallas_call(
        kernel,
        out_shape=jax.ShapeDtypeStruct((b_padded, N), jnp.float32),
        grid_spec=pltpu.PrefetchScalarGridSpec(
            num_scalar_prefetch=0,
            grid=(grid_b,),
            in_specs=[
                pl.BlockSpec((R, I, bt), lambda b: (0, 0, b)),   # x batch tile
                pl.BlockSpec((R, I, N), lambda b: (0, 0, 0)),    # grid-invariant w
            ],
            out_specs=pl.BlockSpec((bt, N), lambda b: (b, 0)),   # lane-dense out
        ),
        compiler_params=pltpu.CompilerParams(
            dimension_semantics=("parallel",),
            vmem_limit_bytes=int(vmem_limit_bytes)),
    )(x_t, w_t)

    out_flat = out_flat[:B]                                # drop batch padding
    out = out_flat.reshape(B, C, O).transpose(1, 0, 2)     # (C, B, O)
    return out[:, :, None, None, :]                        # (C, B, 1, 1, O)


def _reference(x, route_weights, num_iterations=NUM_ROUTING_ITERATIONS):
    """Plain-JAX transcription of the PyTorch forward (routing branch)."""
    priors = jnp.matmul(x[None, :, :, None, :],
                        route_weights[:, None, :, :, :])   # (C, B, R, 1, O)
    logits = jnp.zeros_like(priors)

    def squash(t, axis=-1):
        sq = jnp.sum(t * t, axis=axis, keepdims=True)
        return (sq / (1.0 + sq)) * t / jnp.sqrt(sq)

    outputs = None
    for i in range(num_iterations):
        probs = jax.nn.softmax(logits, axis=2)
        outputs = squash(jnp.sum(probs * priors, axis=2, keepdims=True))
        if i != num_iterations - 1:
            delta = jnp.sum(priors * outputs, axis=-1, keepdims=True)
            logits = logits + delta
    return outputs  # (C, B, 1, 1, O)


if __name__ == "__main__":
    def _check(B, C, R, I, O, seed, **kwargs):
        key = jax.random.PRNGKey(seed)
        kx, kw = jax.random.split(key)
        x = jax.random.normal(kx, (B, R, I), dtype=jnp.float32)
        w = jax.random.normal(kw, (C, R, I, O), dtype=jnp.float32)
        out = jax.block_until_ready(capsule_layer_routing(x, w, **kwargs))
        ref = jax.block_until_ready(_reference(x, w))
        assert out.shape == (C, B, 1, 1, O), out.shape
        err = float(jnp.max(jnp.abs(out - ref)))
        assert jnp.allclose(out, ref, rtol=1e-4, atol=1e-4), err

    # Small shapes consistent with the routing branch of CapsuleLayer:
    #   num_capsules C=4, num_route_nodes R=32, in_channels I=8, out_channels O=16
    _check(B=2, C=4, R=32, I=8, O=16, seed=0)              # resident-priors path
    _check(B=2, C=4, R=32, I=8, O=16, seed=1, r_block=10)  # streamed R (flash softmax)
    _check(B=5, C=3, R=24, I=8, O=16, seed=2)              # batch padding / odd C
    print("KERNEL_OK")
</pallas_src>

<mosaic_0001>
module attributes {stable_mosaic.version = 11 : i64} {
  func.func @_routing_kernel(%arg0: i32, %arg1: memref<32x8x8xf32, #tpu.memory_space<vmem>>, %arg2: memref<32x8x64xf32, #tpu.memory_space<vmem>>, %arg3: memref<8x64xf32, #tpu.memory_space<vmem>>) attributes {dimension_semantics = [#tpu.dimension_semantics<parallel>], iteration_bounds = array<i64: 1>, scalar_prefetch = 0 : i64, scratch_operands = 0 : i64, tpu.core_type = #tpu.core_type<tc>, window_params = [{transform_indices = @transform_0, window_bounds = array<i64: 32, 8, 8>}, {pipeline_mode = #tpu.pipeline_mode<synchronous>, transform_indices = @transform_1, window_bounds = array<i64: 32, 8, 64>}, {transform_indices = @transform_2, window_bounds = array<i64: 8, 64>}]} {
    %c0 = arith.constant 0 : index
    %c0_0 = arith.constant 0 : index
    %c0_1 = arith.constant 0 : index
    %0 = vector.load %arg1[%c0, %c0_0, %c0_1] : memref<32x8x8xf32, #tpu.memory_space<vmem>>, vector<32x8x8xf32>
    %c0_2 = arith.constant 0 : index
    %c0_3 = arith.constant 0 : index
    %c0_4 = arith.constant 0 : index
    %1 = vector.load %arg2[%c0_2, %c0_3, %c0_4] : memref<32x8x64xf32, #tpu.memory_space<vmem>>, vector<32x8x64xf32>
    %cst = arith.constant dense<0.000000e+00> : vector<32x8x64xf32>
    %2 = tpu.matmul %0, %1, %cst {dimension_numbers = #tpu.dot_dimension_numbers<[1], [1], [2], [2], [0, 0, 0, 2, 1, 2], [0], [0]>} : vector<32x8x8xf32>, vector<32x8x64xf32>, vector<32x8x64xf32> -> vector<32x8x64xf32>
    %3 = tpu.iota {dimensions = array<i32: 0>} : vector<64x4xi32>
    %4 = tpu.iota {dimensions = array<i32: 1>} : vector<64x4xi32>
    %c16_i32 = arith.constant 16 : i32
    %5 = vector.broadcast %c16_i32 : i32 to vector<64x4xi32>
    %6 = arith.muli %4, %5 : vector<64x4xi32>
    %7 = arith.cmpi sge, %3, %6 : vector<64x4xi32>
    %c1_i32 = arith.constant 1 : i32
    %8 = vector.broadcast %c1_i32 : i32 to vector<64x4xi32>
    %9 = arith.addi %4, %8 : vector<64x4xi32>
    %c16_i32_5 = arith.constant 16 : i32
    %10 = vector.broadcast %c16_i32_5 : i32 to vector<64x4xi32>
    %11 = arith.muli %9, %10 : vector<64x4xi32>
    %12 = arith.cmpi slt, %3, %11 : vector<64x4xi32>
    %13 = arith.andi %7, %12 : vector<64x4xi1>
    %14 = arith.extui %13 : vector<64x4xi1> to vector<64x4xi32>
    %15 = arith.sitofp %14 : vector<64x4xi32> to vector<64x4xf32>
    %16 = tpu.iota {dimensions = array<i32: 0>} : vector<4x64xi32>
    %17 = tpu.iota {dimensions = array<i32: 1>} : vector<4x64xi32>
    %c16_i32_6 = arith.constant 16 : i32
    %18 = vector.broadcast %c16_i32_6 : i32 to vector<4x64xi32>
    %19 = arith.muli %16, %18 : vector<4x64xi32>
    %20 = arith.cmpi sge, %17, %19 : vector<4x64xi32>
    %c1_i32_7 = arith.constant 1 : i32
    %21 = vector.broadcast %c1_i32_7 : i32 to vector<4x64xi32>
    %22 = arith.addi %16, %21 : vector<4x64xi32>
    %c16_i32_8 = arith.constant 16 : i32
    %23 = vector.broadcast %c16_i32_8 : i32 to vector<4x64xi32>
    %24 = arith.muli %22, %23 : vector<4x64xi32>
    %25 = arith.cmpi slt, %17, %24 : vector<4x64xi32>
    %26 = arith.andi %20, %25 : vector<4x64xi1>
    %27 = arith.extui %26 : vector<4x64xi1> to vector<4x64xi32>
    %28 = arith.sitofp %27 : vector<4x64xi32> to vector<4x64xf32>
    %cst_9 = arith.constant 0.000000e+00 : f32
    %29 = vector.broadcast %cst_9 : f32 to vector<8x64xf32>
    %cst_10 = arith.constant 0.000000e+00 : f32
    %30 = vector.broadcast %cst_10 : f32 to vector<8x64xf32>
    %cst_11 = arith.constant dense<0.000000e+00> : vector<8x64xf32>
    %31 = vector.multi_reduction <add>, %2, %cst_11 [0] : vector<32x8x64xf32> to vector<8x64xf32>
    %32 = arith.addf %30, %31 : vector<8x64xf32>
    %cst_12 = arith.constant 3.125000e-02 : f32
    %33 = vector.broadcast %cst_12 : f32 to vector<8x64xf32>
    %34 = arith.mulf %32, %33 : vector<8x64xf32>
    %35 = arith.mulf %34, %34 : vector<8x64xf32>
    %cst_13 = arith.constant dense<0.000000e+00> : vector<8x4xf32>
    %36 = tpu.matmul %35, %15, %cst_13 {dimension_numbers = #tpu.dot_dimension_numbers<[1], [0], [0], [1], [0, 0, 1, 1], [], []>} : vector<8x64xf32>, vector<64x4xf32>, vector<8x4xf32> -> vector<8x4xf32>
    %cst_14 = arith.constant 9.99999996E-13 : f32
    %37 = vector.broadcast %cst_14 : f32 to vector<8x4xf32>
    %38 = arith.addf %36, %37 : vector<8x4xf32>
    %39 = math.sqrt %38 : vector<8x4xf32>
    %cst_15 = arith.constant 1.000000e+00 : f32
    %40 = vector.broadcast %cst_15 : f32 to vector<8x4xf32>
    %41 = arith.addf %40, %36 : vector<8x4xf32>
    %42 = tpu.reciprocal %41 : vector<8x4xf32> -> vector<8x4xf32>
    %43 = arith.mulf %39, %42 : vector<8x4xf32>
    %cst_16 = arith.constant dense<0.000000e+00> : vector<8x64xf32>
    %44 = tpu.matmul %43, %28, %cst_16 {dimension_numbers = #tpu.dot_dimension_numbers<[1], [0], [0], [1], [0, 0, 1, 1], [], []>} : vector<8x4xf32>, vector<4x64xf32>, vector<8x64xf32> -> vector<8x64xf32>
    %45 = arith.mulf %44, %34 : vector<8x64xf32>
    %46 = arith.addf %29, %45 : vector<8x64xf32>
    %47 = vector.shape_cast %46 : vector<8x64xf32> to vector<1x8x64xf32>
    %48 = vector.broadcast %47 : vector<1x8x64xf32> to vector<32x8x64xf32>
    %49 = arith.mulf %2, %48 : vector<32x8x64xf32>
    %50 = vector.shape_cast %49 : vector<32x8x64xf32> to vector<256x64xf32>
    %cst_17 = arith.constant dense<0.000000e+00> : vector<256x4xf32>
    %51 = tpu.matmul %50, %15, %cst_17 {dimension_numbers = #tpu.dot_dimension_numbers<[1], [0], [0], [1], [0, 0, 1, 1], [], []>} : vector<256x64xf32>, vector<64x4xf32>, vector<256x4xf32> -> vector<256x4xf32>
    %52 = vector.shape_cast %51 : vector<256x4xf32> to vector<32x8x4xf32>
    %cst_18 = arith.constant dense<0xFF800000> : vector<8x4xf32>
    %53 = vector.multi_reduction <maximumf>, %52, %cst_18 [0] : vector<32x8x4xf32> to vector<8x4xf32>
    %54 = vector.shape_cast %53 : vector<8x4xf32> to vector<1x8x4xf32>
    %55 = vector.broadcast %54 : vector<1x8x4xf32> to vector<32x8x4xf32>
    %56 = arith.subf %52, %55 : vector<32x8x4xf32>
    %57 = math.exp %56 : vector<32x8x4xf32>
    %cst_19 = arith.constant dense<0.000000e+00> : vector<8x4xf32>
    %58 = vector.multi_reduction <add>, %57, %cst_19 [0] : vector<32x8x4xf32> to vector<8x4xf32>
    %59 = vector.shape_cast %58 : vector<8x4xf32> to vector<1x8x4xf32>
    %60 = vector.shape_cast %57 : vector<32x8x4xf32> to vector<256x4xf32>
    %cst_20 = arith.constant dense<0.000000e+00> : vector<256x64xf32>
    %61 = tpu.matmul %60, %28, %cst_20 {dimension_numbers = #tpu.dot_dimension_numbers<[1], [0], [0], [1], [0, 0, 1, 1], [], []>} : vector<256x4xf32>, vector<4x64xf32>, vector<256x64xf32> -> vector<256x64xf32>
    %62 = vector.shape_cast %61 : vector<256x64xf32> to vector<32x8x64xf32>
    %63 = arith.mulf %62, %2 : vector<32x8x64xf32>
    %cst_21 = arith.constant dense<0.000000e+00> : vector<8x64xf32>
    %64 = vector.multi_reduction <add>, %63, %cst_21 [0] : vector<32x8x64xf32> to vector<8x64xf32>
    %65 = vector.shape_cast %59 : vector<1x8x4xf32> to vector<8x4xf32>
    %66 = tpu.reciprocal %65 : vector<8x4xf32> -> vector<8x4xf32>
    %cst_22 = arith.constant dense<0.000000e+00> : vector<8x64xf32>
    %67 = tpu.matmul %66, %28, %cst_22 {dimension_numbers = #tpu.dot_dimension_numbers<[1], [0], [0], [1], [0, 0, 1, 1], [], []>} : vector<8x4xf32>, vector<4x64xf32>, vector<8x64xf32> -> vector<8x64xf32>
    %68 = arith.mulf %64, %67 : vector<8x64xf32>
    %69 = arith.mulf %68, %68 : vector<8x64xf32>
    %cst_23 = arith.constant dense<0.000000e+00> : vector<8x4xf32>
    %70 = tpu.matmul %69, %15, %cst_23 {dimension_numbers = #tpu.dot_dimension_numbers<[1], [0], [0], [1], [0, 0, 1, 1], [], []>} : vector<8x64xf32>, vector<64x4xf32>, vector<8x4xf32> -> vector<8x4xf32>
    %cst_24 = arith.constant 9.99999996E-13 : f32
    %71 = vector.broadcast %cst_24 : f32 to vector<8x4xf32>
    %72 = arith.addf %70, %71 : vector<8x4xf32>
    %73 = math.sqrt %72 : vector<8x4xf32>
    %cst_25 = arith.constant 1.000000e+00 : f32
    %74 = vector.broadcast %cst_25 : f32 to vector<8x4xf32>
    %75 = arith.addf %74, %70 : vector<8x4xf32>
    %76 = tpu.reciprocal %75 : vector<8x4xf32> -> vector<8x4xf32>
    %77 = arith.mulf %73, %76 : vector<8x4xf32>
    %cst_26 = arith.constant dense<0.000000e+00> : vector<8x64xf32>
    %78 = tpu.matmul %77, %28, %cst_26 {dimension_numbers = #tpu.dot_dimension_numbers<[1], [0], [0], [1], [0, 0, 1, 1], [], []>} : vector<8x4xf32>, vector<4x64xf32>, vector<8x64xf32> -> vector<8x64xf32>
    %79 = arith.mulf %78, %68 : vector<8x64xf32>
    %80 = arith.addf %46, %79 : vector<8x64xf32>
    %81 = vector.shape_cast %80 : vector<8x64xf32> to vector<1x8x64xf32>
    %82 = vector.broadcast %81 : vector<1x8x64xf32> to vector<32x8x64xf32>
    %83 = arith.mulf %2, %82 : vector<32x8x64xf32>
    %84 = vector.shape_cast %83 : vector<32x8x64xf32> to vector<256x64xf32>
    %cst_27 = arith.constant dense<0.000000e+00> : vector<256x4xf32>
    %85 = tpu.matmul %84, %15, %cst_27 {dimension_numbers = #tpu.dot_dimension_numbers<[1], [0], [0], [1], [0, 0, 1, 1], [], []>} : vector<256x64xf32>, vector<64x4xf32>, vector<256x4xf32> -> vector<256x4xf32>
    %86 = vector.shape_cast %85 : vector<256x4xf32> to vector<32x8x4xf32>
    %cst_28 = arith.constant dense<0xFF800000> : vector<8x4xf32>
    %87 = vector.multi_reduction <maximumf>, %86, %cst_28 [0] : vector<32x8x4xf32> to vector<8x4xf32>
    %88 = vector.shape_cast %87 : vector<8x4xf32> to vector<1x8x4xf32>
    %89 = vector.broadcast %88 : vector<1x8x4xf32> to vector<32x8x4xf32>
    %90 = arith.subf %86, %89 : vector<32x8x4xf32>
    %91 = math.exp %90 : vector<32x8x4xf32>
    %cst_29 = arith.constant dense<0.000000e+00> : vector<8x4xf32>
    %92 = vector.multi_reduction <add>, %91, %cst_29 [0] : vector<32x8x4xf32> to vector<8x4xf32>
    %93 = vector.shape_cast %92 : vector<8x4xf32> to vector<1x8x4xf32>
    %94 = vector.shape_cast %91 : vector<32x8x4xf32> to vector<256x4xf32>
    %cst_30 = arith.constant dense<0.000000e+00> : vector<256x64xf32>
    %95 = tpu.matmul %94, %28, %cst_30 {dimension_numbers = #tpu.dot_dimension_numbers<[1], [0], [0], [1], [0, 0, 1, 1], [], []>} : vector<256x4xf32>, vector<4x64xf32>, vector<256x64xf32> -> vector<256x64xf32>
    %96 = vector.shape_cast %95 : vector<256x64xf32> to vector<32x8x64xf32>
    %97 = arith.mulf %96, %2 : vector<32x8x64xf32>
    %cst_31 = arith.constant dense<0.000000e+00> : vector<8x64xf32>
    %98 = vector.multi_reduction <add>, %97, %cst_31 [0] : vector<32x8x64xf32> to vector<8x64xf32>
    %99 = vector.shape_cast %93 : vector<1x8x4xf32> to vector<8x4xf32>
    %100 = tpu.reciprocal %99 : vector<8x4xf32> -> vector<8x4xf32>
    %cst_32 = arith.constant dense<0.000000e+00> : vector<8x64xf32>
    %101 = tpu.matmul %100, %28, %cst_32 {dimension_numbers = #tpu.dot_dimension_numbers<[1], [0], [0], [1], [0, 0, 1, 1], [], []>} : vector<8x4xf32>, vector<4x64xf32>, vector<8x64xf32> -> vector<8x64xf32>
    %102 = arith.mulf %98, %101 : vector<8x64xf32>
    %103 = arith.mulf %102, %102 : vector<8x64xf32>
    %cst_33 = arith.constant dense<0.000000e+00> : vector<8x4xf32>
    %104 = tpu.matmul %103, %15, %cst_33 {dimension_numbers = #tpu.dot_dimension_numbers<[1], [0], [0], [1], [0, 0, 1, 1], [], []>} : vector<8x64xf32>, vector<64x4xf32>, vector<8x4xf32> -> vector<8x4xf32>
    %cst_34 = arith.constant 9.99999996E-13 : f32
    %105 = vector.broadcast %cst_34 : f32 to vector<8x4xf32>
    %106 = arith.addf %104, %105 : vector<8x4xf32>
    %107 = math.sqrt %106 : vector<8x4xf32>
    %cst_35 = arith.constant 1.000000e+00 : f32
    %108 = vector.broadcast %cst_35 : f32 to vector<8x4xf32>
    %109 = arith.addf %108, %104 : vector<8x4xf32>
    %110 = tpu.reciprocal %109 : vector<8x4xf32> -> vector<8x4xf32>
    %111 = arith.mulf %107, %110 : vector<8x4xf32>
    %cst_36 = arith.constant dense<0.000000e+00> : vector<8x64xf32>
    %112 = tpu.matmul %111, %28, %cst_36 {dimension_numbers = #tpu.dot_dimension_numbers<[1], [0], [0], [1], [0, 0, 1, 1], [], []>} : vector<8x4xf32>, vector<4x64xf32>, vector<8x64xf32> -> vector<8x64xf32>
    %113 = arith.mulf %112, %102 : vector<8x64xf32>
    %c0_37 = arith.constant 0 : index
    %c0_38 = arith.constant 0 : index
    %114 = vector.load %arg3[%c0_37, %c0_38] : memref<8x64xf32, #tpu.memory_space<vmem>>, vector<8x64xf32>
    tpu.vector_store %arg3[%c0_37, %c0_38], %113 {strides = array<i32>} : memref<8x64xf32, #tpu.memory_space<vmem>>, vector<8x64xf32>,
    return
  }
  func.func @transform_0(%arg0: i32) -> (i32, i32, i32) {
    %c0_i32 = arith.constant 0 : i32
    %c0_i32_0 = arith.constant 0 : i32
    %c0_i32_1 = arith.constant 0 : i32
    return %c0_i32, %c0_i32_0, %arg0 : i32, i32, i32
  }
  func.func @transform_1(%arg0: i32) -> (i32, i32, i32) {
    %c0_i32 = arith.constant 0 : i32
    %c0_i32_0 = arith.constant 0 : i32
    %c0_i32_1 = arith.constant 0 : i32
    %c0_i32_2 = arith.constant 0 : i32
    return %c0_i32, %c0_i32_0, %c0_i32_1 : i32, i32, i32
  }
  func.func @transform_2(%arg0: i32) -> (i32, i32) {
    %c0_i32 = arith.constant 0 : i32
    %c0_i32_0 = arith.constant 0 : i32
    return %arg0, %c0_i32 : i32, i32
  }
}

</mosaic_0001>

<llo_original>
// kernel: tpu_custom_call.1
$region0: #{tpu_custom_call.1}
  #allocation0 [shape = 'u32[]', space=smem, size = 0x4, offset = 0x4, fixed_abs, tag = 'smem constant byte address 0x4 - core index']
  #allocation1 [shape = 'u32[144,128]{1,0:T(1,128)}', space=vmem, size = 0x12000, scoped, tag = 'internal scratch']
  %s0 = inlined_call_operand.hbm [shape: f32[32,8,8], index: 0, kind: input, shape index: {}]
  %s1 = inlined_call_operand.hbm [shape: f32[32,8,64], index: 1, kind: input, shape index: {}]
  %s2 = inlined_call_operand.hbm [shape: f32[8,64], index: 2, kind: output, shape index: {}]
  %s3 = sld [smem:[#allocation0]]
  $region26: #{tpu_custom_call.1} parent=0
    _
  %s5 = ssub.s32 1, %s3
  %s6 = scalar_select 0, %s5, %s3
  $region1: #{tpu_custom_call.1} parent=0
    #allocation2 [shape = 'u8[131072]{0}', space=vmem, size = 0x20000, scoped, tag = 'input window, operand 0, single buffered']
    #allocation3 [shape = 's32[1]{0}', space=sflag, size = 0x4, scoped, tag = 'scoped memory for tpu_custom_call.1']
    #allocation4 [shape = 's32[1]{0}', space=sflag, size = 0x4, scoped, tag = 'scoped memory for tpu_custom_call.1']
    #allocation5 [shape = 'u8[131072]{0}', space=vmem, size = 0x20000, scoped, tag = 'input window, operand 1, single buffered']
    #allocation6 [shape = 's32[1]{0}', space=sflag, size = 0x4, scoped, tag = 'scoped memory for tpu_custom_call.1']
    #allocation7 [shape = 'u8[4096]{0}', space=vmem, size = 0x1000, scoped, tag = 'output window, operand 0, single buffered']
    %7 = vsyncpa [#allocation3], 0
    %8 = vsyncpa [#allocation6], 0
    %9 = vsyncpa [#allocation4], 0
    // Predicated region
    $region2: #{tpu_custom_call.1} parent=1 // pred_check
      _
    $region3: #{tpu_custom_call.1} parent=1 // pred_check_branch
      %11 = sbr.rel (0) target = $region5
    $region4: #{tpu_custom_call.1} parent=1 // pred_region
      %s13 = ssub.s32 4096, 4096
      %14 = vsyncadd [#allocation3], %s13
      %s15 = sshll.u32 [#allocation2], 4
      %s16 = int_to_ptr.vmem [resolvable:$true] %s15
      %21 = dma.hbm_to_vmem [thread:$0]  %s0, 4096, %s16, [#allocation3], 128, 128, 8
    $region5: #{tpu_custom_call.1} parent=1 // pred_fallthru
      _
    // Predicated region
    $region6: #{tpu_custom_call.1} parent=1 // pred_check
      _
    $region7: #{tpu_custom_call.1} parent=1 // pred_check_branch
      %23 = sbr.rel (0) target = $region9
    $region8: #{tpu_custom_call.1} parent=1 // pred_region
      %s25 = ssub.s32 4096, 4096
      %26 = vsyncadd [#allocation6], %s25
      %s27 = sshll.u32 [#allocation5], 4
      %s28 = int_to_ptr.vmem [resolvable:$true] %s27
      %33 = dma.hbm_to_vmem [thread:$0]  %s1, 4096, %s28, [#allocation6], 128, 128, 8
    $region9: #{tpu_custom_call.1} parent=1 // pred_fallthru
      _
    // Predicated region
    $region10: #{tpu_custom_call.1} parent=1 // pred_check
      _
    $region11: #{tpu_custom_call.1} parent=1 // pred_check_branch
      %35 = sbr.rel (0) target = $region13
    $region12: #{tpu_custom_call.1} parent=1 // pred_region
      %36 = dma.done [#allocation3], 4096
    $region13: #{tpu_custom_call.1} parent=1 // pred_fallthru
      _
    // Predicated region
    $region14: #{tpu_custom_call.1} parent=1 // pred_check
      _
    $region15: #{tpu_custom_call.1} parent=1 // pred_check_branch
      %38 = sbr.rel (0) target = $region17
    $region16: #{tpu_custom_call.1} parent=1 // pred_region
      %39 = dma.done [#allocation6], 4096
    $region17: #{tpu_custom_call.1} parent=1 // pred_fallthru
      _
    %v40 = vld [vmem:[#allocation2] sm:$0xff]
    %v41 = vld [vmem:[#allocation2 + $0x8] sm:$0xff]
    %v42 = vld [vmem:[#allocation2 + $0x10] sm:$0xff]
    %v43 = vld [vmem:[#allocation2 + $0x18] sm:$0xff]
    %v44 = vld [vmem:[#allocation2 + $0x20] sm:$0xff]
    %v45 = vld [vmem:[#allocation2 + $0x28] sm:$0xff]
    %v46 = vld [vmem:[#allocation2 + $0x30] sm:$0xff]
    %v47 = vld [vmem:[#allocation2 + $0x38] sm:$0xff]
    %v48 = vld [vmem:[#allocation2 + $0x40] sm:$0xff]
    %v49 = vld [vmem:[#allocation2 + $0x48] sm:$0xff]
    %v50 = vld [vmem:[#allocation2 + $0x50] sm:$0xff]
    %v51 = vld [vmem:[#allocation2 + $0x58] sm:$0xff]
    %v52 = vld [vmem:[#allocation2 + $0x60] sm:$0xff]
    %v53 = vld [vmem:[#allocation2 + $0x68] sm:$0xff]
    %v54 = vld [vmem:[#allocation2 + $0x70] sm:$0xff]
    %v55 = vld [vmem:[#allocation2 + $0x78] sm:$0xff]
    %v56 = vld [vmem:[#allocation2 + $0x80] sm:$0xff]
    %v57 = vld [vmem:[#allocation2 + $0x88] sm:$0xff]
    %v58 = vld [vmem:[#allocation2 + $0x90] sm:$0xff]
    %v59 = vld [vmem:[#allocation2 + $0x98] sm:$0xff]
    %v60 = vld [vmem:[#allocation2 + $0xa0] sm:$0xff]
    %v61 = vld [vmem:[#allocation2 + $0xa8] sm:$0xff]
    %v62 = vld [vmem:[#allocation2 + $0xb0] sm:$0xff]
    %v63 = vld [vmem:[#allocation2 + $0xb8] sm:$0xff]
    %v64 = vld [vmem:[#allocation2 + $0xc0] sm:$0xff]
    %v65 = vld [vmem:[#allocation2 + $0xc8] sm:$0xff]
    %v66 = vld [vmem:[#allocation2 + $0xd0] sm:$0xff]
    %v67 = vld [vmem:[#allocation2 + $0xd8] sm:$0xff]
    %v68 = vld [vmem:[#allocation2 + $0xe0] sm:$0xff]
    %v69 = vld [vmem:[#allocation2 + $0xe8] sm:$0xff]
    %v70 = vld [vmem:[#allocation2 + $0xf0] sm:$0xff]
    %v71 = vld [vmem:[#allocation2 + $0xf8] sm:$0xff]
    %v72 = vld [vmem:[#allocation5] sm:$0xff]
    %v73 = vld [vmem:[#allocation5 + $0x8] sm:$0xff]
    %v74 = vld [vmem:[#allocation5 + $0x10] sm:$0xff]
    %v75 = vld [vmem:[#allocation5 + $0x18] sm:$0xff]
    %v76 = vld [vmem:[#allocation5 + $0x20] sm:$0xff]
    %v77 = vld [vmem:[#allocation5 + $0x28] sm:$0xff]
    %v78 = vld [vmem:[#allocation5 + $0x30] sm:$0xff]
    %v79 = vld [vmem:[#allocation5 + $0x38] sm:$0xff]
    %v80 = vld [vmem:[#allocation5 + $0x40] sm:$0xff]
    %v81 = vld [vmem:[#allocation5 + $0x48] sm:$0xff]
    %v82 = vld [vmem:[#allocation5 + $0x50] sm:$0xff]
    %v83 = vld [vmem:[#allocation5 + $0x58] sm:$0xff]
    %v84 = vld [vmem:[#allocation5 + $0x60] sm:$0xff]
    %v85 = vld [vmem:[#allocation5 + $0x68] sm:$0xff]
    %v86 = vld [vmem:[#allocation5 + $0x70] sm:$0xff]
    %v87 = vld [vmem:[#allocation5 + $0x78] sm:$0xff]
    %v88 = vld [vmem:[#allocation5 + $0x80] sm:$0xff]
    %v89 = vld [vmem:[#allocation5 + $0x88] sm:$0xff]
    %v90 = vld [vmem:[#allocation5 + $0x90] sm:$0xff]
    %v91 = vld [vmem:[#allocation5 + $0x98] sm:$0xff]
    %v92 = vld [vmem:[#allocation5 + $0xa0] sm:$0xff]
    %v93 = vld [vmem:[#allocation5 + $0xa8] sm:$0xff]
    %v94 = vld [vmem:[#allocation5 + $0xb0] sm:$0xff]
    %v95 = vld [vmem:[#allocation5 + $0xb8] sm:$0xff]
    %v96 = vld [vmem:[#allocation5 + $0xc0] sm:$0xff]
    %v97 = vld [vmem:[#allocation5 + $0xc8] sm:$0xff]
    %v98 = vld [vmem:[#allocation5 + $0xd0] sm:$0xff]
    %v99 = vld [vmem:[#allocation5 + $0xd8] sm:$0xff]
    %v100 = vld [vmem:[#allocation5 + $0xe0] sm:$0xff]
    %v101 = vld [vmem:[#allocation5 + $0xe8] sm:$0xff]
    %v102 = vld [vmem:[#allocation5 + $0xf0] sm:$0xff]
    %v103 = vld [vmem:[#allocation5 + $0xf8] sm:$0xff]
    %104 = vxpose.xlu0.b32.start [1/16] %v40, 128
    %105 = vxpose.xlu0.b32.cont [2/16] 0.0, 128
    %106 = vxpose.xlu0.b32.cont [3/16] 0.0, 128
    %107 = vxpose.xlu0.b32.cont [4/16] 0.0, 128
    %108 = vxpose.xlu0.b32.cont [5/16] 0.0, 128
    %109 = vxpose.xlu0.b32.cont [6/16] 0.0, 128
    %110 = vxpose.xlu0.b32.cont [7/16] 0.0, 128
    %111 = vxpose.xlu0.b32.cont [8/16] 0.0, 128
    %112 = vxpose.xlu0.b32.cont [9/16] 0.0, 128
    %113 = vxpose.xlu0.b32.cont [10/16] 0.0, 128
    %114 = vxpose.xlu0.b32.cont [11/16] 0.0, 128
    %115 = vxpose.xlu0.b32.cont [12/16] 0.0, 128
    %116 = vxpose.xlu0.b32.cont [13/16] 0.0, 128
    %117 = vxpose.xlu0.b32.cont [14/16] 0.0, 128
    %118 = vxpose.xlu0.b32.cont [15/16] 0.0, 128
    %119 = vxpose.xlu0.b32.end [16/16] 0.0, 128
    %v120 = vpop.trf.xlu0
    %v121 = vpop.trf.xlu0
    %v122 = vpop.trf.xlu0
    %v123 = vpop.trf.xlu0
    %v124 = vpop.trf.xlu0
    %v125 = vpop.trf.xlu0
    %v126 = vpop.trf.xlu0
    %v127 = vpop.trf.xlu0
    %v128 = vpop.trf.xlu0
    %v129 = vpop.trf.xlu0
    %v130 = vpop.trf.xlu0
    %v131 = vpop.trf.xlu0
    %v132 = vpop.trf.xlu0
    %v133 = vpop.trf.xlu0
    %v134 = vpop.trf.xlu0
    %v135 = vpop.trf.xlu0
    %vm136 = vcmask 64512
    %v138 = vsel %vm136, %v120, 0
    %140 = vmatprep.subr.mxu0 0.0
    %141 = vmatpush1.msra.mxu0 %v72
    %142 = vmatprep.subr.mxu0 0.0
    %143 = vmatpush1.msra.mxu0 0.0
    %144 = vmatprep.subr.mxu0 0.0
    %145 = vmatpush1.msra.mxu0 0.0
    %146 = vmatprep.subr.mxu0 0.0
    %147 = vmatpush1.msra.mxu0 0.0
    %148 = vmatprep.subr.mxu0 0.0
    %149 = vmatpush1.msra.mxu0 0.0
    %150 = vmatprep.subr.mxu0 0.0
    %151 = vmatpush1.msra.mxu0 0.0
    %152 = vmatprep.subr.mxu0 0.0
    %153 = vmatpush1.msra.mxu0 0.0
    %154 = vmatprep.subr.mxu0 0.0
    %155 = vmatpush1.msra.mxu0 0.0
    %156 = vmatprep.subr.mxu0 0.0
    %157 = vmatpush1.msra.mxu0 0.0
    %158 = vmatprep.subr.mxu0 0.0
    %159 = vmatpush1.msra.mxu0 0.0
    %160 = vmatprep.subr.mxu0 0.0
    %161 = vmatpush1.msra.mxu0 0.0
    %162 = vmatprep.subr.mxu0 0.0
    %163 = vmatpush1.msra.mxu0 0.0
    %164 = vmatprep.subr.mxu0 0.0
    %165 = vmatpush1.msra.mxu0 0.0
    %166 = vmatprep.subr.mxu0 0.0
    %167 = vmatpush1.msra.mxu0 0.0
    %168 = vmatprep.subr.mxu0 0.0
    %169 = vmatpush1.msra.mxu0 0.0
    %170 = vmatprep.subr.mxu0 0.0
    %171 = vmatpush1.msra.mxu0 0.0
    %172 = vmatprep.subr.mxu0 0.0
    %173 = vmatpush1.msra.mxu0 0.0
    %174 = vmatprep.subr.mxu0 0.0
    %175 = vmatpush1.msra.mxu0 0.0
    %176 = vmatprep.subr.mxu0 0.0
    %177 = vmatpush1.msra.mxu0 0.0
    %178 = vmatprep.subr.mxu0 0.0
    %179 = vmatpush1.msra.mxu0 0.0
    %180 = vmatprep.subr.mxu0 0.0
    %181 = vmatpush1.msra.mxu0 0.0
    %182 = vmatprep.subr.mxu0 0.0
    %183 = vmatpush1.msra.mxu0 0.0
    %184 = vmatprep.subr.mxu0 0.0
    %185 = vmatpush1.msra.mxu0 0.0
    %186 = vmatprep.subr.mxu0 0.0
    %187 = vmatpush1.msra.mxu0 0.0
    %188 = vmatprep.subr.mxu0 0.0
    %189 = vmatpush1.msra.mxu0 0.0
    %190 = vmatprep.subr.mxu0 0.0
    %191 = vmatpush1.msra.mxu0 0.0
    %192 = vmatprep.subr.mxu0 0.0
    %193 = vmatpush1.msra.mxu0 0.0
    %194 = vmatprep.subr.mxu0 0.0
    %195 = vmatpush1.msra.mxu0 0.0
    %196 = vmatprep.subr.mxu0 0.0
    %197 = vmatpush1.msra.mxu0 0.0
    %198 = vmatprep.subr.mxu0 0.0
    %199 = vmatpush1.msra.mxu0 0.0
    %200 = vmatprep.subr.mxu0 0.0
    %201 = vmatpush1.msra.mxu0 0.0
    %202 = vmatprep.subr.mxu0 0.0
    %203 = vmatpush1.msra.mxu0 0.0
    %204 = vmatprep.mubr.f32.mxu0 0.0
    %205 = vmatmul.mubr.f32.gmra.mrb[0].mxu0 %v138
    %v206 = vpop.f32.mrb[0].mxu0
    %v207 = vadd.f32 0.0, %v206
    %v208 = vpop.f32.mrb[0].mxu0
    %209 = vdwg.mxu0
    %210 = vxpose.xlu0.b32.start [1/16] %v41, 128
    %211 = vxpose.xlu0.b32.cont [2/16] 0.0, 128
    %212 = vxpose.xlu0.b32.cont [3/16] 0.0, 128
    %213 = vxpose.xlu0.b32.cont [4/16] 0.0, 128
    %214 = vxpose.xlu0.b32.cont [5/16] 0.0, 128
    %215 = vxpose.xlu0.b32.cont [6/16] 0.0, 128
    %216 = vxpose.xlu0.b32.cont [7/16] 0.0, 128
    %217 = vxpose.xlu0.b32.cont [8/16] 0.0, 128
    %218 = vxpose.xlu0.b32.cont [9/16] 0.0, 128
    %219 = vxpose.xlu0.b32.cont [10/16] 0.0, 128
    %220 = vxpose.xlu0.b32.cont [11/16] 0.0, 128
    %221 = vxpose.xlu0.b32.cont [12/16] 0.0, 128
    %222 = vxpose.xlu0.b32.cont [13/16] 0.0, 128
    %223 = vxpose.xlu0.b32.cont [14/16] 0.0, 128
    %224 = vxpose.xlu0.b32.cont [15/16] 0.0, 128
    %225 = vxpose.xlu0.b32.end [16/16] 0.0, 128
    %v226 = vpop.trf.xlu0
    %v227 = vpop.trf.xlu0
    %v228 = vpop.trf.xlu0
    %v229 = vpop.trf.xlu0
    %v230 = vpop.trf.xlu0
    %v231 = vpop.trf.xlu0
    %v232 = vpop.trf.xlu0
    %v233 = vpop.trf.xlu0
    %v234 = vpop.trf.xlu0
    %v235 = vpop.trf.xlu0
    %v236 = vpop.trf.xlu0
    %v237 = vpop.trf.xlu0
    %v238 = vpop.trf.xlu0
    %v239 = vpop.trf.xlu0
    %v240 = vpop.trf.xlu0
    %v241 = vpop.trf.xlu0
    %v243 = vsel %vm136, %v226, 0
    %245 = vmatprep.subr.mxu0 0.0
    %246 = vmatpush1.msra.mxu0 %v73
    %247 = vmatprep.subr.mxu0 0.0
    %248 = vmatpush1.msra.mxu0 0.0
    %249 = vmatprep.subr.mxu0 0.0
    %250 = vmatpush1.msra.mxu0 0.0
    %251 = vmatprep.subr.mxu0 0.0
    %252 = vmatpush1.msra.mxu0 0.0
    %253 = vmatprep.subr.mxu0 0.0
    %254 = vmatpush1.msra.mxu0 0.0
    %255 = vmatprep.subr.mxu0 0.0
    %256 = vmatpush1.msra.mxu0 0.0
    %257 = vmatprep.subr.mxu0 0.0
    %258 = vmatpush1.msra.mxu0 0.0
    %259 = vmatprep.subr.mxu0 0.0
    %260 = vmatpush1.msra.mxu0 0.0
    %261 = vmatprep.subr.mxu0 0.0
    %262 = vmatpush1.msra.mxu0 0.0
    %263 = vmatprep.subr.mxu0 0.0
    %264 = vmatpush1.msra.mxu0 0.0
    %265 = vmatprep.subr.mxu0 0.0
    %266 = vmatpush1.msra.mxu0 0.0
    %267 = vmatprep.subr.mxu0 0.0
    %268 = vmatpush1.msra.mxu0 0.0
    %269 = vmatprep.subr.mxu0 0.0
    %270 = vmatpush1.msra.mxu0 0.0
    %271 = vmatprep.subr.mxu0 0.0
    %272 = vmatpush1.msra.mxu0 0.0
    %273 = vmatprep.subr.mxu0 0.0
    %274 = vmatpush1.msra.mxu0 0.0
    %275 = vmatprep.subr.mxu0 0.0
    %276 = vmatpush1.msra.mxu0 0.0
    %277 = vmatprep.subr.mxu0 0.0
    %278 = vmatpush1.msra.mxu0 0.0
    %279 = vmatprep.subr.mxu0 0.0
    %280 = vmatpush1.msra.mxu0 0.0
    %281 = vmatprep.subr.mxu0 0.0
    %282 = vmatpush1.msra.mxu0 0.0
    %283 = vmatprep.subr.mxu0 0.0
    %284 = vmatpush1.msra.mxu0 0.0
    %285 = vmatprep.subr.mxu0 0.0
    %286 = vmatpush1.msra.mxu0 0.0
    %287 = vmatprep.subr.mxu0 0.0
    %288 = vmatpush1.msra.mxu0 0.0
    %289 = vmatprep.subr.mxu0 0.0
    %290 = vmatpush1.msra.mxu0 0.0
    %291 = vmatprep.subr.mxu0 0.0
    %292 = vmatpush1.msra.mxu0 0.0
    %293 = vmatprep.subr.mxu0 0.0
    %294 = vmatpush1.msra.mxu0 0.0
    %295 = vmatprep.subr.mxu0 0.0
    %296 = vmatpush1.msra.mxu0 0.0
    %297 = vmatprep.subr.mxu0 0.0
    %298 = vmatpush1.msra.mxu0 0.0
    %299 = vmatprep.subr.mxu0 0.0
    %300 = vmatpush1.msra.mxu0 0.0
    %301 = vmatprep.subr.mxu0 0.0
    %302 = vmatpush1.msra.mxu0 0.0
    %303 = vmatprep.subr.mxu0 0.0
    %304 = vmatpush1.msra.mxu0 0.0
    %305 = vmatprep.subr.mxu0 0.0
    %306 = vmatpush1.msra.mxu0 0.0
    %307 = vmatprep.subr.mxu0 0.0
    %308 = vmatpush1.msra.mxu0 0.0
    %309 = vmatprep.mubr.f32.mxu0 0.0
    %310 = vmatmul.mubr.f32.gmra.mrb[0].mxu0 %v243
    %v311 = vpop.f32.mrb[0].mxu0
    %v312 = vadd.f32 0.0, %v311
    %v313 = vpop.f32.mrb[0].mxu0
    %314 = vdwg.mxu0
    %315 = vxpose.xlu0.b32.start [1/16] %v42, 128
    %316 = vxpose.xlu0.b32.cont [2/16] 0.0, 128
    %317 = vxpose.xlu0.b32.cont [3/16] 0.0, 128
    %318 = vxpose.xlu0.b32.cont [4/16] 0.0, 128
    %319 = vxpose.xlu0.b32.cont [5/16] 0.0, 128
    %320 = vxpose.xlu0.b32.cont [6/16] 0.0, 128
    %321 = vxpose.xlu0.b32.cont [7/16] 0.0, 128
    %322 = vxpose.xlu0.b32.cont [8/16] 0.0, 128
    %323 = vxpose.xlu0.b32.cont [9/16] 0.0, 128
    %324 = vxpose.xlu0.b32.cont [10/16] 0.0, 128
    %325 = vxpose.xlu0.b32.cont [11/16] 0.0, 128
    %326 = vxpose.xlu0.b32.cont [12/16] 0.0, 128
    %327 = vxpose.xlu0.b32.cont [13/16] 0.0, 128
    %328 = vxpose.xlu0.b32.cont [14/16] 0.0, 128
    %329 = vxpose.xlu0.b32.cont [15/16] 0.0, 128
    %330 = vxpose.xlu0.b32.end [16/16] 0.0, 128
    %v331 = vpop.trf.xlu0
    %v332 = vpop.trf.xlu0
    %v333 = vpop.trf.xlu0
    %v334 = vpop.trf.xlu0
    %v335 = vpop.trf.xlu0
    %v336 = vpop.trf.xlu0
    %v337 = vpop.trf.xlu0
    %v338 = vpop.trf.xlu0
    %v339 = vpop.trf.xlu0
    %v340 = vpop.trf.xlu0
    %v341 = vpop.trf.xlu0
    %v342 = vpop.trf.xlu0
    %v343 = vpop.trf.xlu0
    %v344 = vpop.trf.xlu0
    %v345 = vpop.trf.xlu0
    %v346 = vpop.trf.xlu0
    %v348 = vsel %vm136, %v331, 0
    %350 = vmatprep.subr.mxu0 0.0
    %351 = vmatpush1.msra.mxu0 %v74
    %352 = vmatprep.subr.mxu0 0.0
    %353 = vmatpush1.msra.mxu0 0.0
    %354 = vmatprep.subr.mxu0 0.0
    %355 = vmatpush1.msra.mxu0 0.0
    %356 = vmatprep.subr.mxu0 0.0
    %357 = vmatpush1.msra.mxu0 0.0
    %358 = vmatprep.subr.mxu0 0.0
    %359 = vmatpush1.msra.mxu0 0.0
    %360 = vmatprep.subr.mxu0 0.0
    %361 = vmatpush1.msra.mxu0 0.0
    %362 = vmatprep.subr.mxu0 0.0
    %363 = vmatpush1.msra.mxu0 0.0
    %364 = vmatprep.subr.mxu0 0.0
    %365 = vmatpush1.msra.mxu0 0.0
    %366 = vmatprep.subr.mxu0 0.0
    %367 = vmatpush1.msra.mxu0 0.0
    %368 = vmatprep.subr.mxu0 0.0
    %369 = vmatpush1.msra.mxu0 0.0
    %370 = vmatprep.subr.mxu0 0.0
    %371 = vmatpush1.msra.mxu0 0.0
    %372 = vmatprep.subr.mxu0 0.0
    %373 = vmatpush1.msra.mxu0 0.0
    %374 = vmatprep.subr.mxu0 0.0
    %375 = vmatpush1.msra.mxu0 0.0
    %376 = vmatprep.subr.mxu0 0.0
    %377 = vmatpush1.msra.mxu0 0.0
    %378 = vmatprep.subr.mxu0 0.0
    %379 = vmatpush1.msra.mxu0 0.0
    %380 = vmatprep.subr.mxu0 0.0
    %381 = vmatpush1.msra.mxu0 0.0
    %382 = vmatprep.subr.mxu0 0.0
    %383 = vmatpush1.msra.mxu0 0.0
    %384 = vmatprep.subr.mxu0 0.0
    %385 = vmatpush1.msra.mxu0 0.0
    %386 = vmatprep.subr.mxu0 0.0
    %387 = vmatpush1.msra.mxu0 0.0
    %388 = vmatprep.subr.mxu0 0.0
    %389 = vmatpush1.msra.mxu0 0.0
    %390 = vmatprep.subr.mxu0 0.0
    %391 = vmatpush1.msra.mxu0 0.0
    %392 = vmatprep.subr.mxu0 0.0
    %393 = vmatpush1.msra.mxu0 0.0
    %394 = vmatprep.subr.mxu0 0.0
    %395 = vmatpush1.msra.mxu0 0.0
    %396 = vmatprep.subr.mxu0 0.0
    %397 = vmatpush1.msra.mxu0 0.0
    %398 = vmatprep.subr.mxu0 0.0
    %399 = vmatpush1.msra.mxu0 0.0
    %400 = vmatprep.subr.mxu0 0.0
    %401 = vmatpush1.msra.mxu0 0.0
    %402 = vmatprep.subr.mxu0 0.0
    %403 = vmatpush1.msra.mxu0 0.0
    %404 = vmatprep.subr.mxu0 0.0
    %405 = vmatpush1.msra.mxu0 0.0
    %406 = vmatprep.subr.mxu0 0.0
    %407 = vmatpush1.msra.mxu0 0.0
    %408 = vmatprep.subr.mxu0 0.0
    %409 = vmatpush1.msra.mxu0 0.0
    %410 = vmatprep.subr.mxu0 0.0
    %411 = vmatpush1.msra.mxu0 0.0
    %412 = vmatprep.subr.mxu0 0.0
    %413 = vmatpush1.msra.mxu0 0.0
    %414 = vmatprep.mubr.f32.mxu0 0.0
    %415 = vmatmul.mubr.f32.gmra.mrb[0].mxu0 %v348
    %v416 = vpop.f32.mrb[0].mxu0
    %v417 = vadd.f32 0.0, %v416
    %v418 = vpop.f32.mrb[0].mxu0
    %419 = vdwg.mxu0
    %420 = vxpose.xlu0.b32.start [1/16] %v43, 128
    %421 = vxpose.xlu0.b32.cont [2/16] 0.0, 128
    %422 = vxpose.xlu0.b32.cont [3/16] 0.0, 128
    %423 = vxpose.xlu0.b32.cont [4/16] 0.0, 128
    %424 = vxpose.xlu0.b32.cont [5/16] 0.0, 128
    %425 = vxpose.xlu0.b32.cont [6/16] 0.0, 128
    %426 = vxpose.xlu0.b32.cont [7/16] 0.0, 128
    %427 = vxpose.xlu0.b32.cont [8/16] 0.0, 128
    %428 = vxpose.xlu0.b32.cont [9/16] 0.0, 128
    %429 = vxpose.xlu0.b32.cont [10/16] 0.0, 128
    %430 = vxpose.xlu0.b32.cont [11/16] 0.0, 128
    %431 = vxpose.xlu0.b32.cont [12/16] 0.0, 128
    %432 = vxpose.xlu0.b32.cont [13/16] 0.0, 128
    %433 = vxpose.xlu0.b32.cont [14/16] 0.0, 128
    %434 = vxpose.xlu0.b32.cont [15/16] 0.0, 128
    %435 = vxpose.xlu0.b32.end [16/16] 0.0, 128
    %v436 = vpop.trf.xlu0
    %v437 = vpop.trf.xlu0
    %v438 = vpop.trf.xlu0
    %v439 = vpop.trf.xlu0
    %v440 = vpop.trf.xlu0
    %v441 = vpop.trf.xlu0
    %v442 = vpop.trf.xlu0
    %v443 = vpop.trf.xlu0
    %v444 = vpop.trf.xlu0
    %v445 = vpop.trf.xlu0
    %v446 = vpop.trf.xlu0
    %v447 = vpop.trf.xlu0
    %v448 = vpop.trf.xlu0
    %v449 = vpop.trf.xlu0
    %v450 = vpop.trf.xlu0
    %v451 = vpop.trf.xlu0
    %v453 = vsel %vm136, %v436, 0
    %455 = vmatprep.subr.mxu0 0.0
    %456 = vmatpush1.msra.mxu0 %v75
    %457 = vmatprep.subr.mxu0 0.0
    %458 = vmatpush1.msra.mxu0 0.0
    %459 = vmatprep.subr.mxu0 0.0
    %460 = vmatpush1.msra.mxu0 0.0
    %461 = vmatprep.subr.mxu0 0.0
    %462 = vmatpush1.msra.mxu0 0.0
    %463 = vmatprep.subr.mxu0 0.0
    %464 = vmatpush1.msra.mxu0 0.0
    %465 = vmatprep.subr.mxu0 0.0
    %466 = vmatpush1.msra.mxu0 0.0
    %467 = vmatprep.subr.mxu0 0.0
    %468 = vmatpush1.msra.mxu0 0.0
    %469 = vmatprep.subr.mxu0 0.0
    %470 = vmatpush1.msra.mxu0 0.0
    %471 = vmatprep.subr.mxu0 0.0
    %472 = vmatpush1.msra.mxu0 0.0
    %473 = vmatprep.subr.mxu0 0.0
    %474 = vmatpush1.msra.mxu0 0.0
    %475 = vmatprep.subr.mxu0 0.0
    %476 = vmatpush1.msra.mxu0 0.0
    %477 = vmatprep.subr.mxu0 0.0
    %478 = vmatpush1.msra.mxu0 0.0
    %479 = vmatprep.subr.mxu0 0.0
    %480 = vmatpush1.msra.mxu0 0.0
    %481 = vmatprep.subr.mxu0 0.0
    %482 = vmatpush1.msra.mxu0 0.0
    %483 = vmatprep.subr.mxu0 0.0
    %484 = vmatpush1.msra.mxu0 0.0
    %485 = vmatprep.subr.mxu0 0.0
    %486 = vmatpush1.msra.mxu0 0.0
    %487 = vmatprep.subr.mxu0 0.0
    %488 = vmatpush1.msra.mxu0 0.0
    %489 = vmatprep.subr.mxu0 0.0
    %490 = vmatpush1.msra.mxu0 0.0
    %491 = vmatprep.subr.mxu0 0.0
    %492 = vmatpush1.msra.mxu0 0.0
    %493 = vmatprep.subr.mxu0 0.0
    %494 = vmatpush1.msra.mxu0 0.0
    %495 = vmatprep.subr.mxu0 0.0
    %496 = vmatpush1.msra.mxu0 0.0
    %497 = vmatprep.subr.mxu0 0.0
    %498 = vmatpush1.msra.mxu0 0.0
    %499 = vmatprep.subr.mxu0 0.0
    %500 = vmatpush1.msra.mxu0 0.0
    %501 = vmatprep.subr.mxu0 0.0
    %502 = vmatpush1.msra.mxu0 0.0
    %503 = vmatprep.subr.mxu0 0.0
    %504 = vmatpush1.msra.mxu0 0.0
    %505 = vmatprep.subr.mxu0 0.0
    %506 = vmatpush1.msra.mxu0 0.0
    %507 = vmatprep.subr.mxu0 0.0
    %508 = vmatpush1.msra.mxu0 0.0
    %509 = vmatprep.subr.mxu0 0.0
    %510 = vmatpush1.msra.mxu0 0.0
    %511 = vmatprep.subr.mxu0 0.0
    %512 = vmatpush1.msra.mxu0 0.0
    %513 = vmatprep.subr.mxu0 0.0
    %514 = vmatpush1.msra.mxu0 0.0
    %515 = vmatprep.subr.mxu0 0.0
    %516 = vmatpush1.msra.mxu0 0.0
    %517 = vmatprep.subr.mxu0 0.0
    %518 = vmatpush1.msra.mxu0 0.0
    %519 = vmatprep.mubr.f32.mxu0 0.0
    %520 = vmatmul.mubr.f32.gmra.mrb[0].mxu0 %v453
    %v521 = vpop.f32.mrb[0].mxu0
    %v522 = vadd.f32 0.0, %v521
    %v523 = vpop.f32.mrb[0].mxu0
    %524 = vdwg.mxu0
    %525 = vxpose.xlu0.b32.start [1/16] %v44, 128
    %526 = vxpose.xlu0.b32.cont [2/16] 0.0, 128
    %527 = vxpose.xlu0.b32.cont [3/16] 0.0, 128
    %528 = vxpose.xlu0.b32.cont [4/16] 0.0, 128
    %529 = vxpose.xlu0.b32.cont [5/16] 0.0, 128
    %530 = vxpose.xlu0.b32.cont [6/16] 0.0, 128
    %531 = vxpose.xlu0.b32.cont [7/16] 0.0, 128
    %532 = vxpose.xlu0.b32.cont [8/16] 0.0, 128
    %533 = vxpose.xlu0.b32.cont [9/16] 0.0, 128
    %534 = vxpose.xlu0.b32.cont [10/16] 0.0, 128
    %535 = vxpose.xlu0.b32.cont [11/16] 0.0, 128
    %536 = vxpose.xlu0.b32.cont [12/16] 0.0, 128
    %537 = vxpose.xlu0.b32.cont [13/16] 0.0, 128
    %538 = vxpose.xlu0.b32.cont [14/16] 0.0, 128
    %539 = vxpose.xlu0.b32.cont [15/16] 0.0, 128
    %540 = vxpose.xlu0.b32.end [16/16] 0.0, 128
    %v541 = vpop.trf.xlu0
    %v542 = vpop.trf.xlu0
    %v543 = vpop.trf.xlu0
    %v544 = vpop.trf.xlu0
    %v545 = vpop.trf.xlu0
    %v546 = vpop.trf.xlu0
    %v547 = vpop.trf.xlu0
    %v548 = vpop.trf.xlu0
    %v549 = vpop.trf.xlu0
    %v550 = vpop.trf.xlu0
    %v551 = vpop.trf.xlu0
    %v552 = vpop.trf.xlu0
    %v553 = vpop.trf.xlu0
    %v554 = vpop.trf.xlu0
    %v555 = vpop.trf.xlu0
    %v556 = vpop.trf.xlu0
    %v558 = vsel %vm136, %v541, 0
    %560 = vmatprep.subr.mxu0 0.0
    %561 = vmatpush1.msra.mxu0 %v76
    %562 = vmatprep.subr.mxu0 0.0
    %563 = vmatpush1.msra.mxu0 0.0
    %564 = vmatprep.subr.mxu0 0.0
    %565 = vmatpush1.msra.mxu0 0.0
    %566 = vmatprep.subr.mxu0 0.0
    %567 = vmatpush1.msra.mxu0 0.0
    %568 = vmatprep.subr.mxu0 0.0
    %569 = vmatpush1.msra.mxu0 0.0
    %570 = vmatprep.subr.mxu0 0.0
    %571 = vmatpush1.msra.mxu0 0.0
    %572 = vmatprep.subr.mxu0 0.0
    %573 = vmatpush1.msra.mxu0 0.0
    %574 = vmatprep.subr.mxu0 0.0
    %575 = vmatpush1.msra.mxu0 0.0
    %576 = vmatprep.subr.mxu0 0.0
    %577 = vmatpush1.msra.mxu0 0.0
    %578 = vmatprep.subr.mxu0 0.0
    %579 = vmatpush1.msra.mxu0 0.0
    %580 = vmatprep.subr.mxu0 0.0
    %581 = vmatpush1.msra.mxu0 0.0
    %582 = vmatprep.subr.mxu0 0.0
    %583 = vmatpush1.msra.mxu0 0.0
    %584 = vmatprep.subr.mxu0 0.0
    %585 = vmatpush1.msra.mxu0 0.0
    %586 = vmatprep.subr.mxu0 0.0
    %587 = vmatpush1.msra.mxu0 0.0
    %588 = vmatprep.subr.mxu0 0.0
    %589 = vmatpush1.msra.mxu0 0.0
    %590 = vmatprep.subr.mxu0 0.0
    %591 = vmatpush1.msra.mxu0 0.0
    %592 = vmatprep.subr.mxu0 0.0
    %593 = vmatpush1.msra.mxu0 0.0
    %594 = vmatprep.subr.mxu0 0.0
    %595 = vmatpush1.msra.mxu0 0.0
    %596 = vmatprep.subr.mxu0 0.0
    %597 = vmatpush1.msra.mxu0 0.0
    %598 = vmatprep.subr.mxu0 0.0
    %599 = vmatpush1.msra.mxu0 0.0
    %600 = vmatprep.subr.mxu0 0.0
    %601 = vmatpush1.msra.mxu0 0.0
    %602 = vmatprep.subr.mxu0 0.0
    %603 = vmatpush1.msra.mxu0 0.0
    %604 = vmatprep.subr.mxu0 0.0
    %605 = vmatpush1.msra.mxu0 0.0
    %606 = vmatprep.subr.mxu0 0.0
    %607 = vmatpush1.msra.mxu0 0.0
    %608 = vmatprep.subr.mxu0 0.0
    %609 = vmatpush1.msra.mxu0 0.0
    %610 = vmatprep.subr.mxu0 0.0
    %611 = vmatpush1.msra.mxu0 0.0
    %612 = vmatprep.subr.mxu0 0.0
    %613 = vmatpush1.msra.mxu0 0.0
    %614 = vmatprep.subr.mxu0 0.0
    %615 = vmatpush1.msra.mxu0 0.0
    %616 = vmatprep.subr.mxu0 0.0
    %617 = vmatpush1.msra.mxu0 0.0
    %618 = vmatprep.subr.mxu0 0.0
    %619 = vmatpush1.msra.mxu0 0.0
    %620 = vmatprep.subr.mxu0 0.0
    %621 = vmatpush1.msra.mxu0 0.0
    %622 = vmatprep.subr.mxu0 0.0
    %623 = vmatpush1.msra.mxu0 0.0
    %624 = vmatprep.mubr.f32.mxu0 0.0
    %625 = vmatmul.mubr.f32.gmra.mrb[0].mxu0 %v558
    %v626 = vpop.f32.mrb[0].mxu0
    %v627 = vadd.f32 0.0, %v626
    %v628 = vpop.f32.mrb[0].mxu0
    %629 = vdwg.mxu0
    %630 = vxpose.xlu0.b32.start [1/16] %v45, 128
    %631 = vxpose.xlu0.b32.cont [2/16] 0.0, 128
    %632 = vxpose.xlu0.b32.cont [3/16] 0.0, 128
    %633 = vxpose.xlu0.b32.cont [4/16] 0.0, 128
    %634 = vxpose.xlu0.b32.cont [5/16] 0.0, 128
    %635 = vxpose.xlu0.b32.cont [6/16] 0.0, 128
    %636 = vxpose.xlu0.b32.cont [7/16] 0.0, 128
    %637 = vxpose.xlu0.b32.cont [8/16] 0.0, 128
    %638 = vxpose.xlu0.b32.cont [9/16] 0.0, 128
    %639 = vxpose.xlu0.b32.cont [10/16] 0.0, 128
    %640 = vxpose.xlu0.b32.cont [11/16] 0.0, 128
    %641 = vxpose.xlu0.b32.cont [12/16] 0.0, 128
    %642 = vxpose.xlu0.b32.cont [13/16] 0.0, 128
    %643 = vxpose.xlu0.b32.cont [14/16] 0.0, 128
    %644 = vxpose.xlu0.b32.cont [15/16] 0.0, 128
    %645 = vxpose.xlu0.b32.end [16/16] 0.0, 128
    %v646 = vpop.trf.xlu0
    %v647 = vpop.trf.xlu0
    %v648 = vpop.trf.xlu0
    %v649 = vpop.trf.xlu0
    %v650 = vpop.trf.xlu0
    %v651 = vpop.trf.xlu0
    %v652 = vpop.trf.xlu0
    %v653 = vpop.trf.xlu0
    %v654 = vpop.trf.xlu0
    %v655 = vpop.trf.xlu0
    %v656 = vpop.trf.xlu0
    %v657 = vpop.trf.xlu0
    %v658 = vpop.trf.xlu0
    %v659 = vpop.trf.xlu0
    %v660 = vpop.trf.xlu0
    %v661 = vpop.trf.xlu0
    %v663 = vsel %vm136, %v646, 0
    %665 = vmatprep.subr.mxu0 0.0
    %666 = vmatpush1.msra.mxu0 %v77
    %667 = vmatprep.subr.mxu0 0.0
    %668 = vmatpush1.msra.mxu0 0.0
    %669 = vmatprep.subr.mxu0 0.0
    %670 = vmatpush1.msra.mxu0 0.0
    %671 = vmatprep.subr.mxu0 0.0
    %672 = vmatpush1.msra.mxu0 0.0
    %673 = vmatprep.subr.mxu0 0.0
    %674 = vmatpush1.msra.mxu0 0.0
    %675 = vmatprep.subr.mxu0 0.0
    %676 = vmatpush1.msra.mxu0 0.0
    %677 = vmatprep.subr.mxu0 0.0
    %678 = vmatpush1.msra.mxu0 0.0
    %679 = vmatprep.subr.mxu0 0.0
    %680 = vmatpush1.msra.mxu0 0.0
    %681 = vmatprep.subr.mxu0 0.0
    %682 = vmatpush1.msra.mxu0 0.0
    %683 = vmatprep.subr.mxu0 0.0
    %684 = vmatpush1.msra.mxu0 0.0
    %685 = vmatprep.subr.mxu0 0.0
    %686 = vmatpush1.msra.mxu0 0.0
    %687 = vmatprep.subr.mxu0 0.0
    %688 = vmatpush1.msra.mxu0 0.0
    %689 = vmatprep.subr.mxu0 0.0
    %690 = vmatpush1.msra.mxu0 0.0
    %691 = vmatprep.subr.mxu0 0.0
    %692 = vmatpush1.msra.mxu0 0.0
    %693 = vmatprep.subr.mxu0 0.0
    %694 = vmatpush1.msra.mxu0 0.0
    %695 = vmatprep.subr.mxu0 0.0
    %696 = vmatpush1.msra.mxu0 0.0
    %697 = vmatprep.subr.mxu0 0.0
    %698 = vmatpush1.msra.mxu0 0.0
    %699 = vmatprep.subr.mxu0 0.0
    %700 = vmatpush1.msra.mxu0 0.0
    %701 = vmatprep.subr.mxu0 0.0
    %702 = vmatpush1.msra.mxu0 0.0
    %703 = vmatprep.subr.mxu0 0.0
    %704 = vmatpush1.msra.mxu0 0.0
    %705 = vmatprep.subr.mxu0 0.0
    %706 = vmatpush1.msra.mxu0 0.0
    %707 = vmatprep.subr.mxu0 0.0
    %708 = vmatpush1.msra.mxu0 0.0
    %709 = vmatprep.subr.mxu0 0.0
    %710 = vmatpush1.msra.mxu0 0.0
    %711 = vmatprep.subr.mxu0 0.0
    %712 = vmatpush1.msra.mxu0 0.0
    %713 = vmatprep.subr.mxu0 0.0
    %714 = vmatpush1.msra.mxu0 0.0
    %715 = vmatprep.subr.mxu0 0.0
    %716 = vmatpush1.msra.mxu0 0.0
    %717 = vmatprep.subr.mxu0 0.0
    %718 = vmatpush1.msra.mxu0 0.0
    %719 = vmatprep.subr.mxu0 0.0
    %720 = vmatpush1.msra.mxu0 0.0
    %721 = vmatprep.subr.mxu0 0.0
    %722 = vmatpush1.msra.mxu0 0.0
    %723 = vmatprep.subr.mxu0 0.0
    %724 = vmatpush1.msra.mxu0 0.0
    %725 = vmatprep.subr.mxu0 0.0
    %726 = vmatpush1.msra.mxu0 0.0
    %727 = vmatprep.subr.mxu0 0.0
    %728 = vmatpush1.msra.mxu0 0.0
    %729 = vmatprep.mubr.f32.mxu0 0.0
    %730 = vmatmul.mubr.f32.gmra.mrb[0].mxu0 %v663
    %v731 = vpop.f32.mrb[0].mxu0
    %v732 = vadd.f32 0.0, %v731
    %v733 = vpop.f32.mrb[0].mxu0
    %734 = vdwg.mxu0
    %735 = vxpose.xlu0.b32.start [1/16] %v46, 128
    %736 = vxpose.xlu0.b32.cont [2/16] 0.0, 128
    %737 = vxpose.xlu0.b32.cont [3/16] 0.0, 128
    %738 = vxpose.xlu0.b32.cont [4/16] 0.0, 128
    %739 = vxpose.xlu0.b32.cont [5/16] 0.0, 128
    %740 = vxpose.xlu0.b32.cont [6/16] 0.0, 128
    %741 = vxpose.xlu0.b32.cont [7/16] 0.0, 128
    %742 = vxpose.xlu0.b32.cont [8/16] 0.0, 128
    %743 = vxpose.xlu0.b32.cont [9/16] 0.0, 128
    %744 = vxpose.xlu0.b32.cont [10/16] 0.0, 128
    %745 = vxpose.xlu0.b32.cont [11/16] 0.0, 128
    %746 = vxpose.xlu0.b32.cont [12/16] 0.0, 128
    %747 = vxpose.xlu0.b32.cont [13/16] 0.0, 128
    %748 = vxpose.xlu0.b32.cont [14/16] 0.0, 128
    %749 = vxpose.xlu0.b32.cont [15/16] 0.0, 128
    %750 = vxpose.xlu0.b32.end [16/16] 0.0, 128
    %v751 = vpop.trf.xlu0
    %v752 = vpop.trf.xlu0
    %v753 = vpop.trf.xlu0
    %v754 = vpop.trf.xlu0
    %v755 = vpop.trf.xlu0
    %v756 = vpop.trf.xlu0
    %v757 = vpop.trf.xlu0
    %v758 = vpop.trf.xlu0
    %v759 = vpop.trf.xlu0
    %v760 = vpop.trf.xlu0
    %v761 = vpop.trf.xlu0
    %v762 = vpop.trf.xlu0
    %v763 = vpop.trf.xlu0
    %v764 = vpop.trf.xlu0
    %v765 = vpop.trf.xlu0
    %v766 = vpop.trf.xlu0
    %v768 = vsel %vm136, %v751, 0
    %770 = vmatprep.subr.mxu0 0.0
    %771 = vmatpush1.msra.mxu0 %v78
    %772 = vmatprep.subr.mxu0 0.0
    %773 = vmatpush1.msra.mxu0 0.0
    %774 = vmatprep.subr.mxu0 0.0
    %775 = vmatpush1.msra.mxu0 0.0
    %776 = vmatprep.subr.mxu0 0.0
    %777 = vmatpush1.msra.mxu0 0.0
    %778 = vmatprep.subr.mxu0 0.0
    %779 = vmatpush1.msra.mxu0 0.0
    %780 = vmatprep.subr.mxu0 0.0
    %781 = vmatpush1.msra.mxu0 0.0
    %782 = vmatprep.subr.mxu0 0.0
    %783 = vmatpush1.msra.mxu0 0.0
    %784 = vmatprep.subr.mxu0 0.0
    %785 = vmatpush1.msra.mxu0 0.0
    %786 = vmatprep.subr.mxu0 0.0
    %787 = vmatpush1.msra.mxu0 0.0
    %788 = vmatprep.subr.mxu0 0.0
    %789 = vmatpush1.msra.mxu0 0.0
    %790 = vmatprep.subr.mxu0 0.0
    %791 = vmatpush1.msra.mxu0 0.0
    %792 = vmatprep.subr.mxu0 0.0
    %793 = vmatpush1.msra.mxu0 0.0
    %794 = vmatprep.subr.mxu0 0.0
    %795 = vmatpush1.msra.mxu0 0.0
    %796 = vmatprep.subr.mxu0 0.0
    %797 = vmatpush1.msra.mxu0 0.0
    %798 = vmatprep.subr.mxu0 0.0
    %799 = vmatpush1.msra.mxu0 0.0
    %800 = vmatprep.subr.mxu0 0.0
    %801 = vmatpush1.msra.mxu0 0.0
    %802 = vmatprep.subr.mxu0 0.0
    %803 = vmatpush1.msra.mxu0 0.0
    %804 = vmatprep.subr.mxu0 0.0
    %805 = vmatpush1.msra.mxu0 0.0
    %806 = vmatprep.subr.mxu0 0.0
    %807 = vmatpush1.msra.mxu0 0.0
    %808 = vmatprep.subr.mxu0 0.0
    %809 = vmatpush1.msra.mxu0 0.0
    %810 = vmatprep.subr.mxu0 0.0
    %811 = vmatpush1.msra.mxu0 0.0
    %812 = vmatprep.subr.mxu0 0.0
    %813 = vmatpush1.msra.mxu0 0.0
    %814 = vmatprep.subr.mxu0 0.0
    %815 = vmatpush1.msra.mxu0 0.0
    %816 = vmatprep.subr.mxu0 0.0
    %817 = vmatpush1.msra.mxu0 0.0
    %818 = vmatprep.subr.mxu0 0.0
    %819 = vmatpush1.msra.mxu0 0.0
    %820 = vmatprep.subr.mxu0 0.0
    %821 = vmatpush1.msra.mxu0 0.0
    %822 = vmatprep.subr.mxu0 0.0
    %823 = vmatpush1.msra.mxu0 0.0
    %824 = vmatprep.subr.mxu0 0.0
    %825 = vmatpush1.msra.mxu0 0.0
    %826 = vmatprep.subr.mxu0 0.0
    %827 = vmatpush1.msra.mxu0 0.0
    %828 = vmatprep.subr.mxu0 0.0
    %829 = vmatpush1.msra.mxu0 0.0
    %830 = vmatprep.subr.mxu0 0.0
    %831 = vmatpush1.msra.mxu0 0.0
    %832 = vmatprep.subr.mxu0 0.0
    %833 = vmatpush1.msra.mxu0 0.0
    %834 = vmatprep.mubr.f32.mxu0 0.0
    %835 = vmatmul.mubr.f32.gmra.mrb[0].mxu0 %v768
    %v836 = vpop.f32.mrb[0].mxu0
    %v837 = vadd.f32 0.0, %v836
    %v838 = vpop.f32.mrb[0].mxu0
    %839 = vdwg.mxu0
    %840 = vxpose.xlu0.b32.start [1/16] %v47, 128
    %841 = vxpose.xlu0.b32.cont [2/16] 0.0, 128
    %842 = vxpose.xlu0.b32.cont [3/16] 0.0, 128
    %843 = vxpose.xlu0.b32.cont [4/16] 0.0, 128
    %844 = vxpose.xlu0.b32.cont [5/16] 0.0, 128
    %845 = vxpose.xlu0.b32.cont [6/16] 0.0, 128
    %846 = vxpose.xlu0.b32.cont [7/16] 0.0, 128
    %847 = vxpose.xlu0.b32.cont [8/16] 0.0, 128
    %848 = vxpose.xlu0.b32.cont [9/16] 0.0, 128
    %849 = vxpose.xlu0.b32.cont [10/16] 0.0, 128
    %850 = vxpose.xlu0.b32.cont [11/16] 0.0, 128
    %851 = vxpose.xlu0.b32.cont [12/16] 0.0, 128
    %852 = vxpose.xlu0.b32.cont [13/16] 0.0, 128
    %853 = vxpose.xlu0.b32.cont [14/16] 0.0, 128
    %854 = vxpose.xlu0.b32.cont [15/16] 0.0, 128
    %855 = vxpose.xlu0.b32.end [16/16] 0.0, 128
    %v856 = vpop.trf.xlu0
    %v857 = vpop.trf.xlu0
    %v858 = vpop.trf.xlu0
    %v859 = vpop.trf.xlu0
    %v860 = vpop.trf.xlu0
    %v861 = vpop.trf.xlu0
    %v862 = vpop.trf.xlu0
    %v863 = vpop.trf.xlu0
    %v864 = vpop.trf.xlu0
    %v865 = vpop.trf.xlu0
    %v866 = vpop.trf.xlu0
    %v867 = vpop.trf.xlu0
    %v868 = vpop.trf.xlu0
    %v869 = vpop.trf.xlu0
    %v870 = vpop.trf.xlu0
    %v871 = vpop.trf.xlu0
    %v873 = vsel %vm136, %v856, 0
    %875 = vmatprep.subr.mxu0 0.0
    %876 = vmatpush1.msra.mxu0 %v79
    %877 = vmatprep.subr.mxu0 0.0
    %878 = vmatpush1.msra.mxu0 0.0
    %879 = vmatprep.subr.mxu0 0.0
    %880 = vmatpush1.msra.mxu0 0.0
    %881 = vmatprep.subr.mxu0 0.0
    %882 = vmatpush1.msra.mxu0 0.0
    %883 = vmatprep.subr.mxu0 0.0
    %884 = vmatpush1.msra.mxu0 0.0
    %885 = vmatprep.subr.mxu0 0.0
    %886 = vmatpush1.msra.mxu0 0.0
    %887 = vmatprep.subr.mxu0 0.0
    %888 = vmatpush1.msra.mxu0 0.0
    %889 = vmatprep.subr.mxu0 0.0
    %890 = vmatpush1.msra.mxu0 0.0
    %891 = vmatprep.subr.mxu0 0.0
    %892 = vmatpush1.msra.mxu0 0.0
    %893 = vmatprep.subr.mxu0 0.0
    %894 = vmatpush1.msra.mxu0 0.0
    %895 = vmatprep.subr.mxu0 0.0
    %896 = vmatpush1.msra.mxu0 0.0
    %897 = vmatprep.subr.mxu0 0.0
    %898 = vmatpush1.msra.mxu0 0.0
    %899 = vmatprep.subr.mxu0 0.0
    %900 = vmatpush1.msra.mxu0 0.0
    %901 = vmatprep.subr.mxu0 0.0
    %902 = vmatpush1.msra.mxu0 0.0
    %903 = vmatprep.subr.mxu0 0.0
    %904 = vmatpush1.msra.mxu0 0.0
    %905 = vmatprep.subr.mxu0 0.0
    %906 = vmatpush1.msra.mxu0 0.0
    %907 = vmatprep.subr.mxu0 0.0
    %908 = vmatpush1.msra.mxu0 0.0
    %909 = vmatprep.subr.mxu0 0.0
    %910 = vmatpush1.msra.mxu0 0.0
    %911 = vmatprep.subr.mxu0 0.0
    %912 = vmatpush1.msra.mxu0 0.0
    %913 = vmatprep.subr.mxu0 0.0
    %914 = vmatpush1.msra.mxu0 0.0
    %915 = vmatprep.subr.mxu0 0.0
    %916 = vmatpush1.msra.mxu0 0.0
    %917 = vmatprep.subr.mxu0 0.0
    %918 = vmatpush1.msra.mxu0 0.0
    %919 = vmatprep.subr.mxu0 0.0
    %920 = vmatpush1.msra.mxu0 0.0
    %921 = vmatprep.subr.mxu0 0.0
    %922 = vmatpush1.msra.mxu0 0.0
    %923 = vmatprep.subr.mxu0 0.0
    %924 = vmatpush1.msra.mxu0 0.0
    %925 = vmatprep.subr.mxu0 0.0
    %926 = vmatpush1.msra.mxu0 0.0
    %927 = vmatprep.subr.mxu0 0.0
    %928 = vmatpush1.msra.mxu0 0.0
    %929 = vmatprep.subr.mxu0 0.0
    %930 = vmatpush1.msra.mxu0 0.0
    %931 = vmatprep.subr.mxu0 0.0
    %932 = vmatpush1.msra.mxu0 0.0
    %933 = vmatprep.subr.mxu0 0.0
    %934 = vmatpush1.msra.mxu0 0.0
    %935 = vmatprep.subr.mxu0 0.0
    %936 = vmatpush1.msra.mxu0 0.0
    %937 = vmatprep.subr.mxu0 0.0
    %938 = vmatpush1.msra.mxu0 0.0
    %939 = vmatprep.mubr.f32.mxu0 0.0
    %940 = vmatmul.mubr.f32.gmra.mrb[0].mxu0 %v873
    %v941 = vpop.f32.mrb[0].mxu0
    %v942 = vadd.f32 0.0, %v941
    %v943 = vpop.f32.mrb[0].mxu0
    %944 = vdwg.mxu0
    %945 = vxpose.xlu0.b32.start [1/16] %v48, 128
    %946 = vxpose.xlu0.b32.cont [2/16] 0.0, 128
    %947 = vxpose.xlu0.b32.cont [3/16] 0.0, 128
    %948 = vxpose.xlu0.b32.cont [4/16] 0.0, 128
    %949 = vxpose.xlu0.b32.cont [5/16] 0.0, 128
    %950 = vxpose.xlu0.b32.cont [6/16] 0.0, 128
    %951 = vxpose.xlu0.b32.cont [7/16] 0.0, 128
    %952 = vxpose.xlu0.b32.cont [8/16] 0.0, 128
    %953 = vxpose.xlu0.b32.cont [9/16] 0.0, 128
    %954 = vxpose.xlu0.b32.cont [10/16] 0.0, 128
    %955 = vxpose.xlu0.b32.cont [11/16] 0.0, 128
    %956 = vxpose.xlu0.b32.cont [12/16] 0.0, 128
    %957 = vxpose.xlu0.b32.cont [13/16] 0.0, 128
    %958 = vxpose.xlu0.b32.cont [14/16] 0.0, 128
    %959 = vxpose.xlu0.b32.cont [15/16] 0.0, 128
    %960 = vxpose.xlu0.b32.end [16/16] 0.0, 128
    %v961 = vpop.trf.xlu0
    %v962 = vpop.trf.xlu0
    %v963 = vpop.trf.xlu0
    %v964 = vpop.trf.xlu0
    %v965 = vpop.trf.xlu0
    %v966 = vpop.trf.xlu0
    %v967 = vpop.trf.xlu0
    %v968 = vpop.trf.xlu0
    %v969 = vpop.trf.xlu0
    %v970 = vpop.trf.xlu0
    %v971 = vpop.trf.xlu0
    %v972 = vpop.trf.xlu0
    %v973 = vpop.trf.xlu0
    %v974 = vpop.trf.xlu0
    %v975 = vpop.trf.xlu0
    %v976 = vpop.trf.xlu0
    %v978 = vsel %vm136, %v961, 0
    %980 = vmatprep.subr.mxu0 0.0
    %981 = vmatpush1.msra.mxu0 %v80
    %982 = vmatprep.subr.mxu0 0.0
    %983 = vmatpush1.msra.mxu0 0.0
    %984 = vmatprep.subr.mxu0 0.0
    %985 = vmatpush1.msra.mxu0 0.0
    %986 = vmatprep.subr.mxu0 0.0
    %987 = vmatpush1.msra.mxu0 0.0
    %988 = vmatprep.subr.mxu0 0.0
    %989 = vmatpush1.msra.mxu0 0.0
    %990 = vmatprep.subr.mxu0 0.0
    %991 = vmatpush1.msra.mxu0 0.0
    %992 = vmatprep.subr.mxu0 0.0
    %993 = vmatpush1.msra.mxu0 0.0
    %994 = vmatprep.subr.mxu0 0.0
    %995 = vmatpush1.msra.mxu0 0.0
    %996 = vmatprep.subr.mxu0 0.0
    %997 = vmatpush1.msra.mxu0 0.0
    %998 = vmatprep.subr.mxu0 0.0
    %999 = vmatpush1.msra.mxu0 0.0
    %1000 = vmatprep.subr.mxu0 0.0
    %1001 = vmatpush1.msra.mxu0 0.0
    %1002 = vmatprep.subr.mxu0 0.0
    %1003 = vmatpush1.msra.mxu0 0.0
    %1004 = vmatprep.subr.mxu0 0.0
    %1005 = vmatpush1.msra.mxu0 0.0
    %1006 = vmatprep.subr.mxu0 0.0
    %1007 = vmatpush1.msra.mxu0 0.0
    %1008 = vmatprep.subr.mxu0 0.0
    %1009 = vmatpush1.msra.mxu0 0.0
    %1010 = vmatprep.subr.mxu0 0.0
    %1011 = vmatpush1.msra.mxu0 0.0
    %1012 = vmatprep.subr.mxu0 0.0
    %1013 = vmatpush1.msra.mxu0 0.0
    %1014 = vmatprep.subr.mxu0 0.0
    %1015 = vmatpush1.msra.mxu0 0.0
    %1016 = vmatprep.subr.mxu0 0.0
    %1017 = vmatpush1.msra.mxu0 0.0
    %1018 = vmatprep.subr.mxu0 0.0
    %1019 = vmatpush1.msra.mxu0 0.0
    %1020 = vmatprep.subr.mxu0 0.0
    %1021 = vmatpush1.msra.mxu0 0.0
    %1022 = vmatprep.subr.mxu0 0.0
    %1023 = vmatpush1.msra.mxu0 0.0
    %1024 = vmatprep.subr.mxu0 0.0
    %1025 = vmatpush1.msra.mxu0 0.0
    %1026 = vmatprep.subr.mxu0 0.0
    %1027 = vmatpush1.msra.mxu0 0.0
    %1028 = vmatprep.subr.mxu0 0.0
    %1029 = vmatpush1.msra.mxu0 0.0
    %1030 = vmatprep.subr.mxu0 0.0
    %1031 = vmatpush1.msra.mxu0 0.0
    %1032 = vmatprep.subr.mxu0 0.0
    %1033 = vmatpush1.msra.mxu0 0.0
    %1034 = vmatprep.subr.mxu0 0.0
    %1035 = vmatpush1.msra.mxu0 0.0
    %1036 = vmatprep.subr.mxu0 0.0
    %1037 = vmatpush1.msra.mxu0 0.0
    %1038 = vmatprep.subr.mxu0 0.0
    %1039 = vmatpush1.msra.mxu0 0.0
    %1040 = vmatprep.subr.mxu0 0.0
    %1041 = vmatpush1.msra.mxu0 0.0
    %1042 = vmatprep.subr.mxu0 0.0
    %1043 = vmatpush1.msra.mxu0 0.0
    %1044 = vmatprep.mubr.f32.mxu0 0.0
    %1045 = vmatmul.mubr.f32.gmra.mrb[0].mxu0 %v978
    %v1046 = vpop.f32.mrb[0].mxu0
    %v1047 = vadd.f32 0.0, %v1046
    %v1048 = vpop.f32.mrb[0].mxu0
    %1049 = vdwg.mxu0
    %1050 = vxpose.xlu0.b32.start [1/16] %v49, 128
    %1051 = vxpose.xlu0.b32.cont [2/16] 0.0, 128
    %1052 = vxpose.xlu0.b32.cont [3/16] 0.0, 128
    %1053 = vxpose.xlu0.b32.cont [4/16] 0.0, 128
    %1054 = vxpose.xlu0.b32.cont [5/16] 0.0, 128
    %1055 = vxpose.xlu0.b32.cont [6/16] 0.0, 128
    %1056 = vxpose.xlu0.b32.cont [7/16] 0.0, 128
    %1057 = vxpose.xlu0.b32.cont [8/16] 0.0, 128
    %1058 = vxpose.xlu0.b32.cont [9/16] 0.0, 128
    %1059 = vxpose.xlu0.b32.cont [10/16] 0.0, 128
    %1060 = vxpose.xlu0.b32.cont [11/16] 0.0, 128
    %1061 = vxpose.xlu0.b32.cont [12/16] 0.0, 128
    %1062 = vxpose.xlu0.b32.cont [13/16] 0.0, 128
    %1063 = vxpose.xlu0.b32.cont [14/16] 0.0, 128
    %1064 = vxpose.xlu0.b32.cont [15/16] 0.0, 128
    %1065 = vxpose.xlu0.b32.end [16/16] 0.0, 128
    %v1066 = vpop.trf.xlu0
    %v1067 = vpop.trf.xlu0
    %v1068 = vpop.trf.xlu0
    %v1069 = vpop.trf.xlu0
    %v1070 = vpop.trf.xlu0
    %v1071 = vpop.trf.xlu0
    %v1072 = vpop.trf.xlu0
    %v1073 = vpop.trf.xlu0
    %v1074 = vpop.trf.xlu0
    %v1075 = vpop.trf.xlu0
    %v1076 = vpop.trf.xlu0
    %v1077 = vpop.trf.xlu0
    %v1078 = vpop.trf.xlu0
    %v1079 = vpop.trf.xlu0
    %v1080 = vpop.trf.xlu0
    %v1081 = vpop.trf.xlu0
    %v1083 = vsel %vm136, %v1066, 0
    %1085 = vmatprep.subr.mxu0 0.0
    %1086 = vmatpush1.msra.mxu0 %v81
    %1087 = vmatprep.subr.mxu0 0.0
    %1088 = vmatpush1.msra.mxu0 0.0
    %1089 = vmatprep.subr.mxu0 0.0
    %1090 = vmatpush1.msra.mxu0 0.0
    %1091 = vmatprep.subr.mxu0 0.0
    %1092 = vmatpush1.msra.mxu0 0.0
    %1093 = vmatprep.subr.mxu0 0.0
    %1094 = vmatpush1.msra.mxu0 0.0
    %1095 = vmatprep.subr.mxu0 0.0
    %1096 = vmatpush1.msra.mxu0 0.0
    %1097 = vmatprep.subr.mxu0 0.0
    %1098 = vmatpush1.msra.mxu0 0.0
    %1099 = vmatprep.subr.mxu0 0.0
    %1100 = vmatpush1.msra.mxu0 0.0
    %1101 = vmatprep.subr.mxu0 0.0
    %1102 = vmatpush1.msra.mxu0 0.0
    %1103 = vmatprep.subr.mxu0 0.0
    %1104 = vmatpush1.msra.mxu0 0.0
    %1105 = vmatprep.subr.mxu0 0.0
    %1106 = vmatpush1.msra.mxu0 0.0
    %1107 = vmatprep.subr.mxu0 0.0
    %1108 = vmatpush1.msra.mxu0 0.0
    %1109 = vmatprep.subr.mxu0 0.0
    %1110 = vmatpush1.msra.mxu0 0.0
    %1111 = vmatprep.subr.mxu0 0.0
    %1112 = vmatpush1.msra.mxu0 0.0
    %1113 = vmatprep.subr.mxu0 0.0
    %1114 = vmatpush1.msra.mxu0 0.0
    %1115 = vmatprep.subr.mxu0 0.0
    %1116 = vmatpush1.msra.mxu0 0.0
    %1117 = vmatprep.subr.mxu0 0.0
    %1118 = vmatpush1.msra.mxu0 0.0
    %1119 = vmatprep.subr.mxu0 0.0
    %1120 = vmatpush1.msra.mxu0 0.0
    %1121 = vmatprep.subr.mxu0 0.0
    %1122 = vmatpush1.msra.mxu0 0.0
    %1123 = vmatprep.subr.mxu0 0.0
    %1124 = vmatpush1.msra.mxu0 0.0
    %1125 = vmatprep.subr.mxu0 0.0
    %1126 = vmatpush1.msra.mxu0 0.0
    %1127 = vmatprep.subr.mxu0 0.0
    %1128 = vmatpush1.msra.mxu0 0.0
    %1129 = vmatprep.subr.mxu0 0.0
    %1130 = vmatpush1.msra.mxu0 0.0
    %1131 = vmatprep.subr.mxu0 0.0
    %1132 = vmatpush1.msra.mxu0 0.0
    %1133 = vmatprep.subr.mxu0 0.0
    %1134 = vmatpush1.msra.mxu0 0.0
    %1135 = vmatprep.subr.mxu0 0.0
    %1136 = vmatpush1.msra.mxu0 0.0
    %1137 = vmatprep.subr.mxu0 0.0
    %1138 = vmatpush1.msra.mxu0 0.0
    %1139 = vmatprep.subr.mxu0 0.0
    %1140 = vmatpush1.msra.mxu0 0.0
    %1141 = vmatprep.subr.mxu0 0.0
    %1142 = vmatpush1.msra.mxu0 0.0
    %1143 = vmatprep.subr.mxu0 0.0
    %1144 = vmatpush1.msra.mxu0 0.0
    %1145 = vmatprep.subr.mxu0 0.0
    %1146 = vmatpush1.msra.mxu0 0.0
    %1147 = vmatprep.subr.mxu0 0.0
    %1148 = vmatpush1.msra.mxu0 0.0
    %1149 = vmatprep.mubr.f32.mxu0 0.0
    %1150 = vmatmul.mubr.f32.gmra.mrb[0].mxu0 %v1083
    %v1151 = vpop.f32.mrb[0].mxu0
    %v1152 = vadd.f32 0.0, %v1151
    %v1153 = vpop.f32.mrb[0].mxu0
    %1154 = vdwg.mxu0
    %1155 = vxpose.xlu0.b32.start [1/16] %v50, 128
    %1156 = vxpose.xlu0.b32.cont [2/16] 0.0, 128
    %1157 = vxpose.xlu0.b32.cont [3/16] 0.0, 128
    %1158 = vxpose.xlu0.b32.cont [4/16] 0.0, 128
    %1159 = vxpose.xlu0.b32.cont [5/16] 0.0, 128
    %1160 = vxpose.xlu0.b32.cont [6/16] 0.0, 128
    %1161 = vxpose.xlu0.b32.cont [7/16] 0.0, 128
    %1162 = vxpose.xlu0.b32.cont [8/16] 0.0, 128
    %1163 = vxpose.xlu0.b32.cont [9/16] 0.0, 128
    %1164 = vxpose.xlu0.b32.cont [10/16] 0.0, 128
    %1165 = vxpose.xlu0.b32.cont [11/16] 0.0, 128
    %1166 = vxpose.xlu0.b32.cont [12/16] 0.0, 128
    %1167 = vxpose.xlu0.b32.cont [13/16] 0.0, 128
    %1168 = vxpose.xlu0.b32.cont [14/16] 0.0, 128
    %1169 = vxpose.xlu0.b32.cont [15/16] 0.0, 128
    %1170 = vxpose.xlu0.b32.end [16/16] 0.0, 128
    %v1171 = vpop.trf.xlu0
    %v1172 = vpop.trf.xlu0
    %v1173 = vpop.trf.xlu0
    %v1174 = vpop.trf.xlu0
    %v1175 = vpop.trf.xlu0
    %v1176 = vpop.trf.xlu0
    %v1177 = vpop.trf.xlu0
    %v1178 = vpop.trf.xlu0
    %v1179 = vpop.trf.xlu0
    %v1180 = vpop.trf.xlu0
    %v1181 = vpop.trf.xlu0
    %v1182 = vpop.trf.xlu0
    %v1183 = vpop.trf.xlu0
    %v1184 = vpop.trf.xlu0
    %v1185 = vpop.trf.xlu0
    %v1186 = vpop.trf.xlu0
    %v1188 = vsel %vm136, %v1171, 0
    %1190 = vmatprep.subr.mxu0 0.0
    %1191 = vmatpush1.msra.mxu0 %v82
    %1192 = vmatprep.subr.mxu0 0.0
    %1193 = vmatpush1.msra.mxu0 0.0
    %1194 = vmatprep.subr.mxu0 0.0
    %1195 = vmatpush1.msra.mxu0 0.0
    %1196 = vmatprep.subr.mxu0 0.0
    %1197 = vmatpush1.msra.mxu0 0.0
    %1198 = vmatprep.subr.mxu0 0.0
    %1199 = vmatpush1.msra.mxu0 0.0
    %1200 = vmatprep.subr.mxu0 0.0
    %1201 = vmatpush1.msra.mxu0 0.0
    %1202 = vmatprep.subr.mxu0 0.0
    %1203 = vmatpush1.msra.mxu0 0.0
    %1204 = vmatprep.subr.mxu0 0.0
    %1205 = vmatpush1.msra.mxu0 0.0
    %1206 = vmatprep.subr.mxu0 0.0
    %1207 = vmatpush1.msra.mxu0 0.0
    %1208 = vmatprep.subr.mxu0 0.0
    %1209 = vmatpush1.msra.mxu0 0.0
    %1210 = vmatprep.subr.mxu0 0.0
    %1211 = vmatpush1.msra.mxu0 0.0
    %1212 = vmatprep.subr.mxu0 0.0
    %1213 = vmatpush1.msra.mxu0 0.0
    %1214 = vmatprep.subr.mxu0 0.0
    %1215 = vmatpush1.msra.mxu0 0.0
    %1216 = vmatprep.subr.mxu0 0.0
    %1217 = vmatpush1.msra.mxu0 0.0
    %1218 = vmatprep.subr.mxu0 0.0
    %1219 = vmatpush1.msra.mxu0 0.0
    %1220 = vmatprep.subr.mxu0 0.0
    %1221 = vmatpush1.msra.mxu0 0.0
    %1222 = vmatprep.subr.mxu0 0.0
    %1223 = vmatpush1.msra.mxu0 0.0
    %1224 = vmatprep.subr.mxu0 0.0
    %1225 = vmatpush1.msra.mxu0 0.0
    %1226 = vmatprep.subr.mxu0 0.0
    %1227 = vmatpush1.msra.mxu0 0.0
    %1228 = vmatprep.subr.mxu0 0.0
    %1229 = vmatpush1.msra.mxu0 0.0
    %1230 = vmatprep.subr.mxu0 0.0
    %1231 = vmatpush1.msra.mxu0 0.0
    %1232 = vmatprep.subr.mxu0 0.0
    %1233 = vmatpush1.msra.mxu0 0.0
    %1234 = vmatprep.subr.mxu0 0.0
    %1235 = vmatpush1.msra.mxu0 0.0
    %1236 = vmatprep.subr.mxu0 0.0
    %1237 = vmatpush1.msra.mxu0 0.0
    %1238 = vmatprep.subr.mxu0 0.0
    %1239 = vmatpush1.msra.mxu0 0.0
    %1240 = vmatprep.subr.mxu0 0.0
    %1241 = vmatpush1.msra.mxu0 0.0
    %1242 = vmatprep.subr.mxu0 0.0
    %1243 = vmatpush1.msra.mxu0 0.0
    %1244 = vmatprep.subr.mxu0 0.0
    %1245 = vmatpush1.msra.mxu0 0.0
    %1246 = vmatprep.subr.mxu0 0.0
    %1247 = vmatpush1.msra.mxu0 0.0
    %1248 = vmatprep.subr.mxu0 0.0
    %1249 = vmatpush1.msra.mxu0 0.0
    %1250 = vmatprep.subr.mxu0 0.0
    %1251 = vmatpush1.msra.mxu0 0.0
    %1252 = vmatprep.subr.mxu0 0.0
    %1253 = vmatpush1.msra.mxu0 0.0
    %1254 = vmatprep.mubr.f32.mxu0 0.0
    %1255 = vmatmul.mubr.f32.gmra.mrb[0].mxu0 %v1188
    %v1256 = vpop.f32.mrb[0].mxu0
    %v1257 = vadd.f32 0.0, %v1256
    %v1258 = vpop.f32.mrb[0].mxu0
    %1259 = vdwg.mxu0
    %1260 = vxpose.xlu0.b32.start [1/16] %v51, 128
    %1261 = vxpose.xlu0.b32.cont [2/16] 0.0, 128
    %1262 = vxpose.xlu0.b32.cont [3/16] 0.0, 128
    %1263 = vxpose.xlu0.b32.cont [4/16] 0.0, 128
    %1264 = vxpose.xlu0.b32.cont [5/16] 0.0, 128
    %1265 = vxpose.xlu0.b32.cont [6/16] 0.0, 128
    %1266 = vxpose.xlu0.b32.cont [7/16] 0.0, 128
    %1267 = vxpose.xlu0.b32.cont [8/16] 0.0, 128
    %1268 = vxpose.xlu0.b32.cont [9/16] 0.0, 128
    %1269 = vxpose.xlu0.b32.cont [10/16] 0.0, 128
    %1270 = vxpose.xlu0.b32.cont [11/16] 0.0, 128
    %1271 = vxpose.xlu0.b32.cont [12/16] 0.0, 128
    %1272 = vxpose.xlu0.b32.cont [13/16] 0.0, 128
    %1273 = vxpose.xlu0.b32.cont [14/16] 0.0, 128
    %1274 = vxpose.xlu0.b32.cont [15/16] 0.0, 128
    %1275 = vxpose.xlu0.b32.end [16/16] 0.0, 128
    %v1276 = vpop.trf.xlu0
    %v1277 = vpop.trf.xlu0
    %v1278 = vpop.trf.xlu0
    %v1279 = vpop.trf.xlu0
    %v1280 = vpop.trf.xlu0
    %v1281 = vpop.trf.xlu0
    %v1282 = vpop.trf.xlu0
    %v1283 = vpop.trf.xlu0
    %v1284 = vpop.trf.xlu0
    %v1285 = vpop.trf.xlu0
    %v1286 = vpop.trf.xlu0
    %v1287 = vpop.trf.xlu0
    %v1288 = vpop.trf.xlu0
    %v1289 = vpop.trf.xlu0
    %v1290 = vpop.trf.xlu0
    %v1291 = vpop.trf.xlu0
    %v1293 = vsel %vm136, %v1276, 0
    %1295 = vmatprep.subr.mxu0 0.0
    %1296 = vmatpush1.msra.mxu0 %v83
    %1297 = vmatprep.subr.mxu0 0.0
    %1298 = vmatpush1.msra.mxu0 0.0
    %1299 = vmatprep.subr.mxu0 0.0
    %1300 = vmatpush1.msra.mxu0 0.0
    %1301 = vmatprep.subr.mxu0 0.0
    %1302 = vmatpush1.msra.mxu0 0.0
    %1303 = vmatprep.subr.mxu0 0.0
    %1304 = vmatpush1.msra.mxu0 0.0
    %1305 = vmatprep.subr.mxu0 0.0
    %1306 = vmatpush1.msra.mxu0 0.0
    %1307 = vmatprep.subr.mxu0 0.0
    %1308 = vmatpush1.msra.mxu0 0.0
    %1309 = vmatprep.subr.mxu0 0.0
    %1310 = vmatpush1.msra.mxu0 0.0
    %1311 = vmatprep.subr.mxu0 0.0
    %1312 = vmatpush1.msra.mxu0 0.0
    %1313 = vmatprep.subr.mxu0 0.0
    %1314 = vmatpush1.msra.mxu0 0.0
    %1315 = vmatprep.subr.mxu0 0.0
    %1316 = vmatpush1.msra.mxu0 0.0
    %1317 = vmatprep.subr.mxu0 0.0
    %1318 = vmatpush1.msra.mxu0 0.0
    %1319 = vmatprep.subr.mxu0 0.0
    %1320 = vmatpush1.msra.mxu0 0.0
    %1321 = vmatprep.subr.mxu0 0.0
    %1322 = vmatpush1.msra.mxu0 0.0
    %1323 = vmatprep.subr.mxu0 0.0
    %1324 = vmatpush1.msra.mxu0 0.0
    %1325 = vmatprep.subr.mxu0 0.0
    %1326 = vmatpush1.msra.mxu0 0.0
    %1327 = vmatprep.subr.mxu0 0.0
    %1328 = vmatpush1.msra.mxu0 0.0
    %1329 = vmatprep.subr.mxu0 0.0
    %1330 = vmatpush1.msra.mxu0 0.0
    %1331 = vmatprep.subr.mxu0 0.0
    %1332 = vmatpush1.msra.mxu0 0.0
    %1333 = vmatprep.subr.mxu0 0.0
    %1334 = vmatpush1.msra.mxu0 0.0
    %1335 = vmatprep.subr.mxu0 0.0
    %1336 = vmatpush1.msra.mxu0 0.0
    %1337 = vmatprep.subr.mxu0 0.0
    %1338 = vmatpush1.msra.mxu0 0.0
    %1339 = vmatprep.subr.mxu0 0.0
    %1340 = vmatpush1.msra.mxu0 0.0
    %1341 = vmatprep.subr.mxu0 0.0
    %1342 = vmatpush1.msra.mxu0 0.0
    %1343 = vmatprep.subr.mxu0 0.0
    %1344 = vmatpush1.msra.mxu0 0.0
    %1345 = vmatprep.subr.mxu0 0.0
    %1346 = vmatpush1.msra.mxu0 0.0
    %1347 = vmatprep.subr.mxu0 0.0
    %1348 = vmatpush1.msra.mxu0 0.0
    %1349 = vmatprep.subr.mxu0 0.0
    %1350 = vmatpush1.msra.mxu0 0.0
    %1351 = vmatprep.subr.mxu0 0.0
    %1352 = vmatpush1.msra.mxu0 0.0
    %1353 = vmatprep.subr.mxu0 0.0
    %1354 = vmatpush1.msra.mxu0 0.0
    %1355 = vmatprep.subr.mxu0 0.0
    %1356 = vmatpush1.msra.mxu0 0.0
    %1357 = vmatprep.subr.mxu0 0.0
    %1358 = vmatpush1.msra.mxu0 0.0
    %1359 = vmatprep.mubr.f32.mxu0 0.0
    %1360 = vmatmul.mubr.f32.gmra.mrb[0].mxu0 %v1293
    %v1361 = vpop.f32.mrb[0].mxu0
    %v1362 = vadd.f32 0.0, %v1361
    %v1363 = vpop.f32.mrb[0].mxu0
    %1364 = vdwg.mxu0
    %1365 = vxpose.xlu0.b32.start [1/16] %v52, 128
    %1366 = vxpose.xlu0.b32.cont [2/16] 0.0, 128
    %1367 = vxpose.xlu0.b32.cont [3/16] 0.0, 128
    %1368 = vxpose.xlu0.b32.cont [4/16] 0.0, 128
    %1369 = vxpose.xlu0.b32.cont [5/16] 0.0, 128
    %1370 = vxpose.xlu0.b32.cont [6/16] 0.0, 128
    %1371 = vxpose.xlu0.b32.cont [7/16] 0.0, 128
    %1372 = vxpose.xlu0.b32.cont [8/16] 0.0, 128
    %1373 = vxpose.xlu0.b32.cont [9/16] 0.0, 128
    %1374 = vxpose.xlu0.b32.cont [10/16] 0.0, 128
    %1375 = vxpose.xlu0.b32.cont [11/16] 0.0, 128
    %1376 = vxpose.xlu0.b32.cont [12/16] 0.0, 128
    %1377 = vxpose.xlu0.b32.cont [13/16] 0.0, 128
    %1378 = vxpose.xlu0.b32.cont [14/16] 0.0, 128
    %1379 = vxpose.xlu0.b32.cont [15/16] 0.0, 128
    %1380 = vxpose.xlu0.b32.end [16/16] 0.0, 128
    %v1381 = vpop.trf.xlu0
    %v1382 = vpop.trf.xlu0
    %v1383 = vpop.trf.xlu0
    %v1384 = vpop.trf.xlu0
    %v1385 = vpop.trf.xlu0
    %v1386 = vpop.trf.xlu0
    %v1387 = vpop.trf.xlu0
    %v1388 = vpop.trf.xlu0
    %v1389 = vpop.trf.xlu0
    %v1390 = vpop.trf.xlu0
    %v1391 = vpop.trf.xlu0
    %v1392 = vpop.trf.xlu0
    %v1393 = vpop.trf.xlu0
    %v1394 = vpop.trf.xlu0
    %v1395 = vpop.trf.xlu0
    %v1396 = vpop.trf.xlu0
    %v1398 = vsel %vm136, %v1381, 0
    %1400 = vmatprep.subr.mxu0 0.0
    %1401 = vmatpush1.msra.mxu0 %v84
    %1402 = vmatprep.subr.mxu0 0.0
    %1403 = vmatpush1.msra.mxu0 0.0
    %1404 = vmatprep.subr.mxu0 0.0
    %1405 = vmatpush1.msra.mxu0 0.0
    %1406 = vmatprep.subr.mxu0 0.0
    %1407 = vmatpush1.msra.mxu0 0.0
    %1408 = vmatprep.subr.mxu0 0.0
    %1409 = vmatpush1.msra.mxu0 0.0
    %1410 = vmatprep.subr.mxu0 0.0
    %1411 = vmatpush1.msra.mxu0 0.0
    %1412 = vmatprep.subr.mxu0 0.0
    %1413 = vmatpush1.msra.mxu0 0.0
    %1414 = vmatprep.subr.mxu0 0.0
    %1415 = vmatpush1.msra.mxu0 0.0
    %1416 = vmatprep.subr.mxu0 0.0
    %1417 = vmatpush1.msra.mxu0 0.0
    %1418 = vmatprep.subr.mxu0 0.0
    %1419 = vmatpush1.msra.mxu0 0.0
    %1420 = vmatprep.subr.mxu0 0.0
    %1421 = vmatpush1.msra.mxu0 0.0
    %1422 = vmatprep.subr.mxu0 0.0
    %1423 = vmatpush1.msra.mxu0 0.0
    %1424 = vmatprep.subr.mxu0 0.0
    %1425 = vmatpush1.msra.mxu0 0.0
    %1426 = vmatprep.subr.mxu0 0.0
    %1427 = vmatpush1.msra.mxu0 0.0
    %1428 = vmatprep.subr.mxu0 0.0
    %1429 = vmatpush1.msra.mxu0 0.0
    %1430 = vmatprep.subr.mxu0 0.0
    %1431 = vmatpush1.msra.mxu0 0.0
    %1432 = vmatprep.subr.mxu0 0.0
    %1433 = vmatpush1.msra.mxu0 0.0
    %1434 = vmatprep.subr.mxu0 0.0
    %1435 = vmatpush1.msra.mxu0 0.0
    %1436 = vmatprep.subr.mxu0 0.0
    %1437 = vmatpush1.msra.mxu0 0.0
    %1438 = vmatprep.subr.mxu0 0.0
    %1439 = vmatpush1.msra.mxu0 0.0
    %1440 = vmatprep.subr.mxu0 0.0
    %1441 = vmatpush1.msra.mxu0 0.0
    %1442 = vmatprep.subr.mxu0 0.0
    %1443 = vmatpush1.msra.mxu0 0.0
    %1444 = vmatprep.subr.mxu0 0.0
    %1445 = vmatpush1.msra.mxu0 0.0
    %1446 = vmatprep.subr.mxu0 0.0
    %1447 = vmatpush1.msra.mxu0 0.0
    %1448 = vmatprep.subr.mxu0 0.0
    %1449 = vmatpush1.msra.mxu0 0.0
    %1450 = vmatprep.subr.mxu0 0.0
    %1451 = vmatpush1.msra.mxu0 0.0
    %1452 = vmatprep.subr.mxu0 0.0
    %1453 = vmatpush1.msra.mxu0 0.0
    %1454 = vmatprep.subr.mxu0 0.0
    %1455 = vmatpush1.msra.mxu0 0.0
    %1456 = vmatprep.subr.mxu0 0.0
    %1457 = vmatpush1.msra.mxu0 0.0
    %1458 = vmatprep.subr.mxu0 0.0
    %1459 = vmatpush1.msra.mxu0 0.0
    %1460 = vmatprep.subr.mxu0 0.0
    %1461 = vmatpush1.msra.mxu0 0.0
    %1462 = vmatprep.subr.mxu0 0.0
    %1463 = vmatpush1.msra.mxu0 0.0
    %1464 = vmatprep.mubr.f32.mxu0 0.0
    %1465 = vmatmul.mubr.f32.gmra.mrb[0].mxu0 %v1398
    %v1466 = vpop.f32.mrb[0].mxu0
    %v1467 = vadd.f32 0.0, %v1466
    %v1468 = vpop.f32.mrb[0].mxu0
    %1469 = vdwg.mxu0
    %1470 = vxpose.xlu0.b32.start [1/16] %v53, 128
    %1471 = vxpose.xlu0.b32.cont [2/16] 0.0, 128
    %1472 = vxpose.xlu0.b32.cont [3/16] 0.0, 128
    %1473 = vxpose.xlu0.b32.cont [4/16] 0.0, 128
    %1474 = vxpose.xlu0.b32.cont [5/16] 0.0, 128
    %1475 = vxpose.xlu0.b32.cont [6/16] 0.0, 128
    %1476 = vxpose.xlu0.b32.cont [7/16] 0.0, 128
    %1477 = vxpose.xlu0.b32.cont [8/16] 0.0, 128
    %1478 = vxpose.xlu0.b32.cont [9/16] 0.0, 128
    %1479 = vxpose.xlu0.b32.cont [10/16] 0.0, 128
    %1480 = vxpose.xlu0.b32.cont [11/16] 0.0, 128
    %1481 = vxpose.xlu0.b32.cont [12/16] 0.0, 128
    %1482 = vxpose.xlu0.b32.cont [13/16] 0.0, 128
    %1483 = vxpose.xlu0.b32.cont [14/16] 0.0, 128
    %1484 = vxpose.xlu0.b32.cont [15/16] 0.0, 128
    %1485 = vxpose.xlu0.b32.end [16/16] 0.0, 128
    %v1486 = vpop.trf.xlu0
    %v1487 = vpop.trf.xlu0
    %v1488 = vpop.trf.xlu0
    %v1489 = vpop.trf.xlu0
    %v1490 = vpop.trf.xlu0
    %v1491 = vpop.trf.xlu0
    %v1492 = vpop.trf.xlu0
    %v1493 = vpop.trf.xlu0
    %v1494 = vpop.trf.xlu0
    %v1495 = vpop.trf.xlu0
    %v1496 = vpop.trf.xlu0
    %v1497 = vpop.trf.xlu0
    %v1498 = vpop.trf.xlu0
    %v1499 = vpop.trf.xlu0
    %v1500 = vpop.trf.xlu0
    %v1501 = vpop.trf.xlu0
    %v1503 = vsel %vm136, %v1486, 0
    %1505 = vmatprep.subr.mxu0 0.0
    %1506 = vmatpush1.msra.mxu0 %v85
    %1507 = vmatprep.subr.mxu0 0.0
    %1508 = vmatpush1.msra.mxu0 0.0
    %1509 = vmatprep.subr.mxu0 0.0
    %1510 = vmatpush1.msra.mxu0 0.0
    %1511 = vmatprep.subr.mxu0 0.0
    %1512 = vmatpush1.msra.mxu0 0.0
    %1513 = vmatprep.subr.mxu0 0.0
    %1514 = vmatpush1.msra.mxu0 0.0
    %1515 = vmatprep.subr.mxu0 0.0
    %1516 = vmatpush1.msra.mxu0 0.0
    %1517 = vmatprep.subr.mxu0 0.0
    %1518 = vmatpush1.msra.mxu0 0.0
    %1519 = vmatprep.subr.mxu0 0.0
    %1520 = vmatpush1.msra.mxu0 0.0
    %1521 = vmatprep.subr.mxu0 0.0
    %1522 = vmatpush1.msra.mxu0 0.0
    %1523 = vmatprep.subr.mxu0 0.0
    %1524 = vmatpush1.msra.mxu0 0.0
    %1525 = vmatprep.subr.mxu0 0.0
    %1526 = vmatpush1.msra.mxu0 0.0
    %1527 = vmatprep.subr.mxu0 0.0
    %1528 = vmatpush1.msra.mxu0 0.0
    %1529 = vmatprep.subr.mxu0 0.0
    %1530 = vmatpush1.msra.mxu0 0.0
    %1531 = vmatprep.subr.mxu0 0.0
    %1532 = vmatpush1.msra.mxu0 0.0
    %1533 = vmatprep.subr.mxu0 0.0
    %1534 = vmatpush1.msra.mxu0 0.0
    %1535 = vmatprep.subr.mxu0 0.0
    %1536 = vmatpush1.msra.mxu0 0.0
    %1537 = vmatprep.subr.mxu0 0.0
    %1538 = vmatpush1.msra.mxu0 0.0
    %1539 = vmatprep.subr.mxu0 0.0
    %1540 = vmatpush1.msra.mxu0 0.0
    %1541 = vmatprep.subr.mxu0 0.0
    %1542 = vmatpush1.msra.mxu0 0.0
    %1543 = vmatprep.subr.mxu0 0.0
    %1544 = vmatpush1.msra.mxu0 0.0
    %1545 = vmatprep.subr.mxu0 0.0
    %1546 = vmatpush1.msra.mxu0 0.0
    %1547 = vmatprep.subr.mxu0 0.0
    %1548 = vmatpush1.msra.mxu0 0.0
    %1549 = vmatprep.subr.mxu0 0.0
    %1550 = vmatpush1.msra.mxu0 0.0
    %1551 = vmatprep.subr.mxu0 0.0
    %1552 = vmatpush1.msra.mxu0 0.0
    %1553 = vmatprep.subr.mxu0 0.0
    %1554 = vmatpush1.msra.mxu0 0.0
    %1555 = vmatprep.subr.mxu0 0.0
    %1556 = vmatpush1.msra.mxu0 0.0
    %1557 = vmatprep.subr.mxu0 0.0
    %1558 = vmatpush1.msra.mxu0 0.0
    %1559 = vmatprep.subr.mxu0 0.0
    %1560 = vmatpush1.msra.mxu0 0.0
    %1561 = vmatprep.subr.mxu0 0.0
    %1562 = vmatpush1.msra.mxu0 0.0
    %1563 = vmatprep.subr.mxu0 0.0
    %1564 = vmatpush1.msra.mxu0 0.0
    %1565 = vmatprep.subr.mxu0 0.0
    %1566 = vmatpush1.msra.mxu0 0.0
    %1567 = vmatprep.subr.mxu0 0.0
    %1568 = vmatpush1.msra.mxu0 0.0
    %1569 = vmatprep.mubr.f32.mxu0 0.0
    %1570 = vmatmul.mubr.f32.gmra.mrb[0].mxu0 %v1503
    %v1571 = vpop.f32.mrb[0].mxu0
    %v1572 = vadd.f32 0.0, %v1571
    %v1573 = vpop.f32.mrb[0].mxu0
    %1574 = vdwg.mxu0
    %1575 = vxpose.xlu0.b32.start [1/16] %v54, 128
    %1576 = vxpose.xlu0.b32.cont [2/16] 0.0, 128
    %1577 = vxpose.xlu0.b32.cont [3/16] 0.0, 128
    %1578 = vxpose.xlu0.b32.cont [4/16] 0.0, 128
    %1579 = vxpose.xlu0.b32.cont [5/16] 0.0, 128
    %1580 = vxpose.xlu0.b32.cont [6/16] 0.0, 128
    %1581 = vxpose.xlu0.b32.cont [7/16] 0.0, 128
    %1582 = vxpose.xlu0.b32.cont [8/16] 0.0, 128
    %1583 = vxpose.xlu0.b32.cont [9/16] 0.0, 128
    %1584 = vxpose.xlu0.b32.cont [10/16] 0.0, 128
    %1585 = vxpose.xlu0.b32.cont [11/16] 0.0, 128
    %1586 = vxpose.xlu0.b32.cont [12/16] 0.0, 128
    %1587 = vxpose.xlu0.b32.cont [13/16] 0.0, 128
    %1588 = vxpose.xlu0.b32.cont [14/16] 0.0, 128
    %1589 = vxpose.xlu0.b32.cont [15/16] 0.0, 128
    %1590 = vxpose.xlu0.b32.end [16/16] 0.0, 128
    %v1591 = vpop.trf.xlu0
    %v1592 = vpop.trf.xlu0
    %v1593 = vpop.trf.xlu0
    %v1594 = vpop.trf.xlu0
    %v1595 = vpop.trf.xlu0
    %v1596 = vpop.trf.xlu0
    %v1597 = vpop.trf.xlu0
    %v1598 = vpop.trf.xlu0
    %v1599 = vpop.trf.xlu0
    %v1600 = vpop.trf.xlu0
    %v1601 = vpop.trf.xlu0
    %v1602 = vpop.trf.xlu0
    %v1603 = vpop.trf.xlu0
    %v1604 = vpop.trf.xlu0
    %v1605 = vpop.trf.xlu0
    %v1606 = vpop.trf.xlu0
    %v1608 = vsel %vm136, %v1591, 0
    %1610 = vmatprep.subr.mxu0 0.0
    %1611 = vmatpush1.msra.mxu0 %v86
    %1612 = vmatprep.subr.mxu0 0.0
    %1613 = vmatpush1.msra.mxu0 0.0
    %1614 = vmatprep.subr.mxu0 0.0
    %1615 = vmatpush1.msra.mxu0 0.0
    %1616 = vmatprep.subr.mxu0 0.0
    %1617 = vmatpush1.msra.mxu0 0.0
    %1618 = vmatprep.subr.mxu0 0.0
    %1619 = vmatpush1.msra.mxu0 0.0
    %1620 = vmatprep.subr.mxu0 0.0
    %1621 = vmatpush1.msra.mxu0 0.0
    %1622 = vmatprep.subr.mxu0 0.0
    %1623 = vmatpush1.msra.mxu0 0.0
    %1624 = vmatprep.subr.mxu0 0.0
    %1625 = vmatpush1.msra.mxu0 0.0
    %1626 = vmatprep.subr.mxu0 0.0
    %1627 = vmatpush1.msra.mxu0 0.0
    %1628 = vmatprep.subr.mxu0 0.0
    %1629 = vmatpush1.msra.mxu0 0.0
    %1630 = vmatprep.subr.mxu0 0.0
    %1631 = vmatpush1.msra.mxu0 0.0
    %1632 = vmatprep.subr.mxu0 0.0
    %1633 = vmatpush1.msra.mxu0 0.0
    %1634 = vmatprep.subr.mxu0 0.0
    %1635 = vmatpush1.msra.mxu0 0.0
    %1636 = vmatprep.subr.mxu0 0.0
    %1637 = vmatpush1.msra.mxu0 0.0
    %1638 = vmatprep.subr.mxu0 0.0
    %1639 = vmatpush1.msra.mxu0 0.0
    %1640 = vmatprep.subr.mxu0 0.0
    %1641 = vmatpush1.msra.mxu0 0.0
    %1642 = vmatprep.subr.mxu0 0.0
    %1643 = vmatpush1.msra.mxu0 0.0
    %1644 = vmatprep.subr.mxu0 0.0
    %1645 = vmatpush1.msra.mxu0 0.0
    %1646 = vmatprep.subr.mxu0 0.0
    %1647 = vmatpush1.msra.mxu0 0.0
    %1648 = vmatprep.subr.mxu0 0.0
    %1649 = vmatpush1.msra.mxu0 0.0
    %1650 = vmatprep.subr.mxu0 0.0
    %1651 = vmatpush1.msra.mxu0 0.0
    %1652 = vmatprep.subr.mxu0 0.0
    %1653 = vmatpush1.msra.mxu0 0.0
    %1654 = vmatprep.subr.mxu0 0.0
    %1655 = vmatpush1.msra.mxu0 0.0
    %1656 = vmatprep.subr.mxu0 0.0
    %1657 = vmatpush1.msra.mxu0 0.0
    %1658 = vmatprep.subr.mxu0 0.0
    %1659 = vmatpush1.msra.mxu0 0.0
    %1660 = vmatprep.subr.mxu0 0.0
    %1661 = vmatpush1.msra.mxu0 0.0
    %1662 = vmatprep.subr.mxu0 0.0
    %1663 = vmatpush1.msra.mxu0 0.0
    %1664 = vmatprep.subr.mxu0 0.0
    %1665 = vmatpush1.msra.mxu0 0.0
    %1666 = vmatprep.subr.mxu0 0.0
    %1667 = vmatpush1.msra.mxu0 0.0
    %1668 = vmatprep.subr.mxu0 0.0
    %1669 = vmatpush1.msra.mxu0 0.0
    %1670 = vmatprep.subr.mxu0 0.0
    %1671 = vmatpush1.msra.mxu0 0.0
    %1672 = vmatprep.subr.mxu0 0.0
    %1673 = vmatpush1.msra.mxu0 0.0
    %1674 = vmatprep.mubr.f32.mxu0 0.0
    %1675 = vmatmul.mubr.f32.gmra.mrb[0].mxu0 %v1608
    %v1676 = vpop.f32.mrb[0].mxu0
    %v1677 = vadd.f32 0.0, %v1676
    %v1678 = vpop.f32.mrb[0].mxu0
    %1679 = vdwg.mxu0
    %1680 = vxpose.xlu0.b32.start [1/16] %v55, 128
    %1681 = vxpose.xlu0.b32.cont [2/16] 0.0, 128
    %1682 = vxpose.xlu0.b32.cont [3/16] 0.0, 128
    %1683 = vxpose.xlu0.b32.cont [4/16] 0.0, 128
    %1684 = vxpose.xlu0.b32.cont [5/16] 0.0, 128
    %1685 = vxpose.xlu0.b32.cont [6/16] 0.0, 128
    %1686 = vxpose.xlu0.b32.cont [7/16] 0.0, 128
    %1687 = vxpose.xlu0.b32.cont [8/16] 0.0, 128
    %1688 = vxpose.xlu0.b32.cont [9/16] 0.0, 128
    %1689 = vxpose.xlu0.b32.cont [10/16] 0.0, 128
    %1690 = vxpose.xlu0.b32.cont [11/16] 0.0, 128
    %1691 = vxpose.xlu0.b32.cont [12/16] 0.0, 128
    %1692 = vxpose.xlu0.b32.cont [13/16] 0.0, 128
    %1693 = vxpose.xlu0.b32.cont [14/16] 0.0, 128
    %1694 = vxpose.xlu0.b32.cont [15/16] 0.0, 128
    %1695 = vxpose.xlu0.b32.end [16/16] 0.0, 128
    %v1696 = vpop.trf.xlu0
    %v1697 = vpop.trf.xlu0
    %v1698 = vpop.trf.xlu0
    %v1699 = vpop.trf.xlu0
    %v1700 = vpop.trf.xlu0
    %v1701 = vpop.trf.xlu0
    %v1702 = vpop.trf.xlu0
    %v1703 = vpop.trf.xlu0
    %v1704 = vpop.trf.xlu0
    %v1705 = vpop.trf.xlu0
    %v1706 = vpop.trf.xlu0
    %v1707 = vpop.trf.xlu0
    %v1708 = vpop.trf.xlu0
    %v1709 = vpop.trf.xlu0
    %v1710 = vpop.trf.xlu0
    %v1711 = vpop.trf.xlu0
    %v1713 = vsel %vm136, %v1696, 0
    %1715 = vmatprep.subr.mxu0 0.0
    %1716 = vmatpush1.msra.mxu0 %v87
    %1717 = vmatprep.subr.mxu0 0.0
    %1718 = vmatpush1.msra.mxu0 0.0
    %1719 = vmatprep.subr.mxu0 0.0
    %1720 = vmatpush1.msra.mxu0 0.0
    %1721 = vmatprep.subr.mxu0 0.0
    %1722 = vmatpush1.msra.mxu0 0.0
    %1723 = vmatprep.subr.mxu0 0.0
    %1724 = vmatpush1.msra.mxu0 0.0
    %1725 = vmatprep.subr.mxu0 0.0
    %1726 = vmatpush1.msra.mxu0 0.0
    %1727 = vmatprep.subr.mxu0 0.0
    %1728 = vmatpush1.msra.mxu0 0.0
    %1729 = vmatprep.subr.mxu0 0.0
    %1730 = vmatpush1.msra.mxu0 0.0
    %1731 = vmatprep.subr.mxu0 0.0
    %1732 = vmatpush1.msra.mxu0 0.0
    %1733 = vmatprep.subr.mxu0 0.0
    %1734 = vmatpush1.msra.mxu0 0.0
    %1735 = vmatprep.subr.mxu0 0.0
    %1736 = vmatpush1.msra.mxu0 0.0
    %1737 = vmatprep.subr.mxu0 0.0
    %1738 = vmatpush1.msra.mxu0 0.0
    %1739 = vmatprep.subr.mxu0 0.0
    %1740 = vmatpush1.msra.mxu0 0.0
    %1741 = vmatprep.subr.mxu0 0.0
    %1742 = vmatpush1.msra.mxu0 0.0
    %1743 = vmatprep.subr.mxu0 0.0
    %1744 = vmatpush1.msra.mxu0 0.0
    %1745 = vmatprep.subr.mxu0 0.0
    %1746 = vmatpush1.msra.mxu0 0.0
    %1747 = vmatprep.subr.mxu0 0.0
    %1748 = vmatpush1.msra.mxu0 0.0
    %1749 = vmatprep.subr.mxu0 0.0
    %1750 = vmatpush1.msra.mxu0 0.0
    %1751 = vmatprep.subr.mxu0 0.0
    %1752 = vmatpush1.msra.mxu0 0.0
    %1753 = vmatprep.subr.mxu0 0.0
    %1754 = vmatpush1.msra.mxu0 0.0
    %1755 = vmatprep.subr.mxu0 0.0
    %1756 = vmatpush1.msra.mxu0 0.0
    %1757 = vmatprep.subr.mxu0 0.0
    %1758 = vmatpush1.msra.mxu0 0.0
    %1759 = vmatprep.subr.mxu0 0.0
    %1760 = vmatpush1.msra.mxu0 0.0
    %1761 = vmatprep.subr.mxu0 0.0
    %1762 = vmatpush1.msra.mxu0 0.0
    %1763 = vmatprep.subr.mxu0 0.0
    %1764 = vmatpush1.msra.mxu0 0.0
    %1765 = vmatprep.subr.mxu0 0.0
    %1766 = vmatpush1.msra.mxu0 0.0
    %1767 = vmatprep.subr.mxu0 0.0
    %1768 = vmatpush1.msra.mxu0 0.0
    %1769 = vmatprep.subr.mxu0 0.0
    %1770 = vmatpush1.msra.mxu0 0.0
    %1771 = vmatprep.subr.mxu0 0.0
    %1772 = vmatpush1.msra.mxu0 0.0
    %1773 = vmatprep.subr.mxu0 0.0
    %1774 = vmatpush1.msra.mxu0 0.0
    %1775 = vmatprep.subr.mxu0 0.0
    %1776 = vmatpush1.msra.mxu0 0.0
    %1777 = vmatprep.subr.mxu0 0.0
    %1778 = vmatpush1.msra.mxu0 0.0
    %1779 = vmatprep.mubr.f32.mxu0 0.0
    %1780 = vmatmul.mubr.f32.gmra.mrb[0].mxu0 %v1713
    %v1781 = vpop.f32.mrb[0].mxu0
    %v1782 = vadd.f32 0.0, %v1781
    %v1783 = vpop.f32.mrb[0].mxu0
    %1784 = vdwg.mxu0
    %1785 = vxpose.xlu0.b32.start [1/16] %v56, 128
    %1786 = vxpose.xlu0.b32.cont [2/16] 0.0, 128
    %1787 = vxpose.xlu0.b32.cont [3/16] 0.0, 128
    %1788 = vxpose.xlu0.b32.cont [4/16] 0.0, 128
    %1789 = vxpose.xlu0.b32.cont [5/16] 0.0, 128
    %1790 = vxpose.xlu0.b32.cont [6/16] 0.0, 128
    %1791 = vxpose.xlu0.b32.cont [7/16] 0.0, 128
    %1792 = vxpose.xlu0.b32.cont [8/16] 0.0, 128
    %1793 = vxpose.xlu0.b32.cont [9/16] 0.0, 128
    %1794 = vxpose.xlu0.b32.cont [10/16] 0.0, 128
    %1795 = vxpose.xlu0.b32.cont [11/16] 0.0, 128
    %1796 = vxpose.xlu0.b32.cont [12/16] 0.0, 128
    %1797 = vxpose.xlu0.b32.cont [13/16] 0.0, 128
    %1798 = vxpose.xlu0.b32.cont [14/16] 0.0, 128
    %1799 = vxpose.xlu0.b32.cont [15/16] 0.0, 128
    %1800 = vxpose.xlu0.b32.end [16/16] 0.0, 128
    %v1801 = vpop.trf.xlu0
    %v1802 = vpop.trf.xlu0
    %v1803 = vpop.trf.xlu0
    %v1804 = vpop.trf.xlu0
    %v1805 = vpop.trf.xlu0
    %v1806 = vpop.trf.xlu0
    %v1807 = vpop.trf.xlu0
    %v1808 = vpop.trf.xlu0
    %v1809 = vpop.trf.xlu0
    %v1810 = vpop.trf.xlu0
    %v1811 = vpop.trf.xlu0
    %v1812 = vpop.trf.xlu0
    %v1813 = vpop.trf.xlu0
    %v1814 = vpop.trf.xlu0
    %v1815 = vpop.trf.xlu0
    %v1816 = vpop.trf.xlu0
    %v1818 = vsel %vm136, %v1801, 0
    %1820 = vmatprep.subr.mxu0 0.0
    %1821 = vmatpush1.msra.mxu0 %v88
    %1822 = vmatprep.subr.mxu0 0.0
    %1823 = vmatpush1.msra.mxu0 0.0
    %1824 = vmatprep.subr.mxu0 0.0
    %1825 = vmatpush1.msra.mxu0 0.0
    %1826 = vmatprep.subr.mxu0 0.0
    %1827 = vmatpush1.msra.mxu0 0.0
    %1828 = vmatprep.subr.mxu0 0.0
    %1829 = vmatpush1.msra.mxu0 0.0
    %1830 = vmatprep.subr.mxu0 0.0
    %1831 = vmatpush1.msra.mxu0 0.0
    %1832 = vmatprep.subr.mxu0 0.0
    %1833 = vmatpush1.msra.mxu0 0.0
    %1834 = vmatprep.subr.mxu0 0.0
    %1835 = vmatpush1.msra.mxu0 0.0
    %1836 = vmatprep.subr.mxu0 0.0
    %1837 = vmatpush1.msra.mxu0 0.0
    %1838 = vmatprep.subr.mxu0 0.0
    %1839 = vmatpush1.msra.mxu0 0.0
    %1840 = vmatprep.subr.mxu0 0.0
    %1841 = vmatpush1.msra.mxu0 0.0
    %1842 = vmatprep.subr.mxu0 0.0
    %1843 = vmatpush1.msra.mxu0 0.0
    %1844 = vmatprep.subr.mxu0 0.0
    %1845 = vmatpush1.msra.mxu0 0.0
    %1846 = vmatprep.subr.mxu0 0.0
    %1847 = vmatpush1.msra.mxu0 0.0
    %1848 = vmatprep.subr.mxu0 0.0
    %1849 = vmatpush1.msra.mxu0 0.0
    %1850 = vmatprep.subr.mxu0 0.0
    %1851 = vmatpush1.msra.mxu0 0.0
    %1852 = vmatprep.subr.mxu0 0.0
    %1853 = vmatpush1.msra.mxu0 0.0
    %1854 = vmatprep.subr.mxu0 0.0
    %1855 = vmatpush1.msra.mxu0 0.0
    %1856 = vmatprep.subr.mxu0 0.0
    %1857 = vmatpush1.msra.mxu0 0.0
    %1858 = vmatprep.subr.mxu0 0.0
    %1859 = vmatpush1.msra.mxu0 0.0
    %1860 = vmatprep.subr.mxu0 0.0
    %1861 = vmatpush1.msra.mxu0 0.0
    %1862 = vmatprep.subr.mxu0 0.0
    %1863 = vmatpush1.msra.mxu0 0.0
    %1864 = vmatprep.subr.mxu0 0.0
    %1865 = vmatpush1.msra.mxu0 0.0
    %1866 = vmatprep.subr.mxu0 0.0
    %1867 = vmatpush1.msra.mxu0 0.0
    %1868 = vmatprep.subr.mxu0 0.0
    %1869 = vmatpush1.msra.mxu0 0.0
    %1870 = vmatprep.subr.mxu0 0.0
    %1871 = vmatpush1.msra.mxu0 0.0
    %1872 = vmatprep.subr.mxu0 0.0
    %1873 = vmatpush1.msra.mxu0 0.0
    %1874 = vmatprep.subr.mxu0 0.0
    %1875 = vmatpush1.msra.mxu0 0.0
    %1876 = vmatprep.subr.mxu0 0.0
    %1877 = vmatpush1.msra.mxu0 0.0
    %1878 = vmatprep.subr.mxu0 0.0
    %1879 = vmatpush1.msra.mxu0 0.0
    %1880 = vmatprep.subr.mxu0 0.0
    %1881 = vmatpush1.msra.mxu0 0.0
    %1882 = vmatprep.subr.mxu0 0.0
    %1883 = vmatpush1.msra.mxu0 0.0
    %1884 = vmatprep.mubr.f32.mxu0 0.0
    %1885 = vmatmul.mubr.f32.gmra.mrb[0].mxu0 %v1818
    %v1886 = vpop.f32.mrb[0].mxu0
    %v1887 = vadd.f32 0.0, %v1886
    %v1888 = vpop.f32.mrb[0].mxu0
    %1889 = vdwg.mxu0
    %1890 = vxpose.xlu0.b32.start [1/16] %v57, 128
    %1891 = vxpose.xlu0.b32.cont [2/16] 0.0, 128
    %1892 = vxpose.xlu0.b32.cont [3/16] 0.0, 128
    %1893 = vxpose.xlu0.b32.cont [4/16] 0.0, 128
    %1894 = vxpose.xlu0.b32.cont [5/16] 0.0, 128
    %1895 = vxpose.xlu0.b32.cont [6/16] 0.0, 128
    %1896 = vxpose.xlu0.b32.cont [7/16] 0.0, 128
    %1897 = vxpose.xlu0.b32.cont [8/16] 0.0, 128
    %1898 = vxpose.xlu0.b32.cont [9/16] 0.0, 128
    %1899 = vxpose.xlu0.b32.cont [10/16] 0.0, 128
    %1900 = vxpose.xlu0.b32.cont [11/16] 0.0, 128
    %1901 = vxpose.xlu0.b32.cont [12/16] 0.0, 128
    %1902 = vxpose.xlu0.b32.cont [13/16] 0.0, 128
    %1903 = vxpose.xlu0.b32.cont [14/16] 0.0, 128
    %1904 = vxpose.xlu0.b32.cont [15/16] 0.0, 128
    %1905 = vxpose.xlu0.b32.end [16/16] 0.0, 128
    %v1906 = vpop.trf.xlu0
    %v1907 = vpop.trf.xlu0
    %v1908 = vpop.trf.xlu0
    %v1909 = vpop.trf.xlu0
    %v1910 = vpop.trf.xlu0
    %v1911 = vpop.trf.xlu0
    %v1912 = vpop.trf.xlu0
    %v1913 = vpop.trf.xlu0
    %v1914 = vpop.trf.xlu0
    %v1915 = vpop.trf.xlu0
    %v1916 = vpop.trf.xlu0
    %v1917 = vpop.trf.xlu0
    %v1918 = vpop.trf.xlu0
    %v1919 = vpop.trf.xlu0
    %v1920 = vpop.trf.xlu0
    %v1921 = vpop.trf.xlu0
    %v1923 = vsel %vm136, %v1906, 0
    %1925 = vmatprep.subr.mxu0 0.0
    %1926 = vmatpush1.msra.mxu0 %v89
    %1927 = vmatprep.subr.mxu0 0.0
    %1928 = vmatpush1.msra.mxu0 0.0
    %1929 = vmatprep.subr.mxu0 0.0
    %1930 = vmatpush1.msra.mxu0 0.0
    %1931 = vmatprep.subr.mxu0 0.0
    %1932 = vmatpush1.msra.mxu0 0.0
    %1933 = vmatprep.subr.mxu0 0.0
    %1934 = vmatpush1.msra.mxu0 0.0
    %1935 = vmatprep.subr.mxu0 0.0
    %1936 = vmatpush1.msra.mxu0 0.0
    %1937 = vmatprep.subr.mxu0 0.0
    %1938 = vmatpush1.msra.mxu0 0.0
    %1939 = vmatprep.subr.mxu0 0.0
    %1940 = vmatpush1.msra.mxu0 0.0
    %1941 = vmatprep.subr.mxu0 0.0
    %1942 = vmatpush1.msra.mxu0 0.0
    %1943 = vmatprep.subr.mxu0 0.0
    %1944 = vmatpush1.msra.mxu0 0.0
    %1945 = vmatprep.subr.mxu0 0.0
    %1946 = vmatpush1.msra.mxu0 0.0
    %1947 = vmatprep.subr.mxu0 0.0
    %1948 = vmatpush1.msra.mxu0 0.0
    %1949 = vmatprep.subr.mxu0 0.0
    %1950 = vmatpush1.msra.mxu0 0.0
    %1951 = vmatprep.subr.mxu0 0.0
    %1952 = vmatpush1.msra.mxu0 0.0
    %1953 = vmatprep.subr.mxu0 0.0
    %1954 = vmatpush1.msra.mxu0 0.0
    %1955 = vmatprep.subr.mxu0 0.0
    %1956 = vmatpush1.msra.mxu0 0.0
    %1957 = vmatprep.subr.mxu0 0.0
    %1958 = vmatpush1.msra.mxu0 0.0
    %1959 = vmatprep.subr.mxu0 0.0
    %1960 = vmatpush1.msra.mxu0 0.0
    %1961 = vmatprep.subr.mxu0 0.0
    %1962 = vmatpush1.msra.mxu0 0.0
    %1963 = vmatprep.subr.mxu0 0.0
    %1964 = vmatpush1.msra.mxu0 0.0
    %1965 = vmatprep.subr.mxu0 0.0
    %1966 = vmatpush1.msra.mxu0 0.0
    %1967 = vmatprep.subr.mxu0 0.0
    %1968 = vmatpush1.msra.mxu0 0.0
    %1969 = vmatprep.subr.mxu0 0.0
    %1970 = vmatpush1.msra.mxu0 0.0
    %1971 = vmatprep.subr.mxu0 0.0
    %1972 = vmatpush1.msra.mxu0 0.0
    %1973 = vmatprep.subr.mxu0 0.0
    %1974 = vmatpush1.msra.mxu0 0.0
    %1975 = vmatprep.subr.mxu0 0.0
    %1976 = vmatpush1.msra.mxu0 0.0
    %1977 = vmatprep.subr.mxu0 0.0
    %1978 = vmatpush1.msra.mxu0 0.0
    %1979 = vmatprep.subr.mxu0 0.0
    %1980 = vmatpush1.msra.mxu0 0.0
    %1981 = vmatprep.subr.mxu0 0.0
    %1982 = vmatpush1.msra.mxu0 0.0
    %1983 = vmatprep.subr.mxu0 0.0
    %1984 = vmatpush1.msra.mxu0 0.0
    %1985 = vmatprep.subr.mxu0 0.0
    %1986 = vmatpush1.msra.mxu0 0.0
    %1987 = vmatprep.subr.mxu0 0.0
    %1988 = vmatpush1.msra.mxu0 0.0
    %1989 = vmatprep.mubr.f32.mxu0 0.0
    %1990 = vmatmul.mubr.f32.gmra.mrb[0].mxu0 %v1923
    %v1991 = vpop.f32.mrb[0].mxu0
    %v1992 = vadd.f32 0.0, %v1991
    %v1993 = vpop.f32.mrb[0].mxu0
    %1994 = vdwg.mxu0
    %1995 = vxpose.xlu0.b32.start [1/16] %v58, 128
    %1996 = vxpose.xlu0.b32.cont [2/16] 0.0, 128
    %1997 = vxpose.xlu0.b32.cont [3/16] 0.0, 128
    %1998 = vxpose.xlu0.b32.cont [4/16] 0.0, 128
    %1999 = vxpose.xlu0.b32.cont [5/16] 0.0, 128
    %2000 = vxpose.xlu0.b32.cont [6/16] 0.0, 128
    %2001 = vxpose.xlu0.b32.cont [7/16] 0.0, 128
    %2002 = vxpose.xlu0.b32.cont [8/16] 0.0, 128
    %2003 = vxpose.xlu0.b32.cont [9/16] 0.0, 128
    %2004 = vxpose.xlu0.b32.cont [10/16] 0.0, 128
    %2005 = vxpose.xlu0.b32.cont [11/16] 0.0, 128
    %2006 = vxpose.xlu0.b32.cont [12/16] 0.0, 128
    %2007 = vxpose.xlu0.b32.cont [13/16] 0.0, 128
    %2008 = vxpose.xlu0.b32.cont [14/16] 0.0, 128
    %2009 = vxpose.xlu0.b32.cont [15/16] 0.0, 128
    %2010 = vxpose.xlu0.b32.end [16/16] 0.0, 128
    %v2011 = vpop.trf.xlu0
    %v2012 = vpop.trf.xlu0
    %v2013 = vpop.trf.xlu0
    %v2014 = vpop.trf.xlu0
    %v2015 = vpop.trf.xlu0
    %v2016 = vpop.trf.xlu0
    %v2017 = vpop.trf.xlu0
    %v2018 = vpop.trf.xlu0
    %v2019 = vpop.trf.xlu0
    %v2020 = vpop.trf.xlu0
    %v2021 = vpop.trf.xlu0
    %v2022 = vpop.trf.xlu0
    %v2023 = vpop.trf.xlu0
    %v2024 = vpop.trf.xlu0
    %v2025 = vpop.trf.xlu0
    %v2026 = vpop.trf.xlu0
    %v2028 = vsel %vm136, %v2011, 0
    %2030 = vmatprep.subr.mxu0 0.0
    %2031 = vmatpush1.msra.mxu0 %v90
    %2032 = vmatprep.subr.mxu0 0.0
    %2033 = vmatpush1.msra.mxu0 0.0
    %2034 = vmatprep.subr.mxu0 0.0
    %2035 = vmatpush1.msra.mxu0 0.0
    %2036 = vmatprep.subr.mxu0 0.0
    %2037 = vmatpush1.msra.mxu0 0.0
    %2038 = vmatprep.subr.mxu0 0.0
    %2039 = vmatpush1.msra.mxu0 0.0
    %2040 = vmatprep.subr.mxu0 0.0
    %2041 = vmatpush1.msra.mxu0 0.0
    %2042 = vmatprep.subr.mxu0 0.0
    %2043 = vmatpush1.msra.mxu0 0.0
    %2044 = vmatprep.subr.mxu0 0.0
    %2045 = vmatpush1.msra.mxu0 0.0
    %2046 = vmatprep.subr.mxu0 0.0
    %2047 = vmatpush1.msra.mxu0 0.0
    %2048 = vmatprep.subr.mxu0 0.0
    %2049 = vmatpush1.msra.mxu0 0.0
    %2050 = vmatprep.subr.mxu0 0.0
    %2051 = vmatpush1.msra.mxu0 0.0
    %2052 = vmatprep.subr.mxu0 0.0
    %2053 = vmatpush1.msra.mxu0 0.0
    %2054 = vmatprep.subr.mxu0 0.0
    %2055 = vmatpush1.msra.mxu0 0.0
    %2056 = vmatprep.subr.mxu0 0.0
    %2057 = vmatpush1.msra.mxu0 0.0
    %2058 = vmatprep.subr.mxu0 0.0
    %2059 = vmatpush1.msra.mxu0 0.0
    %2060 = vmatprep.subr.mxu0 0.0
    %2061 = vmatpush1.msra.mxu0 0.0
    %2062 = vmatprep.subr.mxu0 0.0
    %2063 = vmatpush1.msra.mxu0 0.0
    %2064 = vmatprep.subr.mxu0 0.0
    %2065 = vmatpush1.msra.mxu0 0.0
    %2066 = vmatprep.subr.mxu0 0.0
    %2067 = vmatpush1.msra.mxu0 0.0
    %2068 = vmatprep.subr.mxu0 0.0
    %2069 = vmatpush1.msra.mxu0 0.0
    %2070 = vmatprep.subr.mxu0 0.0
    %2071 = vmatpush1.msra.mxu0 0.0
    %2072 = vmatprep.subr.mxu0 0.0
    %2073 = vmatpush1.msra.mxu0 0.0
    %2074 = vmatprep.subr.mxu0 0.0
    %2075 = vmatpush1.msra.mxu0 0.0
    %2076 = vmatprep.subr.mxu0 0.0
    %2077 = vmatpush1.msra.mxu0 0.0
    %2078 = vmatprep.subr.mxu0 0.0
    %2079 = vmatpush1.msra.mxu0 0.0
    %2080 = vmatprep.subr.mxu0 0.0
    %2081 = vmatpush1.msra.mxu0 0.0
    %2082 = vmatprep.subr.mxu0 0.0
    %2083 = vmatpush1.msra.mxu0 0.0
    %2084 = vmatprep.subr.mxu0 0.0
    %2085 = vmatpush1.msra.mxu0 0.0
    %2086 = vmatprep.subr.mxu0 0.0
    %2087 = vmatpush1.msra.mxu0 0.0
    %2088 = vmatprep.subr.mxu0 0.0
    %2089 = vmatpush1.msra.mxu0 0.0
    %2090 = vmatprep.subr.mxu0 0.0
    %2091 = vmatpush1.msra.mxu0 0.0
    %2092 = vmatprep.subr.mxu0 0.0
    %2093 = vmatpush1.msra.mxu0 0.0
    %2094 = vmatprep.mubr.f32.mxu0 0.0
    %2095 = vmatmul.mubr.f32.gmra.mrb[0].mxu0 %v2028
    %v2096 = vpop.f32.mrb[0].mxu0
    %v2097 = vadd.f32 0.0, %v2096
    %v2098 = vpop.f32.mrb[0].mxu0
    %2099 = vdwg.mxu0
    %2100 = vxpose.xlu0.b32.start [1/16] %v59, 128
    %2101 = vxpose.xlu0.b32.cont [2/16] 0.0, 128
    %2102 = vxpose.xlu0.b32.cont [3/16] 0.0, 128
    %2103 = vxpose.xlu0.b32.cont [4/16] 0.0, 128
    %2104 = vxpose.xlu0.b32.cont [5/16] 0.0, 128
    %2105 = vxpose.xlu0.b32.cont [6/16] 0.0, 128
    %2106 = vxpose.xlu0.b32.cont [7/16] 0.0, 128
    %2107 = vxpose.xlu0.b32.cont [8/16] 0.0, 128
    %2108 = vxpose.xlu0.b32.cont [9/16] 0.0, 128
    %2109 = vxpose.xlu0.b32.cont [10/16] 0.0, 128
    %2110 = vxpose.xlu0.b32.cont [11/16] 0.0, 128
    %2111 = vxpose.xlu0.b32.cont [12/16] 0.0, 128
    %2112 = vxpose.xlu0.b32.cont [13/16] 0.0, 128
    %2113 = vxpose.xlu0.b32.cont [14/16] 0.0, 128
    %2114 = vxpose.xlu0.b32.cont [15/16] 0.0, 128
    %2115 = vxpose.xlu0.b32.end [16/16] 0.0, 128
    %v2116 = vpop.trf.xlu0
    %v2117 = vpop.trf.xlu0
    %v2118 = vpop.trf.xlu0
    %v2119 = vpop.trf.xlu0
    %v2120 = vpop.trf.xlu0
    %v2121 = vpop.trf.xlu0
    %v2122 = vpop.trf.xlu0
    %v2123 = vpop.trf.xlu0
    %v2124 = vpop.trf.xlu0
    %v2125 = vpop.trf.xlu0
    %v2126 = vpop.trf.xlu0
    %v2127 = vpop.trf.xlu0
    %v2128 = vpop.trf.xlu0
    %v2129 = vpop.trf.xlu0
    %v2130 = vpop.trf.xlu0
    %v2131 = vpop.trf.xlu0
    %v2133 = vsel %vm136, %v2116, 0
    %2135 = vmatprep.subr.mxu0 0.0
    %2136 = vmatpush1.msra.mxu0 %v91
    %2137 = vmatprep.subr.mxu0 0.0
    %2138 = vmatpush1.msra.mxu0 0.0
    %2139 = vmatprep.subr.mxu0 0.0
    %2140 = vmatpush1.msra.mxu0 0.0
    %2141 = vmatprep.subr.mxu0 0.0
    %2142 = vmatpush1.msra.mxu0 0.0
    %2143 = vmatprep.subr.mxu0 0.0
    %2144 = vmatpush1.msra.mxu0 0.0
    %2145 = vmatprep.subr.mxu0 0.0
    %2146 = vmatpush1.msra.mxu0 0.0
    %2147 = vmatprep.subr.mxu0 0.0
    %2148 = vmatpush1.msra.mxu0 0.0
    %2149 = vmatprep.subr.mxu0 0.0
    %2150 = vmatpush1.msra.mxu0 0.0
    %2151 = vmatprep.subr.mxu0 0.0
    %2152 = vmatpush1.msra.mxu0 0.0
    %2153 = vmatprep.subr.mxu0 0.0
    %2154 = vmatpush1.msra.mxu0 0.0
    %2155 = vmatprep.subr.mxu0 0.0
    %2156 = vmatpush1.msra.mxu0 0.0
    %2157 = vmatprep.subr.mxu0 0.0
    %2158 = vmatpush1.msra.mxu0 0.0
    %2159 = vmatprep.subr.mxu0 0.0
    %2160 = vmatpush1.msra.mxu0 0.0
    %2161 = vmatprep.subr.mxu0 0.0
    %2162 = vmatpush1.msra.mxu0 0.0
    %2163 = vmatprep.subr.mxu0 0.0
    %2164 = vmatpush1.msra.mxu0 0.0
    %2165 = vmatprep.subr.mxu0 0.0
    %2166 = vmatpush1.msra.mxu0 0.0
    %2167 = vmatprep.subr.mxu0 0.0
    %2168 = vmatpush1.msra.mxu0 0.0
    %2169 = vmatprep.subr.mxu0 0.0
    %2170 = vmatpush1.msra.mxu0 0.0
    %2171 = vmatprep.subr.mxu0 0.0
    %2172 = vmatpush1.msra.mxu0 0.0
    %2173 = vmatprep.subr.mxu0 0.0
    %2174 = vmatpush1.msra.mxu0 0.0
    %2175 = vmatprep.subr.mxu0 0.0
    %2176 = vmatpush1.msra.mxu0 0.0
    %2177 = vmatprep.subr.mxu0 0.0
    %2178 = vmatpush1.msra.mxu0 0.0
    %2179 = vmatprep.subr.mxu0 0.0
    %2180 = vmatpush1.msra.mxu0 0.0
    %2181 = vmatprep.subr.mxu0 0.0
    %2182 = vmatpush1.msra.mxu0 0.0
    %2183 = vmatprep.subr.mxu0 0.0
    %2184 = vmatpush1.msra.mxu0 0.0
    %2185 = vmatprep.subr.mxu0 0.0
    %2186 = vmatpush1.msra.mxu0 0.0
    %2187 = vmatprep.subr.mxu0 0.0
    %2188 = vmatpush1.msra.mxu0 0.0
    %2189 = vmatprep.subr.mxu0 0.0
    %2190 = vmatpush1.msra.mxu0 0.0
    %2191 = vmatprep.subr.mxu0 0.0
    %2192 = vmatpush1.msra.mxu0 0.0
    %2193 = vmatprep.subr.mxu0 0.0
    %2194 = vmatpush1.msra.mxu0 0.0
    %2195 = vmatprep.subr.mxu0 0.0
    %2196 = vmatpush1.msra.mxu0 0.0
    %2197 = vmatprep.subr.mxu0 0.0
    %2198 = vmatpush1.msra.mxu0 0.0
    %2199 = vmatprep.mubr.f32.mxu0 0.0
    %2200 = vmatmul.mubr.f32.gmra.mrb[0].mxu0 %v2133
    %v2201 = vpop.f32.mrb[0].mxu0
    %v2202 = vadd.f32 0.0, %v2201
    %v2203 = vpop.f32.mrb[0].mxu0
    %2204 = vdwg.mxu0
    %2205 = vxpose.xlu0.b32.start [1/16] %v60, 128
    %2206 = vxpose.xlu0.b32.cont [2/16] 0.0, 128
    %2207 = vxpose.xlu0.b32.cont [3/16] 0.0, 128
    %2208 = vxpose.xlu0.b32.cont [4/16] 0.0, 128
    %2209 = vxpose.xlu0.b32.cont [5/16] 0.0, 128
    %2210 = vxpose.xlu0.b32.cont [6/16] 0.0, 128
    %2211 = vxpose.xlu0.b32.cont [7/16] 0.0, 128
    %2212 = vxpose.xlu0.b32.cont [8/16] 0.0, 128
    %2213 = vxpose.xlu0.b32.cont [9/16] 0.0, 128
    %2214 = vxpose.xlu0.b32.cont [10/16] 0.0, 128
    %2215 = vxpose.xlu0.b32.cont [11/16] 0.0, 128
    %2216 = vxpose.xlu0.b32.cont [12/16] 0.0, 128
    %2217 = vxpose.xlu0.b32.cont [13/16] 0.0, 128
    %2218 = vxpose.xlu0.b32.cont [14/16] 0.0, 128
    %2219 = vxpose.xlu0.b32.cont [15/16] 0.0, 128
    %2220 = vxpose.xlu0.b32.end [16/16] 0.0, 128
    %v2221 = vpop.trf.xlu0
    %v2222 = vpop.trf.xlu0
    %v2223 = vpop.trf.xlu0
    %v2224 = vpop.trf.xlu0
    %v2225 = vpop.trf.xlu0
    %v2226 = vpop.trf.xlu0
    %v2227 = vpop.trf.xlu0
    %v2228 = vpop.trf.xlu0
    %v2229 = vpop.trf.xlu0
    %v2230 = vpop.trf.xlu0
    %v2231 = vpop.trf.xlu0
    %v2232 = vpop.trf.xlu0
    %v2233 = vpop.trf.xlu0
    %v2234 = vpop.trf.xlu0
    %v2235 = vpop.trf.xlu0
    %v2236 = vpop.trf.xlu0
    %v2238 = vsel %vm136, %v2221, 0
    %2240 = vmatprep.subr.mxu0 0.0
    %2241 = vmatpush1.msra.mxu0 %v92
    %2242 = vmatprep.subr.mxu0 0.0
    %2243 = vmatpush1.msra.mxu0 0.0
    %2244 = vmatprep.subr.mxu0 0.0
    %2245 = vmatpush1.msra.mxu0 0.0
    %2246 = vmatprep.subr.mxu0 0.0
    %2247 = vmatpush1.msra.mxu0 0.0
    %2248 = vmatprep.subr.mxu0 0.0
    %2249 = vmatpush1.msra.mxu0 0.0
    %2250 = vmatprep.subr.mxu0 0.0
    %2251 = vmatpush1.msra.mxu0 0.0
    %2252 = vmatprep.subr.mxu0 0.0
    %2253 = vmatpush1.msra.mxu0 0.0
    %2254 = vmatprep.subr.mxu0 0.0
    %2255 = vmatpush1.msra.mxu0 0.0
    %2256 = vmatprep.subr.mxu0 0.0
    %2257 = vmatpush1.msra.mxu0 0.0
    %2258 = vmatprep.subr.mxu0 0.0
    %2259 = vmatpush1.msra.mxu0 0.0
    %2260 = vmatprep.subr.mxu0 0.0
    %2261 = vmatpush1.msra.mxu0 0.0
    %2262 = vmatprep.subr.mxu0 0.0
    %2263 = vmatpush1.msra.mxu0 0.0
    %2264 = vmatprep.subr.mxu0 0.0
    %2265 = vmatpush1.msra.mxu0 0.0
    %2266 = vmatprep.subr.mxu0 0.0
    %2267 = vmatpush1.msra.mxu0 0.0
    %2268 = vmatprep.subr.mxu0 0.0
    %2269 = vmatpush1.msra.mxu0 0.0
    %2270 = vmatprep.subr.mxu0 0.0
    %2271 = vmatpush1.msra.mxu0 0.0
    %2272 = vmatprep.subr.mxu0 0.0
    %2273 = vmatpush1.msra.mxu0 0.0
    %2274 = vmatprep.subr.mxu0 0.0
    %2275 = vmatpush1.msra.mxu0 0.0
    %2276 = vmatprep.subr.mxu0 0.0
    %2277 = vmatpush1.msra.mxu0 0.0
    %2278 = vmatprep.subr.mxu0 0.0
    %2279 = vmatpush1.msra.mxu0 0.0
    %2280 = vmatprep.subr.mxu0 0.0
    %2281 = vmatpush1.msra.mxu0 0.0
    %2282 = vmatprep.subr.mxu0 0.0
    %2283 = vmatpush1.msra.mxu0 0.0
    %2284 = vmatprep.subr.mxu0 0.0
    %2285 = vmatpush1.msra.mxu0 0.0
    %2286 = vmatprep.subr.mxu0 0.0
    %2287 = vmatpush1.msra.mxu0 0.0
    %2288 = vmatprep.subr.mxu0 0.0
    %2289 = vmatpush1.msra.mxu0 0.0
    %2290 = vmatprep.subr.mxu0 0.0
    %2291 = vmatpush1.msra.mxu0 0.0
    %2292 = vmatprep.subr.mxu0 0.0
    %2293 = vmatpush1.msra.mxu0 0.0
    %2294 = vmatprep.subr.mxu0 0.0
    %2295 = vmatpush1.msra.mxu0 0.0
    %2296 = vmatprep.subr.mxu0 0.0
    %2297 = vmatpush1.msra.mxu0 0.0
    %2298 = vmatprep.subr.mxu0 0.0
    %2299 = vmatpush1.msra.mxu0 0.0
    %2300 = vmatprep.subr.mxu0 0.0
    %2301 = vmatpush1.msra.mxu0 0.0
    %2302 = vmatprep.subr.mxu0 0.0
    %2303 = vmatpush1.msra.mxu0 0.0
    %2304 = vmatprep.mubr.f32.mxu0 0.0
    %2305 = vmatmul.mubr.f32.gmra.mrb[0].mxu0 %v2238
    %v2306 = vpop.f32.mrb[0].mxu0
    %v2307 = vadd.f32 0.0, %v2306
    %v2308 = vpop.f32.mrb[0].mxu0
    %2309 = vdwg.mxu0
    %2310 = vxpose.xlu0.b32.start [1/16] %v61, 128
    %2311 = vxpose.xlu0.b32.cont [2/16] 0.0, 128
    %2312 = vxpose.xlu0.b32.cont [3/16] 0.0, 128
    %2313 = vxpose.xlu0.b32.cont [4/16] 0.0, 128
    %2314 = vxpose.xlu0.b32.cont [5/16] 0.0, 128
    %2315 = vxpose.xlu0.b32.cont [6/16] 0.0, 128
    %2316 = vxpose.xlu0.b32.cont [7/16] 0.0, 128
    %2317 = vxpose.xlu0.b32.cont [8/16] 0.0, 128
    %2318 = vxpose.xlu0.b32.cont [9/16] 0.0, 128
    %2319 = vxpose.xlu0.b32.cont [10/16] 0.0, 128
    %2320 = vxpose.xlu0.b32.cont [11/16] 0.0, 128
    %2321 = vxpose.xlu0.b32.cont [12/16] 0.0, 128
    %2322 = vxpose.xlu0.b32.cont [13/16] 0.0, 128
    %2323 = vxpose.xlu0.b32.cont [14/16] 0.0, 128
    %2324 = vxpose.xlu0.b32.cont [15/16] 0.0, 128
    %2325 = vxpose.xlu0.b32.end [16/16] 0.0, 128
    %v2326 = vpop.trf.xlu0
    %v2327 = vpop.trf.xlu0
    %v2328 = vpop.trf.xlu0
    %v2329 = vpop.trf.xlu0
    %v2330 = vpop.trf.xlu0
    %v2331 = vpop.trf.xlu0
    %v2332 = vpop.trf.xlu0
    %v2333 = vpop.trf.xlu0
    %v2334 = vpop.trf.xlu0
    %v2335 = vpop.trf.xlu0
    %v2336 = vpop.trf.xlu0
    %v2337 = vpop.trf.xlu0
    %v2338 = vpop.trf.xlu0
    %v2339 = vpop.trf.xlu0
    %v2340 = vpop.trf.xlu0
    %v2341 = vpop.trf.xlu0
    %v2343 = vsel %vm136, %v2326, 0
    %2345 = vmatprep.subr.mxu0 0.0
    %2346 = vmatpush1.msra.mxu0 %v93
    %2347 = vmatprep.subr.mxu0 0.0
    %2348 = vmatpush1.msra.mxu0 0.0
    %2349 = vmatprep.subr.mxu0 0.0
    %2350 = vmatpush1.msra.mxu0 0.0
    %2351 = vmatprep.subr.mxu0 0.0
    %2352 = vmatpush1.msra.mxu0 0.0
    %2353 = vmatprep.subr.mxu0 0.0
    %2354 = vmatpush1.msra.mxu0 0.0
    %2355 = vmatprep.subr.mxu0 0.0
    %2356 = vmatpush1.msra.mxu0 0.0
    %2357 = vmatprep.subr.mxu0 0.0
    %2358 = vmatpush1.msra.mxu0 0.0
    %2359 = vmatprep.subr.mxu0 0.0
    %2360 = vmatpush1.msra.mxu0 0.0
    %2361 = vmatprep.subr.mxu0 0.0
    %2362 = vmatpush1.msra.mxu0 0.0
    %2363 = vmatprep.subr.mxu0 0.0
    %2364 = vmatpush1.msra.mxu0 0.0
    %2365 = vmatprep.subr.mxu0 0.0
    %2366 = vmatpush1.msra.mxu0 0.0
    %2367 = vmatprep.subr.mxu0 0.0
    %2368 = vmatpush1.msra.mxu0 0.0
    %2369 = vmatprep.subr.mxu0 0.0
    %2370 = vmatpush1.msra.mxu0 0.0
    %2371 = vmatprep.subr.mxu0 0.0
    %2372 = vmatpush1.msra.mxu0 0.0
    %2373 = vmatprep.subr.mxu0 0.0
    %2374 = vmatpush1.msra.mxu0 0.0
    %2375 = vmatprep.subr.mxu0 0.0
    %2376 = vmatpush1.msra.mxu0 0.0
    %2377 = vmatprep.subr.mxu0 0.0
    %2378 = vmatpush1.msra.mxu0 0.0
    %2379 = vmatprep.subr.mxu0 0.0
    %2380 = vmatpush1.msra.mxu0 0.0
    %2381 = vmatprep.subr.mxu0 0.0
    %2382 = vmatpush1.msra.mxu0 0.0
    %2383 = vmatprep.subr.mxu0 0.0
    %2384 = vmatpush1.msra.mxu0 0.0
    %2385 = vmatprep.subr.mxu0 0.0
    %2386 = vmatpush1.msra.mxu0 0.0
    %2387 = vmatprep.subr.mxu0 0.0
    %2388 = vmatpush1.msra.mxu0 0.0
    %2389 = vmatprep.subr.mxu0 0.0
    %2390 = vmatpush1.msra.mxu0 0.0
    %2391 = vmatprep.subr.mxu0 0.0
    %2392 = vmatpush1.msra.mxu0 0.0
    %2393 = vmatprep.subr.mxu0 0.0
    %2394 = vmatpush1.msra.mxu0 0.0
    %2395 = vmatprep.subr.mxu0 0.0
    %2396 = vmatpush1.msra.mxu0 0.0
    %2397 = vmatprep.subr.mxu0 0.0
    %2398 = vmatpush1.msra.mxu0 0.0
    %2399 = vmatprep.subr.mxu0 0.0
    %2400 = vmatpush1.msra.mxu0 0.0
    %2401 = vmatprep.subr.mxu0 0.0
    %2402 = vmatpush1.msra.mxu0 0.0
    %2403 = vmatprep.subr.mxu0 0.0
    %2404 = vmatpush1.msra.mxu0 0.0
    %2405 = vmatprep.subr.mxu0 0.0
    %2406 = vmatpush1.msra.mxu0 0.0
    %2407 = vmatprep.subr.mxu0 0.0
    %2408 = vmatpush1.msra.mxu0 0.0
    %2409 = vmatprep.mubr.f32.mxu0 0.0
    %2410 = vmatmul.mubr.f32.gmra.mrb[0].mxu0 %v2343
    %v2411 = vpop.f32.mrb[0].mxu0
    %v2412 = vadd.f32 0.0, %v2411
    %v2413 = vpop.f32.mrb[0].mxu0
    %2414 = vdwg.mxu0
    %2415 = vxpose.xlu0.b32.start [1/16] %v62, 128
    %2416 = vxpose.xlu0.b32.cont [2/16] 0.0, 128
    %2417 = vxpose.xlu0.b32.cont [3/16] 0.0, 128
    %2418 = vxpose.xlu0.b32.cont [4/16] 0.0, 128
    %2419 = vxpose.xlu0.b32.cont [5/16] 0.0, 128
    %2420 = vxpose.xlu0.b32.cont [6/16] 0.0, 128
    %2421 = vxpose.xlu0.b32.cont [7/16] 0.0, 128
    %2422 = vxpose.xlu0.b32.cont [8/16] 0.0, 128
    %2423 = vxpose.xlu0.b32.cont [9/16] 0.0, 128
    %2424 = vxpose.xlu0.b32.cont [10/16] 0.0, 128
    %2425 = vxpose.xlu0.b32.cont [11/16] 0.0, 128
    %2426 = vxpose.xlu0.b32.cont [12/16] 0.0, 128
    %2427 = vxpose.xlu0.b32.cont [13/16] 0.0, 128
    %2428 = vxpose.xlu0.b32.cont [14/16] 0.0, 128
    %2429 = vxpose.xlu0.b32.cont [15/16] 0.0, 128
    %2430 = vxpose.xlu0.b32.end [16/16] 0.0, 128
    %v2431 = vpop.trf.xlu0
    %v2432 = vpop.trf.xlu0
    %v2433 = vpop.trf.xlu0
    %v2434 = vpop.trf.xlu0
    %v2435 = vpop.trf.xlu0
    %v2436 = vpop.trf.xlu0
    %v2437 = vpop.trf.xlu0
    %v2438 = vpop.trf.xlu0
    %v2439 = vpop.trf.xlu0
    %v2440 = vpop.trf.xlu0
    %v2441 = vpop.trf.xlu0
    %v2442 = vpop.trf.xlu0
    %v2443 = vpop.trf.xlu0
    %v2444 = vpop.trf.xlu0
    %v2445 = vpop.trf.xlu0
    %v2446 = vpop.trf.xlu0
    %v2448 = vsel %vm136, %v2431, 0
    %2450 = vmatprep.subr.mxu0 0.0
    %2451 = vmatpush1.msra.mxu0 %v94
    %2452 = vmatprep.subr.mxu0 0.0
    %2453 = vmatpush1.msra.mxu0 0.0
    %2454 = vmatprep.subr.mxu0 0.0
    %2455 = vmatpush1.msra.mxu0 0.0
    %2456 = vmatprep.subr.mxu0 0.0
    %2457 = vmatpush1.msra.mxu0 0.0
    %2458 = vmatprep.subr.mxu0 0.0
    %2459 = vmatpush1.msra.mxu0 0.0
    %2460 = vmatprep.subr.mxu0 0.0
    %2461 = vmatpush1.msra.mxu0 0.0
    %2462 = vmatprep.subr.mxu0 0.0
    %2463 = vmatpush1.msra.mxu0 0.0
    %2464 = vmatprep.subr.mxu0 0.0
    %2465 = vmatpush1.msra.mxu0 0.0
    %2466 = vmatprep.subr.mxu0 0.0
    %2467 = vmatpush1.msra.mxu0 0.0
    %2468 = vmatprep.subr.mxu0 0.0
    %2469 = vmatpush1.msra.mxu0 0.0
    %2470 = vmatprep.subr.mxu0 0.0
    %2471 = vmatpush1.msra.mxu0 0.0
    %2472 = vmatprep.subr.mxu0 0.0
    %2473 = vmatpush1.msra.mxu0 0.0
    %2474 = vmatprep.subr.mxu0 0.0
    %2475 = vmatpush1.msra.mxu0 0.0
    %2476 = vmatprep.subr.mxu0 0.0
    %2477 = vmatpush1.msra.mxu0 0.0
    %2478 = vmatprep.subr.mxu0 0.0
    %2479 = vmatpush1.msra.mxu0 0.0
    %2480 = vmatprep.subr.mxu0 0.0
    %2481 = vmatpush1.msra.mxu0 0.0
    %2482 = vmatprep.subr.mxu0 0.0
    %2483 = vmatpush1.msra.mxu0 0.0
    %2484 = vmatprep.subr.mxu0 0.0
    %2485 = vmatpush1.msra.mxu0 0.0
    %2486 = vmatprep.subr.mxu0 0.0
    %2487 = vmatpush1.msra.mxu0 0.0
    %2488 = vmatprep.subr.mxu0 0.0
    %2489 = vmatpush1.msra.mxu0 0.0
    %2490 = vmatprep.subr.mxu0 0.0
    %2491 = vmatpush1.msra.mxu0 0.0
    %2492 = vmatprep.subr.mxu0 0.0
    %2493 = vmatpush1.msra.mxu0 0.0
    %2494 = vmatprep.subr.mxu0 0.0
    %2495 = vmatpush1.msra.mxu0 0.0
    %2496 = vmatprep.subr.mxu0 0.0
    %2497 = vmatpush1.msra.mxu0 0.0
    %2498 = vmatprep.subr.mxu0 0.0
    %2499 = vmatpush1.msra.mxu0 0.0
    %2500 = vmatprep.subr.mxu0 0.0
    %2501 = vmatpush1.msra.mxu0 0.0
    %2502 = vmatprep.subr.mxu0 0.0
    %2503 = vmatpush1.msra.mxu0 0.0
    %2504 = vmatprep.subr.mxu0 0.0
    %2505 = vmatpush1.msra.mxu0 0.0
    %2506 = vmatprep.subr.mxu0 0.0
    %2507 = vmatpush1.msra.mxu0 0.0
    %2508 = vmatprep.subr.mxu0 0.0
    %2509 = vmatpush1.msra.mxu0 0.0
    %2510 = vmatprep.subr.mxu0 0.0
    %2511 = vmatpush1.msra.mxu0 0.0
    %2512 = vmatprep.subr.mxu0 0.0
    %2513 = vmatpush1.msra.mxu0 0.0
    %2514 = vmatprep.mubr.f32.mxu0 0.0
    %2515 = vmatmul.mubr.f32.gmra.mrb[0].mxu0 %v2448
    %v2516 = vpop.f32.mrb[0].mxu0
    %v2517 = vadd.f32 0.0, %v2516
    %v2518 = vpop.f32.mrb[0].mxu0
    %2519 = vdwg.mxu0
    %2520 = vxpose.xlu0.b32.start [1/16] %v63, 128
    %2521 = vxpose.xlu0.b32.cont [2/16] 0.0, 128
    %2522 = vxpose.xlu0.b32.cont [3/16] 0.0, 128
    %2523 = vxpose.xlu0.b32.cont [4/16] 0.0, 128
    %2524 = vxpose.xlu0.b32.cont [5/16] 0.0, 128
    %2525 = vxpose.xlu0.b32.cont [6/16] 0.0, 128
    %2526 = vxpose.xlu0.b32.cont [7/16] 0.0, 128
    %2527 = vxpose.xlu0.b32.cont [8/16] 0.0, 128
    %2528 = vxpose.xlu0.b32.cont [9/16] 0.0, 128
    %2529 = vxpose.xlu0.b32.cont [10/16] 0.0, 128
    %2530 = vxpose.xlu0.b32.cont [11/16] 0.0, 128
    %2531 = vxpose.xlu0.b32.cont [12/16] 0.0, 128
    %2532 = vxpose.xlu0.b32.cont [13/16] 0.0, 128
    %2533 = vxpose.xlu0.b32.cont [14/16] 0.0, 128
    %2534 = vxpose.xlu0.b32.cont [15/16] 0.0, 128
    %2535 = vxpose.xlu0.b32.end [16/16] 0.0, 128
    %v2536 = vpop.trf.xlu0
    %v2537 = vpop.trf.xlu0
    %v2538 = vpop.trf.xlu0
    %v2539 = vpop.trf.xlu0
    %v2540 = vpop.trf.xlu0
    %v2541 = vpop.trf.xlu0
    %v2542 = vpop.trf.xlu0
    %v2543 = vpop.trf.xlu0
    %v2544 = vpop.trf.xlu0
    %v2545 = vpop.trf.xlu0
    %v2546 = vpop.trf.xlu0
    %v2547 = vpop.trf.xlu0
    %v2548 = vpop.trf.xlu0
    %v2549 = vpop.trf.xlu0
    %v2550 = vpop.trf.xlu0
    %v2551 = vpop.trf.xlu0
    %v2553 = vsel %vm136, %v2536, 0
    %2555 = vmatprep.subr.mxu0 0.0
    %2556 = vmatpush1.msra.mxu0 %v95
    %2557 = vmatprep.subr.mxu0 0.0
    %2558 = vmatpush1.msra.mxu0 0.0
    %2559 = vmatprep.subr.mxu0 0.0
    %2560 = vmatpush1.msra.mxu0 0.0
    %2561 = vmatprep.subr.mxu0 0.0
    %2562 = vmatpush1.msra.mxu0 0.0
    %2563 = vmatprep.subr.mxu0 0.0
    %2564 = vmatpush1.msra.mxu0 0.0
    %2565 = vmatprep.subr.mxu0 0.0
    %2566 = vmatpush1.msra.mxu0 0.0
    %2567 = vmatprep.subr.mxu0 0.0
    %2568 = vmatpush1.msra.mxu0 0.0
    %2569 = vmatprep.subr.mxu0 0.0
    %2570 = vmatpush1.msra.mxu0 0.0
    %2571 = vmatprep.subr.mxu0 0.0
    %2572 = vmatpush1.msra.mxu0 0.0
    %2573 = vmatprep.subr.mxu0 0.0
    %2574 = vmatpush1.msra.mxu0 0.0
    %2575 = vmatprep.subr.mxu0 0.0
    %2576 = vmatpush1.msra.mxu0 0.0
    %2577 = vmatprep.subr.mxu0 0.0
    %2578 = vmatpush1.msra.mxu0 0.0
    %2579 = vmatprep.subr.mxu0 0.0
    %2580 = vmatpush1.msra.mxu0 0.0
    %2581 = vmatprep.subr.mxu0 0.0
    %2582 = vmatpush1.msra.mxu0 0.0
    %2583 = vmatprep.subr.mxu0 0.0
    %2584 = vmatpush1.msra.mxu0 0.0
    %2585 = vmatprep.subr.mxu0 0.0
    %2586 = vmatpush1.msra.mxu0 0.0
    %2587 = vmatprep.subr.mxu0 0.0
    %2588 = vmatpush1.msra.mxu0 0.0
    %2589 = vmatprep.subr.mxu0 0.0
    %2590 = vmatpush1.msra.mxu0 0.0
    %2591 = vmatprep.subr.mxu0 0.0
    %2592 = vmatpush1.msra.mxu0 0.0
    %2593 = vmatprep.subr.mxu0 0.0
    %2594 = vmatpush1.msra.mxu0 0.0
    %2595 = vmatprep.subr.mxu0 0.0
    %2596 = vmatpush1.msra.mxu0 0.0
    %2597 = vmatprep.subr.mxu0 0.0
    %2598 = vmatpush1.msra.mxu0 0.0
    %2599 = vmatprep.subr.mxu0 0.0
    %2600 = vmatpush1.msra.mxu0 0.0
    %2601 = vmatprep.subr.mxu0 0.0
    %2602 = vmatpush1.msra.mxu0 0.0
    %2603 = vmatprep.subr.mxu0 0.0
    %2604 = vmatpush1.msra.mxu0 0.0
    %2605 = vmatprep.subr.mxu0 0.0
    %2606 = vmatpush1.msra.mxu0 0.0
    %2607 = vmatprep.subr.mxu0 0.0
    %2608 = vmatpush1.msra.mxu0 0.0
    %2609 = vmatprep.subr.mxu0 0.0
    %2610 = vmatpush1.msra.mxu0 0.0
    %2611 = vmatprep.subr.mxu0 0.0
    %2612 = vmatpush1.msra.mxu0 0.0
    %2613 = vmatprep.subr.mxu0 0.0
    %2614 = vmatpush1.msra.mxu0 0.0
    %2615 = vmatprep.subr.mxu0 0.0
    %2616 = vmatpush1.msra.mxu0 0.0
    %2617 = vmatprep.subr.mxu0 0.0
    %2618 = vmatpush1.msra.mxu0 0.0
    %2619 = vmatprep.mubr.f32.mxu0 0.0
    %2620 = vmatmul.mubr.f32.gmra.mrb[0].mxu0 %v2553
    %v2621 = vpop.f32.mrb[0].mxu0
    %v2622 = vadd.f32 0.0, %v2621
    %v2623 = vpop.f32.mrb[0].mxu0
    %2624 = vdwg.mxu0
    %2625 = vxpose.xlu0.b32.start [1/16] %v64, 128
    %2626 = vxpose.xlu0.b32.cont [2/16] 0.0, 128
    %2627 = vxpose.xlu0.b32.cont [3/16] 0.0, 128
    %2628 = vxpose.xlu0.b32.cont [4/16] 0.0, 128
    %2629 = vxpose.xlu0.b32.cont [5/16] 0.0, 128
    %2630 = vxpose.xlu0.b32.cont [6/16] 0.0, 128
    %2631 = vxpose.xlu0.b32.cont [7/16] 0.0, 128
    %2632 = vxpose.xlu0.b32.cont [8/16] 0.0, 128
    %2633 = vxpose.xlu0.b32.cont [9/16] 0.0, 128
    %2634 = vxpose.xlu0.b32.cont [10/16] 0.0, 128
    %2635 = vxpose.xlu0.b32.cont [11/16] 0.0, 128
    %2636 = vxpose.xlu0.b32.cont [12/16] 0.0, 128
    %2637 = vxpose.xlu0.b32.cont [13/16] 0.0, 128
    %2638 = vxpose.xlu0.b32.cont [14/16] 0.0, 128
    %2639 = vxpose.xlu0.b32.cont [15/16] 0.0, 128
    %2640 = vxpose.xlu0.b32.end [16/16] 0.0, 128
    %v2641 = vpop.trf.xlu0
    %v2642 = vpop.trf.xlu0
    %v2643 = vpop.trf.xlu0
    %v2644 = vpop.trf.xlu0
    %v2645 = vpop.trf.xlu0
    %v2646 = vpop.trf.xlu0
    %v2647 = vpop.trf.xlu0
    %v2648 = vpop.trf.xlu0
    %v2649 = vpop.trf.xlu0
    %v2650 = vpop.trf.xlu0
    %v2651 = vpop.trf.xlu0
    %v2652 = vpop.trf.xlu0
    %v2653 = vpop.trf.xlu0
    %v2654 = vpop.trf.xlu0
    %v2655 = vpop.trf.xlu0
    %v2656 = vpop.trf.xlu0
    %v2658 = vsel %vm136, %v2641, 0
    %2660 = vmatprep.subr.mxu0 0.0
    %2661 = vmatpush1.msra.mxu0 %v96
    %2662 = vmatprep.subr.mxu0 0.0
    %2663 = vmatpush1.msra.mxu0 0.0
    %2664 = vmatprep.subr.mxu0 0.0
    %2665 = vmatpush1.msra.mxu0 0.0
    %2666 = vmatprep.subr.mxu0 0.0
    %2667 = vmatpush1.msra.mxu0 0.0
    %2668 = vmatprep.subr.mxu0 0.0
    %2669 = vmatpush1.msra.mxu0 0.0
    %2670 = vmatprep.subr.mxu0 0.0
    %2671 = vmatpush1.msra.mxu0 0.0
    %2672 = vmatprep.subr.mxu0 0.0
    %2673 = vmatpush1.msra.mxu0 0.0
    %2674 = vmatprep.subr.mxu0 0.0
    %2675 = vmatpush1.msra.mxu0 0.0
    %2676 = vmatprep.subr.mxu0 0.0
    %2677 = vmatpush1.msra.mxu0 0.0
    %2678 = vmatprep.subr.mxu0 0.0
    %2679 = vmatpush1.msra.mxu0 0.0
    %2680 = vmatprep.subr.mxu0 0.0
    %2681 = vmatpush1.msra.mxu0 0.0
    %2682 = vmatprep.subr.mxu0 0.0
    %2683 = vmatpush1.msra.mxu0 0.0
    %2684 = vmatprep.subr.mxu0 0.0
    %2685 = vmatpush1.msra.mxu0 0.0
    %2686 = vmatprep.subr.mxu0 0.0
    %2687 = vmatpush1.msra.mxu0 0.0
    %2688 = vmatprep.subr.mxu0 0.0
    %2689 = vmatpush1.msra.mxu0 0.0
    %2690 = vmatprep.subr.mxu0 0.0
    %2691 = vmatpush1.msra.mxu0 0.0
    %2692 = vmatprep.subr.mxu0 0.0
    %2693 = vmatpush1.msra.mxu0 0.0
    %2694 = vmatprep.subr.mxu0 0.0
    %2695 = vmatpush1.msra.mxu0 0.0
    %2696 = vmatprep.subr.mxu0 0.0
    %2697 = vmatpush1.msra.mxu0 0.0
    %2698 = vmatprep.subr.mxu0 0.0
    %2699 = vmatpush1.msra.mxu0 0.0
    %2700 = vmatprep.subr.mxu0 0.0
    %2701 = vmatpush1.msra.mxu0 0.0
    %2702 = vmatprep.subr.mxu0 0.0
    %2703 = vmatpush1.msra.mxu0 0.0
    %2704 = vmatprep.subr.mxu0 0.0
    %2705 = vmatpush1.msra.mxu0 0.0
    %2706 = vmatprep.subr.mxu0 0.0
    %2707 = vmatpush1.msra.mxu0 0.0
    %2708 = vmatprep.subr.mxu0 0.0
    %2709 = vmatpush1.msra.mxu0 0.0
    %2710 = vmatprep.subr.mxu0 0.0
    %2711 = vmatpush1.msra.mxu0 0.0
    %2712 = vmatprep.subr.mxu0 0.0
    %2713 = vmatpush1.msra.mxu0 0.0
    %2714 = vmatprep.subr.mxu0 0.0
    %2715 = vmatpush1.msra.mxu0 0.0
    %2716 = vmatprep.subr.mxu0 0.0
    %2717 = vmatpush1.msra.mxu0 0.0
    %2718 = vmatprep.subr.mxu0 0.0
    %2719 = vmatpush1.msra.mxu0 0.0
    %2720 = vmatprep.subr.mxu0 0.0
    %2721 = vmatpush1.msra.mxu0 0.0
    %2722 = vmatprep.subr.mxu0 0.0
    %2723 = vmatpush1.msra.mxu0 0.0
    %2724 = vmatprep.mubr.f32.mxu0 0.0
    %2725 = vmatmul.mubr.f32.gmra.mrb[0].mxu0 %v2658
    %v2726 = vpop.f32.mrb[0].mxu0
    %v2727 = vadd.f32 0.0, %v2726
    %v2728 = vpop.f32.mrb[0].mxu0
    %2729 = vdwg.mxu0
    %2730 = vxpose.xlu0.b32.start [1/16] %v65, 128
    %2731 = vxpose.xlu0.b32.cont [2/16] 0.0, 128
    %2732 = vxpose.xlu0.b32.cont [3/16] 0.0, 128
    %2733 = vxpose.xlu0.b32.cont [4/16] 0.0, 128
    %2734 = vxpose.xlu0.b32.cont [5/16] 0.0, 128
    %2735 = vxpose.xlu0.b32.cont [6/16] 0.0, 128
    %2736 = vxpose.xlu0.b32.cont [7/16] 0.0, 128
    %2737 = vxpose.xlu0.b32.cont [8/16] 0.0, 128
    %2738 = vxpose.xlu0.b32.cont [9/16] 0.0, 128
    %2739 = vxpose.xlu0.b32.cont [10/16] 0.0, 128
    %2740 = vxpose.xlu0.b32.cont [11/16] 0.0, 128
    %2741 = vxpose.xlu0.b32.cont [12/16] 0.0, 128
    %2742 = vxpose.xlu0.b32.cont [13/16] 0.0, 128
    %2743 = vxpose.xlu0.b32.cont [14/16] 0.0, 128
    %2744 = vxpose.xlu0.b32.cont [15/16] 0.0, 128
    %2745 = vxpose.xlu0.b32.end [16/16] 0.0, 128
    %v2746 = vpop.trf.xlu0
    %v2747 = vpop.trf.xlu0
    %v2748 = vpop.trf.xlu0
    %v2749 = vpop.trf.xlu0
    %v2750 = vpop.trf.xlu0
    %v2751 = vpop.trf.xlu0
    %v2752 = vpop.trf.xlu0
    %v2753 = vpop.trf.xlu0
    %v2754 = vpop.trf.xlu0
    %v2755 = vpop.trf.xlu0
    %v2756 = vpop.trf.xlu0
    %v2757 = vpop.trf.xlu0
    %v2758 = vpop.trf.xlu0
    %v2759 = vpop.trf.xlu0
    %v2760 = vpop.trf.xlu0
    %v2761 = vpop.trf.xlu0
    %v2763 = vsel %vm136, %v2746, 0
    %2765 = vmatprep.subr.mxu0 0.0
    %2766 = vmatpush1.msra.mxu0 %v97
    %2767 = vmatprep.subr.mxu0 0.0
    %2768 = vmatpush1.msra.mxu0 0.0
    %2769 = vmatprep.subr.mxu0 0.0
    %2770 = vmatpush1.msra.mxu0 0.0
    %2771 = vmatprep.subr.mxu0 0.0
    %2772 = vmatpush1.msra.mxu0 0.0
    %2773 = vmatprep.subr.mxu0 0.0
    %2774 = vmatpush1.msra.mxu0 0.0
    %2775 = vmatprep.subr.mxu0 0.0
    %2776 = vmatpush1.msra.mxu0 0.0
    %2777 = vmatprep.subr.mxu0 0.0
    %2778 = vmatpush1.msra.mxu0 0.0
    %2779 = vmatprep.subr.mxu0 0.0
    %2780 = vmatpush1.msra.mxu0 0.0
    %2781 = vmatprep.subr.mxu0 0.0
    %2782 = vmatpush1.msra.mxu0 0.0
    %2783 = vmatprep.subr.mxu0 0.0
    %2784 = vmatpush1.msra.mxu0 0.0
    %2785 = vmatprep.subr.mxu0 0.0
    %2786 = vmatpush1.msra.mxu0 0.0
    %2787 = vmatprep.subr.mxu0 0.0
    %2788 = vmatpush1.msra.mxu0 0.0
    %2789 = vmatprep.subr.mxu0 0.0
    %2790 = vmatpush1.msra.mxu0 0.0
    %2791 = vmatprep.subr.mxu0 0.0
    %2792 = vmatpush1.msra.mxu0 0.0
    %2793 = vmatprep.subr.mxu0 0.0
    %2794 = vmatpush1.msra.mxu0 0.0
    %2795 = vmatprep.subr.mxu0 0.0
    %2796 = vmatpush1.msra.mxu0 0.0
    %2797 = vmatprep.subr.mxu0 0.0
    %2798 = vmatpush1.msra.mxu0 0.0
    %2799 = vmatprep.subr.mxu0 0.0
    %2800 = vmatpush1.msra.mxu0 0.0
    %2801 = vmatprep.subr.mxu0 0.0
    %2802 = vmatpush1.msra.mxu0 0.0
    %2803 = vmatprep.subr.mxu0 0.0
    %2804 = vmatpush1.msra.mxu0 0.0
    %2805 = vmatprep.subr.mxu0 0.0
    %2806 = vmatpush1.msra.mxu0 0.0
    %2807 = vmatprep.subr.mxu0 0.0
    %2808 = vmatpush1.msra.mxu0 0.0
    %2809 = vmatprep.subr.mxu0 0.0
    %2810 = vmatpush1.msra.mxu0 0.0
    %2811 = vmatprep.subr.mxu0 0.0
    %2812 = vmatpush1.msra.mxu0 0.0
    %2813 = vmatprep.subr.mxu0 0.0
    %2814 = vmatpush1.msra.mxu0 0.0
    %2815 = vmatprep.subr.mxu0 0.0
    %2816 = vmatpush1.msra.mxu0 0.0
    %2817 = vmatprep.subr.mxu0 0.0
    %2818 = vmatpush1.msra.mxu0 0.0
    %2819 = vmatprep.subr.mxu0 0.0
    %2820 = vmatpush1.msra.mxu0 0.0
    %2821 = vmatprep.subr.mxu0 0.0
    %2822 = vmatpush1.msra.mxu0 0.0
    %2823 = vmatprep.subr.mxu0 0.0
    %2824 = vmatpush1.msra.mxu0 0.0
    %2825 = vmatprep.subr.mxu0 0.0
    %2826 = vmatpush1.msra.mxu0 0.0
    %2827 = vmatprep.subr.mxu0 0.0
    %2828 = vmatpush1.msra.mxu0 0.0
    %2829 = vmatprep.mubr.f32.mxu0 0.0
    %2830 = vmatmul.mubr.f32.gmra.mrb[0].mxu0 %v2763
    %v2831 = vpop.f32.mrb[0].mxu0
    %v2832 = vadd.f32 0.0, %v2831
    %v2833 = vpop.f32.mrb[0].mxu0
    %2834 = vdwg.mxu0
    %2835 = vxpose.xlu0.b32.start [1/16] %v66, 128
    %2836 = vxpose.xlu0.b32.cont [2/16] 0.0, 128
    %2837 = vxpose.xlu0.b32.cont [3/16] 0.0, 128
    %2838 = vxpose.xlu0.b32.cont [4/16] 0.0, 128
    %2839 = vxpose.xlu0.b32.cont [5/16] 0.0, 128
    %2840 = vxpose.xlu0.b32.cont [6/16] 0.0, 128
    %2841 = vxpose.xlu0.b32.cont [7/16] 0.0, 128
    %2842 = vxpose.xlu0.b32.cont [8/16] 0.0, 128
    %2843 = vxpose.xlu0.b32.cont [9/16] 0.0, 128
    %2844 = vxpose.xlu0.b32.cont [10/16] 0.0, 128
    %2845 = vxpose.xlu0.b32.cont [11/16] 0.0, 128
    %2846 = vxpose.xlu0.b32.cont [12/16] 0.0, 128
    %2847 = vxpose.xlu0.b32.cont [13/16] 0.0, 128
    %2848 = vxpose.xlu0.b32.cont [14/16] 0.0, 128
    %2849 = vxpose.xlu0.b32.cont [15/16] 0.0, 128
    %2850 = vxpose.xlu0.b32.end [16/16] 0.0, 128
    %v2851 = vpop.trf.xlu0
    %v2852 = vpop.trf.xlu0
    %v2853 = vpop.trf.xlu0
    %v2854 = vpop.trf.xlu0
    %v2855 = vpop.trf.xlu0
    %v2856 = vpop.trf.xlu0
    %v2857 = vpop.trf.xlu0
    %v2858 = vpop.trf.xlu0
    %v2859 = vpop.trf.xlu0
    %v2860 = vpop.trf.xlu0
    %v2861 = vpop.trf.xlu0
    %v2862 = vpop.trf.xlu0
    %v2863 = vpop.trf.xlu0
    %v2864 = vpop.trf.xlu0
    %v2865 = vpop.trf.xlu0
    %v2866 = vpop.trf.xlu0
    %v2868 = vsel %vm136, %v2851, 0
    %2870 = vmatprep.subr.mxu0 0.0
    %2871 = vmatpush1.msra.mxu0 %v98
    %2872 = vmatprep.subr.mxu0 0.0
    %2873 = vmatpush1.msra.mxu0 0.0
    %2874 = vmatprep.subr.mxu0 0.0
    %2875 = vmatpush1.msra.mxu0 0.0
    %2876 = vmatprep.subr.mxu0 0.0
    %2877 = vmatpush1.msra.mxu0 0.0
    %2878 = vmatprep.subr.mxu0 0.0
    %2879 = vmatpush1.msra.mxu0 0.0
    %2880 = vmatprep.subr.mxu0 0.0
    %2881 = vmatpush1.msra.mxu0 0.0
    %2882 = vmatprep.subr.mxu0 0.0
    %2883 = vmatpush1.msra.mxu0 0.0
    %2884 = vmatprep.subr.mxu0 0.0
    %2885 = vmatpush1.msra.mxu0 0.0
    %2886 = vmatprep.subr.mxu0 0.0
    %2887 = vmatpush1.msra.mxu0 0.0
    %2888 = vmatprep.subr.mxu0 0.0
    %2889 = vmatpush1.msra.mxu0 0.0
    %2890 = vmatprep.subr.mxu0 0.0
    %2891 = vmatpush1.msra.mxu0 0.0
    %2892 = vmatprep.subr.mxu0 0.0
    %2893 = vmatpush1.msra.mxu0 0.0
    %2894 = vmatprep.subr.mxu0 0.0
    %2895 = vmatpush1.msra.mxu0 0.0
    %2896 = vmatprep.subr.mxu0 0.0
    %2897 = vmatpush1.msra.mxu0 0.0
    %2898 = vmatprep.subr.mxu0 0.0
    %2899 = vmatpush1.msra.mxu0 0.0
    %2900 = vmatprep.subr.mxu0 0.0
    %2901 = vmatpush1.msra.mxu0 0.0
    %2902 = vmatprep.subr.mxu0 0.0
    %2903 = vmatpush1.msra.mxu0 0.0
    %2904 = vmatprep.subr.mxu0 0.0
    %2905 = vmatpush1.msra.mxu0 0.0
    %2906 = vmatprep.subr.mxu0 0.0
    %2907 = vmatpush1.msra.mxu0 0.0
    %2908 = vmatprep.subr.mxu0 0.0
    %2909 = vmatpush1.msra.mxu0 0.0
    %2910 = vmatprep.subr.mxu0 0.0
    %2911 = vmatpush1.msra.mxu0 0.0
    %2912 = vmatprep.subr.mxu0 0.0
    %2913 = vmatpush1.msra.mxu0 0.0
    %2914 = vmatprep.subr.mxu0 0.0
    %2915 = vmatpush1.msra.mxu0 0.0
    %2916 = vmatprep.subr.mxu0 0.0
    %2917 = vmatpush1.msra.mxu0 0.0
    %2918 = vmatprep.subr.mxu0 0.0
    %2919 = vmatpush1.msra.mxu0 0.0
    %2920 = vmatprep.subr.mxu0 0.0
    %2921 = vmatpush1.msra.mxu0 0.0
    %2922 = vmatprep.subr.mxu0 0.0
    %2923 = vmatpush1.msra.mxu0 0.0
    %2924 = vmatprep.subr.mxu0 0.0
    %2925 = vmatpush1.msra.mxu0 0.0
    %2926 = vmatprep.subr.mxu0 0.0
    %2927 = vmatpush1.msra.mxu0 0.0
    %2928 = vmatprep.subr.mxu0 0.0
    %2929 = vmatpush1.msra.mxu0 0.0
    %2930 = vmatprep.subr.mxu0 0.0
    %2931 = vmatpush1.msra.mxu0 0.0
    %2932 = vmatprep.subr.mxu0 0.0
    %2933 = vmatpush1.msra.mxu0 0.0
    %2934 = vmatprep.mubr.f32.mxu0 0.0
    %2935 = vmatmul.mubr.f32.gmra.mrb[0].mxu0 %v2868
    %v2936 = vpop.f32.mrb[0].mxu0
    %v2937 = vadd.f32 0.0, %v2936
    %v2938 = vpop.f32.mrb[0].mxu0
    %2939 = vdwg.mxu0
    %2940 = vxpose.xlu0.b32.start [1/16] %v67, 128
    %2941 = vxpose.xlu0.b32.cont [2/16] 0.0, 128
    %2942 = vxpose.xlu0.b32.cont [3/16] 0.0, 128
    %2943 = vxpose.xlu0.b32.cont [4/16] 0.0, 128
    %2944 = vxpose.xlu0.b32.cont [5/16] 0.0, 128
    %2945 = vxpose.xlu0.b32.cont [6/16] 0.0, 128
    %2946 = vxpose.xlu0.b32.cont [7/16] 0.0, 128
    %2947 = vxpose.xlu0.b32.cont [8/16] 0.0, 128
    %2948 = vxpose.xlu0.b32.cont [9/16] 0.0, 128
    %2949 = vxpose.xlu0.b32.cont [10/16] 0.0, 128
    %2950 = vxpose.xlu0.b32.cont [11/16] 0.0, 128
    %2951 = vxpose.xlu0.b32.cont [12/16] 0.0, 128
    %2952 = vxpose.xlu0.b32.cont [13/16] 0.0, 128
    %2953 = vxpose.xlu0.b32.cont [14/16] 0.0, 128
    %2954 = vxpose.xlu0.b32.cont [15/16] 0.0, 128
    %2955 = vxpose.xlu0.b32.end [16/16] 0.0, 128
    %v2956 = vpop.trf.xlu0
    %v2957 = vpop.trf.xlu0
    %v2958 = vpop.trf.xlu0
    %v2959 = vpop.trf.xlu0
    %v2960 = vpop.trf.xlu0
    %v2961 = vpop.trf.xlu0
    %v2962 = vpop.trf.xlu0
    %v2963 = vpop.trf.xlu0
    %v2964 = vpop.trf.xlu0
    %v2965 = vpop.trf.xlu0
    %v2966 = vpop.trf.xlu0
    %v2967 = vpop.trf.xlu0
    %v2968 = vpop.trf.xlu0
    %v2969 = vpop.trf.xlu0
    %v2970 = vpop.trf.xlu0
    %v2971 = vpop.trf.xlu0
    %v2973 = vsel %vm136, %v2956, 0
    %2975 = vmatprep.subr.mxu0 0.0
    %2976 = vmatpush1.msra.mxu0 %v99
    %2977 = vmatprep.subr.mxu0 0.0
    %2978 = vmatpush1.msra.mxu0 0.0
    %2979 = vmatprep.subr.mxu0 0.0
    %2980 = vmatpush1.msra.mxu0 0.0
    %2981 = vmatprep.subr.mxu0 0.0
    %2982 = vmatpush1.msra.mxu0 0.0
    %2983 = vmatprep.subr.mxu0 0.0
    %2984 = vmatpush1.msra.mxu0 0.0
    %2985 = vmatprep.subr.mxu0 0.0
    %2986 = vmatpush1.msra.mxu0 0.0
    %2987 = vmatprep.subr.mxu0 0.0
    %2988 = vmatpush1.msra.mxu0 0.0
    %2989 = vmatprep.subr.mxu0 0.0
    %2990 = vmatpush1.msra.mxu0 0.0
    %2991 = vmatprep.subr.mxu0 0.0
    %2992 = vmatpush1.msra.mxu0 0.0
    %2993 = vmatprep.subr.mxu0 0.0
    %2994 = vmatpush1.msra.mxu0 0.0
    %2995 = vmatprep.subr.mxu0 0.0
    %2996 = vmatpush1.msra.mxu0 0.0
    %2997 = vmatprep.subr.mxu0 0.0
    %2998 = vmatpush1.msra.mxu0 0.0
    %2999 = vmatprep.subr.mxu0 0.0
    %3000 = vmatpush1.msra.mxu0 0.0
    %3001 = vmatprep.subr.mxu0 0.0
    %3002 = vmatpush1.msra.mxu0 0.0
    %3003 = vmatprep.subr.mxu0 0.0
    %3004 = vmatpush1.msra.mxu0 0.0
    %3005 = vmatprep.subr.mxu0 0.0
    %3006 = vmatpush1.msra.mxu0 0.0
    %3007 = vmatprep.subr.mxu0 0.0
    %3008 = vmatpush1.msra.mxu0 0.0
    %3009 = vmatprep.subr.mxu0 0.0
    %3010 = vmatpush1.msra.mxu0 0.0
    %3011 = vmatprep.subr.mxu0 0.0
    %3012 = vmatpush1.msra.mxu0 0.0
    %3013 = vmatprep.subr.mxu0 0.0
    %3014 = vmatpush1.msra.mxu0 0.0
    %3015 = vmatprep.subr.mxu0 0.0
    %3016 = vmatpush1.msra.mxu0 0.0
    %3017 = vmatprep.subr.mxu0 0.0
    %3018 = vmatpush1.msra.mxu0 0.0
    %3019 = vmatprep.subr.mxu0 0.0
    %3020 = vmatpush1.msra.mxu0 0.0
    %3021 = vmatprep.subr.mxu0 0.0
    %3022 = vmatpush1.msra.mxu0 0.0
    %3023 = vmatprep.subr.mxu0 0.0
    %3024 = vmatpush1.msra.mxu0 0.0
    %3025 = vmatprep.subr.mxu0 0.0
    %3026 = vmatpush1.msra.mxu0 0.0
    %3027 = vmatprep.subr.mxu0 0.0
    %3028 = vmatpush1.msra.mxu0 0.0
    %3029 = vmatprep.subr.mxu0 0.0
    %3030 = vmatpush1.msra.mxu0 0.0
    %3031 = vmatprep.subr.mxu0 0.0
    %3032 = vmatpush1.msra.mxu0 0.0
    %3033 = vmatprep.subr.mxu0 0.0
    %3034 = vmatpush1.msra.mxu0 0.0
    %3035 = vmatprep.subr.mxu0 0.0
    %3036 = vmatpush1.msra.mxu0 0.0
    %3037 = vmatprep.subr.mxu0 0.0
    %3038 = vmatpush1.msra.mxu0 0.0
    %3039 = vmatprep.mubr.f32.mxu0 0.0
    %3040 = vmatmul.mubr.f32.gmra.mrb[0].mxu0 %v2973
    %v3041 = vpop.f32.mrb[0].mxu0
    %v3042 = vadd.f32 0.0, %v3041
    %v3043 = vpop.f32.mrb[0].mxu0
    %3044 = vdwg.mxu0
    %3045 = vxpose.xlu0.b32.start [1/16] %v68, 128
    %3046 = vxpose.xlu0.b32.cont [2/16] 0.0, 128
    %3047 = vxpose.xlu0.b32.cont [3/16] 0.0, 128
    %3048 = vxpose.xlu0.b32.cont [4/16] 0.0, 128
    %3049 = vxpose.xlu0.b32.cont [5/16] 0.0, 128
    %3050 = vxpose.xlu0.b32.cont [6/16] 0.0, 128
    %3051 = vxpose.xlu0.b32.cont [7/16] 0.0, 128
    %3052 = vxpose.xlu0.b32.cont [8/16] 0.0, 128
    %3053 = vxpose.xlu0.b32.cont [9/16] 0.0, 128
    %3054 = vxpose.xlu0.b32.cont [10/16] 0.0, 128
    %3055 = vxpose.xlu0.b32.cont [11/16] 0.0, 128
    %3056 = vxpose.xlu0.b32.cont [12/16] 0.0, 128
    %3057 = vxpose.xlu0.b32.cont [13/16] 0.0, 128
    %3058 = vxpose.xlu0.b32.cont [14/16] 0.0, 128
    %3059 = vxpose.xlu0.b32.cont [15/16] 0.0, 128
    %3060 = vxpose.xlu0.b32.end [16/16] 0.0, 128
    %v3061 = vpop.trf.xlu0
    %v3062 = vpop.trf.xlu0
    %v3063 = vpop.trf.xlu0
    %v3064 = vpop.trf.xlu0
    %v3065 = vpop.trf.xlu0
    %v3066 = vpop.trf.xlu0
    %v3067 = vpop.trf.xlu0
    %v3068 = vpop.trf.xlu0
    %v3069 = vpop.trf.xlu0
    %v3070 = vpop.trf.xlu0
    %v3071 = vpop.trf.xlu0
    %v3072 = vpop.trf.xlu0
    %v3073 = vpop.trf.xlu0
    %v3074 = vpop.trf.xlu0
    %v3075 = vpop.trf.xlu0
    %v3076 = vpop.trf.xlu0
    %v3078 = vsel %vm136, %v3061, 0
    %3080 = vmatprep.subr.mxu0 0.0
    %3081 = vmatpush1.msra.mxu0 %v100
    %3082 = vmatprep.subr.mxu0 0.0
    %3083 = vmatpush1.msra.mxu0 0.0
    %3084 = vmatprep.subr.mxu0 0.0
    %3085 = vmatpush1.msra.mxu0 0.0
    %3086 = vmatprep.subr.mxu0 0.0
    %3087 = vmatpush1.msra.mxu0 0.0
    %3088 = vmatprep.subr.mxu0 0.0
    %3089 = vmatpush1.msra.mxu0 0.0
    %3090 = vmatprep.subr.mxu0 0.0
    %3091 = vmatpush1.msra.mxu0 0.0
    %3092 = vmatprep.subr.mxu0 0.0
    %3093 = vmatpush1.msra.mxu0 0.0
    %3094 = vmatprep.subr.mxu0 0.0
    %3095 = vmatpush1.msra.mxu0 0.0
    %3096 = vmatprep.subr.mxu0 0.0
    %3097 = vmatpush1.msra.mxu0 0.0
    %3098 = vmatprep.subr.mxu0 0.0
    %3099 = vmatpush1.msra.mxu0 0.0
    %3100 = vmatprep.subr.mxu0 0.0
    %3101 = vmatpush1.msra.mxu0 0.0
    %3102 = vmatprep.subr.mxu0 0.0
    %3103 = vmatpush1.msra.mxu0 0.0
    %3104 = vmatprep.subr.mxu0 0.0
    %3105 = vmatpush1.msra.mxu0 0.0
    %3106 = vmatprep.subr.mxu0 0.0
    %3107 = vmatpush1.msra.mxu0 0.0
    %3108 = vmatprep.subr.mxu0 0.0
    %3109 = vmatpush1.msra.mxu0 0.0
    %3110 = vmatprep.subr.mxu0 0.0
    %3111 = vmatpush1.msra.mxu0 0.0
    %3112 = vmatprep.subr.mxu0 0.0
    %3113 = vmatpush1.msra.mxu0 0.0
    %3114 = vmatprep.subr.mxu0 0.0
    %3115 = vmatpush1.msra.mxu0 0.0
    %3116 = vmatprep.subr.mxu0 0.0
    %3117 = vmatpush1.msra.mxu0 0.0
    %3118 = vmatprep.subr.mxu0 0.0
    %3119 = vmatpush1.msra.mxu0 0.0
    %3120 = vmatprep.subr.mxu0 0.0
    %3121 = vmatpush1.msra.mxu0 0.0
    %3122 = vmatprep.subr.mxu0 0.0
    %3123 = vmatpush1.msra.mxu0 0.0
    %3124 = vmatprep.subr.mxu0 0.0
    %3125 = vmatpush1.msra.mxu0 0.0
    %3126 = vmatprep.subr.mxu0 0.0
    %3127 = vmatpush1.msra.mxu0 0.0
    %3128 = vmatprep.subr.mxu0 0.0
    %3129 = vmatpush1.msra.mxu0 0.0
    %3130 = vmatprep.subr.mxu0 0.0
    %3131 = vmatpush1.msra.mxu0 0.0
    %3132 = vmatprep.subr.mxu0 0.0
    %3133 = vmatpush1.msra.mxu0 0.0
    %3134 = vmatprep.subr.mxu0 0.0
    %3135 = vmatpush1.msra.mxu0 0.0
    %3136 = vmatprep.subr.mxu0 0.0
    %3137 = vmatpush1.msra.mxu0 0.0
    %3138 = vmatprep.subr.mxu0 0.0
    %3139 = vmatpush1.msra.mxu0 0.0
    %3140 = vmatprep.subr.mxu0 0.0
    %3141 = vmatpush1.msra.mxu0 0.0
    %3142 = vmatprep.subr.mxu0 0.0
    %3143 = vmatpush1.msra.mxu0 0.0
    %3144 = vmatprep.mubr.f32.mxu0 0.0
    %3145 = vmatmul.mubr.f32.gmra.mrb[0].mxu0 %v3078
    %v3146 = vpop.f32.mrb[0].mxu0
    %v3147 = vadd.f32 0.0, %v3146
    %v3148 = vpop.f32.mrb[0].mxu0
    %3149 = vdwg.mxu0
    %3150 = vxpose.xlu0.b32.start [1/16] %v69, 128
    %3151 = vxpose.xlu0.b32.cont [2/16] 0.0, 128
    %3152 = vxpose.xlu0.b32.cont [3/16] 0.0, 128
    %3153 = vxpose.xlu0.b32.cont [4/16] 0.0, 128
    %3154 = vxpose.xlu0.b32.cont [5/16] 0.0, 128
    %3155 = vxpose.xlu0.b32.cont [6/16] 0.0, 128
    %3156 = vxpose.xlu0.b32.cont [7/16] 0.0, 128
    %3157 = vxpose.xlu0.b32.cont [8/16] 0.0, 128
    %3158 = vxpose.xlu0.b32.cont [9/16] 0.0, 128
    %3159 = vxpose.xlu0.b32.cont [10/16] 0.0, 128
    %3160 = vxpose.xlu0.b32.cont [11/16] 0.0, 128
    %3161 = vxpose.xlu0.b32.cont [12/16] 0.0, 128
    %3162 = vxpose.xlu0.b32.cont [13/16] 0.0, 128
    %3163 = vxpose.xlu0.b32.cont [14/16] 0.0, 128
    %3164 = vxpose.xlu0.b32.cont [15/16] 0.0, 128
    %3165 = vxpose.xlu0.b32.end [16/16] 0.0, 128
    %v3166 = vpop.trf.xlu0
    %v3167 = vpop.trf.xlu0
    %v3168 = vpop.trf.xlu0
    %v3169 = vpop.trf.xlu0
    %v3170 = vpop.trf.xlu0
    %v3171 = vpop.trf.xlu0
    %v3172 = vpop.trf.xlu0
    %v3173 = vpop.trf.xlu0
    %v3174 = vpop.trf.xlu0
    %v3175 = vpop.trf.xlu0
    %v3176 = vpop.trf.xlu0
    %v3177 = vpop.trf.xlu0
    %v3178 = vpop.trf.xlu0
    %v3179 = vpop.trf.xlu0
    %v3180 = vpop.trf.xlu0
    %v3181 = vpop.trf.xlu0
    %v3183 = vsel %vm136, %v3166, 0
    %3185 = vmatprep.subr.mxu0 0.0
    %3186 = vmatpush1.msra.mxu0 %v101
    %3187 = vmatprep.subr.mxu0 0.0
    %3188 = vmatpush1.msra.mxu0 0.0
    %3189 = vmatprep.subr.mxu0 0.0
    %3190 = vmatpush1.msra.mxu0 0.0
    %3191 = vmatprep.subr.mxu0 0.0
    %3192 = vmatpush1.msra.mxu0 0.0
    %3193 = vmatprep.subr.mxu0 0.0
    %3194 = vmatpush1.msra.mxu0 0.0
    %3195 = vmatprep.subr.mxu0 0.0
    %3196 = vmatpush1.msra.mxu0 0.0
    %3197 = vmatprep.subr.mxu0 0.0
    %3198 = vmatpush1.msra.mxu0 0.0
    %3199 = vmatprep.subr.mxu0 0.0
    %3200 = vmatpush1.msra.mxu0 0.0
    %3201 = vmatprep.subr.mxu0 0.0
    %3202 = vmatpush1.msra.mxu0 0.0
    %3203 = vmatprep.subr.mxu0 0.0
    %3204 = vmatpush1.msra.mxu0 0.0
    %3205 = vmatprep.subr.mxu0 0.0
    %3206 = vmatpush1.msra.mxu0 0.0
    %3207 = vmatprep.subr.mxu0 0.0
    %3208 = vmatpush1.msra.mxu0 0.0
    %3209 = vmatprep.subr.mxu0 0.0
    %3210 = vmatpush1.msra.mxu0 0.0
    %3211 = vmatprep.subr.mxu0 0.0
    %3212 = vmatpush1.msra.mxu0 0.0
    %3213 = vmatprep.subr.mxu0 0.0
    %3214 = vmatpush1.msra.mxu0 0.0
    %3215 = vmatprep.subr.mxu0 0.0
    %3216 = vmatpush1.msra.mxu0 0.0
    %3217 = vmatprep.subr.mxu0 0.0
    %3218 = vmatpush1.msra.mxu0 0.0
    %3219 = vmatprep.subr.mxu0 0.0
    %3220 = vmatpush1.msra.mxu0 0.0
    %3221 = vmatprep.subr.mxu0 0.0
    %3222 = vmatpush1.msra.mxu0 0.0
    %3223 = vmatprep.subr.mxu0 0.0
    %3224 = vmatpush1.msra.mxu0 0.0
    %3225 = vmatprep.subr.mxu0 0.0
    %3226 = vmatpush1.msra.mxu0 0.0
    %3227 = vmatprep.subr.mxu0 0.0
    %3228 = vmatpush1.msra.mxu0 0.0
    %3229 = vmatprep.subr.mxu0 0.0
    %3230 = vmatpush1.msra.mxu0 0.0
    %3231 = vmatprep.subr.mxu0 0.0
    %3232 = vmatpush1.msra.mxu0 0.0
    %3233 = vmatprep.subr.mxu0 0.0
    %3234 = vmatpush1.msra.mxu0 0.0
    %3235 = vmatprep.subr.mxu0 0.0
    %3236 = vmatpush1.msra.mxu0 0.0
    %3237 = vmatprep.subr.mxu0 0.0
    %3238 = vmatpush1.msra.mxu0 0.0
    %3239 = vmatprep.subr.mxu0 0.0
    %3240 = vmatpush1.msra.mxu0 0.0
    %3241 = vmatprep.subr.mxu0 0.0
    %3242 = vmatpush1.msra.mxu0 0.0
    %3243 = vmatprep.subr.mxu0 0.0
    %3244 = vmatpush1.msra.mxu0 0.0
    %3245 = vmatprep.subr.mxu0 0.0
    %3246 = vmatpush1.msra.mxu0 0.0
    %3247 = vmatprep.subr.mxu0 0.0
    %3248 = vmatpush1.msra.mxu0 0.0
    %3249 = vmatprep.mubr.f32.mxu0 0.0
    %3250 = vmatmul.mubr.f32.gmra.mrb[0].mxu0 %v3183
    %v3251 = vpop.f32.mrb[0].mxu0
    %v3252 = vadd.f32 0.0, %v3251
    %v3253 = vpop.f32.mrb[0].mxu0
    %3254 = vdwg.mxu0
    %3255 = vxpose.xlu0.b32.start [1/16] %v70, 128
    %3256 = vxpose.xlu0.b32.cont [2/16] 0.0, 128
    %3257 = vxpose.xlu0.b32.cont [3/16] 0.0, 128
    %3258 = vxpose.xlu0.b32.cont [4/16] 0.0, 128
    %3259 = vxpose.xlu0.b32.cont [5/16] 0.0, 128
    %3260 = vxpose.xlu0.b32.cont [6/16] 0.0, 128
    %3261 = vxpose.xlu0.b32.cont [7/16] 0.0, 128
    %3262 = vxpose.xlu0.b32.cont [8/16] 0.0, 128
    %3263 = vxpose.xlu0.b32.cont [9/16] 0.0, 128
    %3264 = vxpose.xlu0.b32.cont [10/16] 0.0, 128
    %3265 = vxpose.xlu0.b32.cont [11/16] 0.0, 128
    %3266 = vxpose.xlu0.b32.cont [12/16] 0.0, 128
    %3267 = vxpose.xlu0.b32.cont [13/16] 0.0, 128
    %3268 = vxpose.xlu0.b32.cont [14/16] 0.0, 128
    %3269 = vxpose.xlu0.b32.cont [15/16] 0.0, 128
    %3270 = vxpose.xlu0.b32.end [16/16] 0.0, 128
    %v3271 = vpop.trf.xlu0
    %v3272 = vpop.trf.xlu0
    %v3273 = vpop.trf.xlu0
    %v3274 = vpop.trf.xlu0
    %v3275 = vpop.trf.xlu0
    %v3276 = vpop.trf.xlu0
    %v3277 = vpop.trf.xlu0
    %v3278 = vpop.trf.xlu0
    %v3279 = vpop.trf.xlu0
    %v3280 = vpop.trf.xlu0
    %v3281 = vpop.trf.xlu0
    %v3282 = vpop.trf.xlu0
    %v3283 = vpop.trf.xlu0
    %v3284 = vpop.trf.xlu0
    %v3285 = vpop.trf.xlu0
    %v3286 = vpop.trf.xlu0
    %v3288 = vsel %vm136, %v3271, 0
    %3290 = vmatprep.subr.mxu0 0.0
    %3291 = vmatpush1.msra.mxu0 %v102
    %3292 = vmatprep.subr.mxu0 0.0
    %3293 = vmatpush1.msra.mxu0 0.0
    %3294 = vmatprep.subr.mxu0 0.0
    %3295 = vmatpush1.msra.mxu0 0.0
    %3296 = vmatprep.subr.mxu0 0.0
    %3297 = vmatpush1.msra.mxu0 0.0
    %3298 = vmatprep.subr.mxu0 0.0
    %3299 = vmatpush1.msra.mxu0 0.0
    %3300 = vmatprep.subr.mxu0 0.0
    %3301 = vmatpush1.msra.mxu0 0.0
    %3302 = vmatprep.subr.mxu0 0.0
    %3303 = vmatpush1.msra.mxu0 0.0
    %3304 = vmatprep.subr.mxu0 0.0
    %3305 = vmatpush1.msra.mxu0 0.0
    %3306 = vmatprep.subr.mxu0 0.0
    %3307 = vmatpush1.msra.mxu0 0.0
    %3308 = vmatprep.subr.mxu0 0.0
    %3309 = vmatpush1.msra.mxu0 0.0
    %3310 = vmatprep.subr.mxu0 0.0
    %3311 = vmatpush1.msra.mxu0 0.0
    %3312 = vmatprep.subr.mxu0 0.0
    %3313 = vmatpush1.msra.mxu0 0.0
    %3314 = vmatprep.subr.mxu0 0.0
    %3315 = vmatpush1.msra.mxu0 0.0
    %3316 = vmatprep.subr.mxu0 0.0
    %3317 = vmatpush1.msra.mxu0 0.0
    %3318 = vmatprep.subr.mxu0 0.0
    %3319 = vmatpush1.msra.mxu0 0.0
    %3320 = vmatprep.subr.mxu0 0.0
    %3321 = vmatpush1.msra.mxu0 0.0
    %3322 = vmatprep.subr.mxu0 0.0
    %3323 = vmatpush1.msra.mxu0 0.0
    %3324 = vmatprep.subr.mxu0 0.0
    %3325 = vmatpush1.msra.mxu0 0.0
    %3326 = vmatprep.subr.mxu0 0.0
    %3327 = vmatpush1.msra.mxu0 0.0
    %3328 = vmatprep.subr.mxu0 0.0
    %3329 = vmatpush1.msra.mxu0 0.0
    %3330 = vmatprep.subr.mxu0 0.0
    %3331 = vmatpush1.msra.mxu0 0.0
    %3332 = vmatprep.subr.mxu0 0.0
    %3333 = vmatpush1.msra.mxu0 0.0
    %3334 = vmatprep.subr.mxu0 0.0
    %3335 = vmatpush1.msra.mxu0 0.0
    %3336 = vmatprep.subr.mxu0 0.0
    %3337 = vmatpush1.msra.mxu0 0.0
    %3338 = vmatprep.subr.mxu0 0.0
    %3339 = vmatpush1.msra.mxu0 0.0
    %3340 = vmatprep.subr.mxu0 0.0
    %3341 = vmatpush1.msra.mxu0 0.0
    %3342 = vmatprep.subr.mxu0 0.0
    %3343 = vmatpush1.msra.mxu0 0.0
    %3344 = vmatprep.subr.mxu0 0.0
    %3345 = vmatpush1.msra.mxu0 0.0
    %3346 = vmatprep.subr.mxu0 0.0
    %3347 = vmatpush1.msra.mxu0 0.0
    %3348 = vmatprep.subr.mxu0 0.0
    %3349 = vmatpush1.msra.mxu0 0.0
    %3350 = vmatprep.subr.mxu0 0.0
    %3351 = vmatpush1.msra.mxu0 0.0
    %3352 = vmatprep.subr.mxu0 0.0
    %3353 = vmatpush1.msra.mxu0 0.0
    %3354 = vmatprep.mubr.f32.mxu0 0.0
    %3355 = vmatmul.mubr.f32.gmra.mrb[0].mxu0 %v3288
    %v3356 = vpop.f32.mrb[0].mxu0
    %v3357 = vadd.f32 0.0, %v3356
    %v3358 = vpop.f32.mrb[0].mxu0
    %3359 = vdwg.mxu0
    %3360 = vxpose.xlu0.b32.start [1/16] %v71, 128
    %3361 = vxpose.xlu0.b32.cont [2/16] 0.0, 128
    %3362 = vxpose.xlu0.b32.cont [3/16] 0.0, 128
    %3363 = vxpose.xlu0.b32.cont [4/16] 0.0, 128
    %3364 = vxpose.xlu0.b32.cont [5/16] 0.0, 128
    %3365 = vxpose.xlu0.b32.cont [6/16] 0.0, 128
    %3366 = vxpose.xlu0.b32.cont [7/16] 0.0, 128
    %3367 = vxpose.xlu0.b32.cont [8/16] 0.0, 128
    %3368 = vxpose.xlu0.b32.cont [9/16] 0.0, 128
    %3369 = vxpose.xlu0.b32.cont [10/16] 0.0, 128
    %3370 = vxpose.xlu0.b32.cont [11/16] 0.0, 128
    %3371 = vxpose.xlu0.b32.cont [12/16] 0.0, 128
    %3372 = vxpose.xlu0.b32.cont [13/16] 0.0, 128
    %3373 = vxpose.xlu0.b32.cont [14/16] 0.0, 128
    %3374 = vxpose.xlu0.b32.cont [15/16] 0.0, 128
    %3375 = vxpose.xlu0.b32.end [16/16] 0.0, 128
    %v3376 = vpop.trf.xlu0
    %v3377 = vpop.trf.xlu0
    %v3378 = vpop.trf.xlu0
    %v3379 = vpop.trf.xlu0
    %v3380 = vpop.trf.xlu0
    %v3381 = vpop.trf.xlu0
    %v3382 = vpop.trf.xlu0
    %v3383 = vpop.trf.xlu0
    %v3384 = vpop.trf.xlu0
    %v3385 = vpop.trf.xlu0
    %v3386 = vpop.trf.xlu0
    %v3387 = vpop.trf.xlu0
    %v3388 = vpop.trf.xlu0
    %v3389 = vpop.trf.xlu0
    %v3390 = vpop.trf.xlu0
    %v3391 = vpop.trf.xlu0
    %v3393 = vsel %vm136, %v3376, 0
    %3395 = vmatprep.subr.mxu0 0.0
    %3396 = vmatpush1.msra.mxu0 %v103
    %3397 = vmatprep.subr.mxu0 0.0
    %3398 = vmatpush1.msra.mxu0 0.0
    %3399 = vmatprep.subr.mxu0 0.0
    %3400 = vmatpush1.msra.mxu0 0.0
    %3401 = vmatprep.subr.mxu0 0.0
    %3402 = vmatpush1.msra.mxu0 0.0
    %3403 = vmatprep.subr.mxu0 0.0
    %3404 = vmatpush1.msra.mxu0 0.0
    %3405 = vmatprep.subr.mxu0 0.0
    %3406 = vmatpush1.msra.mxu0 0.0
    %3407 = vmatprep.subr.mxu0 0.0
    %3408 = vmatpush1.msra.mxu0 0.0
    %3409 = vmatprep.subr.mxu0 0.0
    %3410 = vmatpush1.msra.mxu0 0.0
    %3411 = vmatprep.subr.mxu0 0.0
    %3412 = vmatpush1.msra.mxu0 0.0
    %3413 = vmatprep.subr.mxu0 0.0
    %3414 = vmatpush1.msra.mxu0 0.0
    %3415 = vmatprep.subr.mxu0 0.0
    %3416 = vmatpush1.msra.mxu0 0.0
    %3417 = vmatprep.subr.mxu0 0.0
    %3418 = vmatpush1.msra.mxu0 0.0
    %3419 = vmatprep.subr.mxu0 0.0
    %3420 = vmatpush1.msra.mxu0 0.0
    %3421 = vmatprep.subr.mxu0 0.0
    %3422 = vmatpush1.msra.mxu0 0.0
    %3423 = vmatprep.subr.mxu0 0.0
    %3424 = vmatpush1.msra.mxu0 0.0
    %3425 = vmatprep.subr.mxu0 0.0
    %3426 = vmatpush1.msra.mxu0 0.0
    %3427 = vmatprep.subr.mxu0 0.0
    %3428 = vmatpush1.msra.mxu0 0.0
    %3429 = vmatprep.subr.mxu0 0.0
    %3430 = vmatpush1.msra.mxu0 0.0
    %3431 = vmatprep.subr.mxu0 0.0
    %3432 = vmatpush1.msra.mxu0 0.0
    %3433 = vmatprep.subr.mxu0 0.0
    %3434 = vmatpush1.msra.mxu0 0.0
    %3435 = vmatprep.subr.mxu0 0.0
    %3436 = vmatpush1.msra.mxu0 0.0
    %3437 = vmatprep.subr.mxu0 0.0
    %3438 = vmatpush1.msra.mxu0 0.0
    %3439 = vmatprep.subr.mxu0 0.0
    %3440 = vmatpush1.msra.mxu0 0.0
    %3441 = vmatprep.subr.mxu0 0.0
    %3442 = vmatpush1.msra.mxu0 0.0
    %3443 = vmatprep.subr.mxu0 0.0
    %3444 = vmatpush1.msra.mxu0 0.0
    %3445 = vmatprep.subr.mxu0 0.0
    %3446 = vmatpush1.msra.mxu0 0.0
    %3447 = vmatprep.subr.mxu0 0.0
    %3448 = vmatpush1.msra.mxu0 0.0
    %3449 = vmatprep.subr.mxu0 0.0
    %3450 = vmatpush1.msra.mxu0 0.0
    %3451 = vmatprep.subr.mxu0 0.0
    %3452 = vmatpush1.msra.mxu0 0.0
    %3453 = vmatprep.subr.mxu0 0.0
    %3454 = vmatpush1.msra.mxu0 0.0
    %3455 = vmatprep.subr.mxu0 0.0
    %3456 = vmatpush1.msra.mxu0 0.0
    %3457 = vmatprep.subr.mxu0 0.0
    %3458 = vmatpush1.msra.mxu0 0.0
    %3459 = vmatprep.mubr.f32.mxu0 0.0
    %3460 = vmatmul.mubr.f32.gmra.mrb[0].mxu0 %v3393
    %v3461 = vpop.f32.mrb[0].mxu0
    %v3462 = vadd.f32 0.0, %v3461
    %v3463 = vpop.f32.mrb[0].mxu0
    %3464 = vdwg.mxu0
    %v3465 = vlaneseq
    %v3466 = vshrl.u32 %v3465, 7
    %v3467 = vadd.s32 %v3466, 8
    %v3468 = vadd.s32 %v3466, 16
    %v3469 = vadd.s32 %v3466, 24
    %v3470 = vadd.s32 %v3466, 32
    %v3471 = vadd.s32 %v3466, 40
    %v3472 = vadd.s32 %v3466, 48
    %v3473 = vadd.s32 %v3466, 56
    %v3474 = vlaneseq
    %v3475 = vand.u32 %v3474, 127
    %v3476 = vmul.u32 %v3475, 16
    %vm3477 = vcmp.ge.s32.totalorder %v3466, %v3476
    %vm3478 = vcmp.ge.s32.totalorder %v3467, %v3476
    %vm3479 = vcmp.ge.s32.totalorder %v3468, %v3476
    %vm3480 = vcmp.ge.s32.totalorder %v3469, %v3476
    %vm3481 = vcmp.ge.s32.totalorder %v3470, %v3476
    %vm3482 = vcmp.ge.s32.totalorder %v3471, %v3476
    %vm3483 = vcmp.ge.s32.totalorder %v3472, %v3476
    %vm3484 = vcmp.ge.s32.totalorder %v3473, %v3476
    %v3485 = vadd.s32 %v3475, 1
    %v3486 = vmul.u32 %v3485, 16
    %vm3487 = vcmp.lt.s32.totalorder %v3466, %v3486
    %vm3488 = vcmp.lt.s32.totalorder %v3467, %v3486
    %vm3489 = vcmp.lt.s32.totalorder %v3468, %v3486
    %vm3490 = vcmp.lt.s32.totalorder %v3469, %v3486
    %vm3491 = vcmp.lt.s32.totalorder %v3470, %v3486
    %vm3492 = vcmp.lt.s32.totalorder %v3471, %v3486
    %vm3493 = vcmp.lt.s32.totalorder %v3472, %v3486
    %vm3494 = vcmp.lt.s32.totalorder %v3473, %v3486
    %vm3495 = vmand %vm3477, %vm3487
    %vm3496 = vmand %vm3478, %vm3488
    %vm3497 = vmand %vm3479, %vm3489
    %vm3498 = vmand %vm3480, %vm3490
    %vm3499 = vmand %vm3481, %vm3491
    %vm3500 = vmand %vm3482, %vm3492
    %vm3501 = vmand %vm3483, %vm3493
    %vm3502 = vmand %vm3484, %vm3494
    %v3503 = vsel %vm3495, 1, 0
    %v3504 = vsel %vm3496, 1, 0
    %v3505 = vsel %vm3497, 1, 0
    %v3506 = vsel %vm3498, 1, 0
    %v3507 = vsel %vm3499, 1, 0
    %v3508 = vsel %vm3500, 1, 0
    %v3509 = vsel %vm3501, 1, 0
    %v3510 = vsel %vm3502, 1, 0
    %v3511 = vcvt.s32.f32 %v3503
    %v3512 = vcvt.s32.f32 %v3504
    %v3513 = vcvt.s32.f32 %v3505
    %v3514 = vcvt.s32.f32 %v3506
    %v3515 = vcvt.s32.f32 %v3507
    %v3516 = vcvt.s32.f32 %v3508
    %v3517 = vcvt.s32.f32 %v3509
    %v3518 = vcvt.s32.f32 %v3510
    %v3519 = vmul.u32 %v3466, 16
    %vm3520 = vcmp.ge.s32.totalorder %v3475, %v3519
    %v3521 = vadd.s32 %v3466, 1
    %v3522 = vmul.u32 %v3521, 16
    %vm3523 = vcmp.lt.s32.totalorder %v3475, %v3522
    %vm3524 = vmand %vm3520, %vm3523
    %v3525 = vsel %vm3524, 1, 0
    %v3526 = vcvt.s32.f32 %v3525
    %vm3527 = vcmask 523264
    %v3528 = vsel %vm3527, %v207, 0.0
    %v3529 = vsel %vm3527, %v312, 0.0
    %v3530 = vadd.f32 %v3528, %v3529
    %v3531 = vsel %vm3527, %v417, 0.0
    %v3532 = vadd.f32 %v3530, %v3531
    %v3533 = vsel %vm3527, %v522, 0.0
    %v3534 = vadd.f32 %v3532, %v3533
    %v3535 = vsel %vm3527, %v627, 0.0
    %v3536 = vadd.f32 %v3534, %v3535
    %v3537 = vsel %vm3527, %v732, 0.0
    %v3538 = vadd.f32 %v3536, %v3537
    %v3539 = vsel %vm3527, %v837, 0.0
    %v3540 = vadd.f32 %v3538, %v3539
    %v3541 = vsel %vm3527, %v942, 0.0
    %v3542 = vadd.f32 %v3540, %v3541
    %v3543 = vsel %vm3527, %v1047, 0.0
    %v3544 = vadd.f32 %v3542, %v3543
    %v3545 = vsel %vm3527, %v1152, 0.0
    %v3546 = vadd.f32 %v3544, %v3545
    %v3547 = vsel %vm3527, %v1257, 0.0
    %v3548 = vadd.f32 %v3546, %v3547
    %v3549 = vsel %vm3527, %v1362, 0.0
    %v3550 = vadd.f32 %v3548, %v3549
    %v3551 = vsel %vm3527, %v1467, 0.0
    %v3552 = vadd.f32 %v3550, %v3551
    %v3553 = vsel %vm3527, %v1572, 0.0
    %v3554 = vadd.f32 %v3552, %v3553
    %v3555 = vsel %vm3527, %v1677, 0.0
    %v3556 = vadd.f32 %v3554, %v3555
    %v3557 = vsel %vm3527, %v1782, 0.0
    %v3558 = vadd.f32 %v3556, %v3557
    %v3559 = vsel %vm3527, %v1887, 0.0
    %v3560 = vadd.f32 %v3558, %v3559
    %v3561 = vsel %vm3527, %v1992, 0.0
    %v3562 = vadd.f32 %v3560, %v3561
    %v3563 = vsel %vm3527, %v2097, 0.0
    %v3564 = vadd.f32 %v3562, %v3563
    %v3565 = vsel %vm3527, %v2202, 0.0
    %v3566 = vadd.f32 %v3564, %v3565
    %v3567 = vsel %vm3527, %v2307, 0.0
    %v3568 = vadd.f32 %v3566, %v3567
    %v3569 = vsel %vm3527, %v2412, 0.0
    %v3570 = vadd.f32 %v3568, %v3569
    %v3571 = vsel %vm3527, %v2517, 0.0
    %v3572 = vadd.f32 %v3570, %v3571
    %v3573 = vsel %vm3527, %v2622, 0.0
    %v3574 = vadd.f32 %v3572, %v3573
    %v3575 = vsel %vm3527, %v2727, 0.0
    %v3576 = vadd.f32 %v3574, %v3575
    %v3577 = vsel %vm3527, %v2832, 0.0
    %v3578 = vadd.f32 %v3576, %v3577
    %v3579 = vsel %vm3527, %v2937, 0.0
    %v3580 = vadd.f32 %v3578, %v3579
    %v3581 = vsel %vm3527, %v3042, 0.0
    %v3582 = vadd.f32 %v3580, %v3581
    %v3583 = vsel %vm3527, %v3147, 0.0
    %v3584 = vadd.f32 %v3582, %v3583
    %v3585 = vsel %vm3527, %v3252, 0.0
    %v3586 = vadd.f32 %v3584, %v3585
    %v3587 = vsel %vm3527, %v3357, 0.0
    %v3588 = vadd.f32 %v3586, %v3587
    %v3589 = vsel %vm3527, %v3462, 0.0
    %v3590 = vadd.f32 %v3588, %v3589
    %v3591 = vadd.f32 %v3590, 0.0
    %v3592 = vmul.f32 %v3591, 0.03125
    %v3593 = vmul.f32 %v3592, %v3592
    %v3595 = vsel %vm3527, %v3593, 0
    %3597 = vmatprep.subr.mxu0 0.0
    %3598 = vmatpush1.msra.mxu0 %v3511
    %3599 = vmatprep.subr.mxu0 0.0
    %3600 = vmatpush1.msra.mxu0 %v3512
    %3601 = vmatprep.subr.mxu0 0.0
    %3602 = vmatpush1.msra.mxu0 %v3513
    %3603 = vmatprep.subr.mxu0 0.0
    %3604 = vmatpush1.msra.mxu0 %v3514
    %3605 = vmatprep.subr.mxu0 0.0
    %3606 = vmatpush1.msra.mxu0 %v3515
    %3607 = vmatprep.subr.mxu0 0.0
    %3608 = vmatpush1.msra.mxu0 %v3516
    %3609 = vmatprep.subr.mxu0 0.0
    %3610 = vmatpush1.msra.mxu0 %v3517
    %3611 = vmatprep.subr.mxu0 0.0
    %3612 = vmatpush1.msra.mxu0 %v3518
    %3613 = vmatprep.subr.mxu0 0.0
    %3614 = vmatpush1.msra.mxu0 0.0
    %3615 = vmatprep.subr.mxu0 0.0
    %3616 = vmatpush1.msra.mxu0 0.0
    %3617 = vmatprep.subr.mxu0 0.0
    %3618 = vmatpush1.msra.mxu0 0.0
    %3619 = vmatprep.subr.mxu0 0.0
    %3620 = vmatpush1.msra.mxu0 0.0
    %3621 = vmatprep.subr.mxu0 0.0
    %3622 = vmatpush1.msra.mxu0 0.0
    %3623 = vmatprep.subr.mxu0 0.0
    %3624 = vmatpush1.msra.mxu0 0.0
    %3625 = vmatprep.subr.mxu0 0.0
    %3626 = vmatpush1.msra.mxu0 0.0
    %3627 = vmatprep.subr.mxu0 0.0
    %3628 = vmatpush1.msra.mxu0 0.0
    %3629 = vmatprep.subr.mxu0 0.0
    %3630 = vmatpush1.msra.mxu0 0.0
    %3631 = vmatprep.subr.mxu0 0.0
    %3632 = vmatpush1.msra.mxu0 0.0
    %3633 = vmatprep.subr.mxu0 0.0
    %3634 = vmatpush1.msra.mxu0 0.0
    %3635 = vmatprep.subr.mxu0 0.0
    %3636 = vmatpush1.msra.mxu0 0.0
    %3637 = vmatprep.subr.mxu0 0.0
    %3638 = vmatpush1.msra.mxu0 0.0
    %3639 = vmatprep.subr.mxu0 0.0
    %3640 = vmatpush1.msra.mxu0 0.0
    %3641 = vmatprep.subr.mxu0 0.0
    %3642 = vmatpush1.msra.mxu0 0.0
    %3643 = vmatprep.subr.mxu0 0.0
    %3644 = vmatpush1.msra.mxu0 0.0
    %3645 = vmatprep.subr.mxu0 0.0
    %3646 = vmatpush1.msra.mxu0 0.0
    %3647 = vmatprep.subr.mxu0 0.0
    %3648 = vmatpush1.msra.mxu0 0.0
    %3649 = vmatprep.subr.mxu0 0.0
    %3650 = vmatpush1.msra.mxu0 0.0
    %3651 = vmatprep.subr.mxu0 0.0
    %3652 = vmatpush1.msra.mxu0 0.0
    %3653 = vmatprep.subr.mxu0 0.0
    %3654 = vmatpush1.msra.mxu0 0.0
    %3655 = vmatprep.subr.mxu0 0.0
    %3656 = vmatpush1.msra.mxu0 0.0
    %3657 = vmatprep.subr.mxu0 0.0
    %3658 = vmatpush1.msra.mxu0 0.0
    %3659 = vmatprep.subr.mxu0 0.0
    %3660 = vmatpush1.msra.mxu0 0.0
    %3661 = vmatprep.mubr.f32.mxu0 0.0
    %3662 = vmatmul.mubr.f32.gmra.mrb[0].mxu0 %v3595
    %v3663 = vpop.f32.mrb[0].mxu0
    %v3664 = vadd.f32 0.0, %v3663
    %v3665 = vpop.f32.mrb[0].mxu0
    %3666 = vdwg.mxu0
    %v3667 = vadd.f32 %v3664, 1e-12
    %v3668 = vrsqrt.pop %v3667
    %v3669 = vmul.f32 %v3667, %v3668
    %vm3670 = vcmp.eq.f32.partialorder %v3667, inf
    %v3671 = vsel %vm3670, %v3667, %v3669
    %vm3672 = vcmp.eq.f32.partialorder %v3667, 0.0
    %v3673 = vand.u32 %v3667, 2147483648
    %v3674 = vsel %vm3672, %v3673, %v3671
    %v3675 = vadd.f32 %v3664, 1.0
    %v3676 = vrcp.pop %v3675
    %v3677 = vmul.f32 %v3674, %v3676
    %vm3678 = vcmask 31744
    %v3680 = vsel %vm3678, %v3677, 0
    %vm3682 = vcmask 1043456
    %v3684 = vsel %vm3682, %v3526, 0
    %3686 = vmatprep.subr.mxu0 0.0
    %3687 = vmatpush1.msra.mxu0 %v3684
    %3688 = vmatprep.subr.mxu0 0.0
    %3689 = vmatpush1.msra.mxu0 0.0
    %3690 = vmatprep.subr.mxu0 0.0
    %3691 = vmatpush1.msra.mxu0 0.0
    %3692 = vmatprep.subr.mxu0 0.0
    %3693 = vmatpush1.msra.mxu0 0.0
    %3694 = vmatprep.subr.mxu0 0.0
    %3695 = vmatpush1.msra.mxu0 0.0
    %3696 = vmatprep.subr.mxu0 0.0
    %3697 = vmatpush1.msra.mxu0 0.0
    %3698 = vmatprep.subr.mxu0 0.0
    %3699 = vmatpush1.msra.mxu0 0.0
    %3700 = vmatprep.subr.mxu0 0.0
    %3701 = vmatpush1.msra.mxu0 0.0
    %3702 = vmatprep.subr.mxu0 0.0
    %3703 = vmatpush1.msra.mxu0 0.0
    %3704 = vmatprep.subr.mxu0 0.0
    %3705 = vmatpush1.msra.mxu0 0.0
    %3706 = vmatprep.subr.mxu0 0.0
    %3707 = vmatpush1.msra.mxu0 0.0
    %3708 = vmatprep.subr.mxu0 0.0
    %3709 = vmatpush1.msra.mxu0 0.0
    %3710 = vmatprep.subr.mxu0 0.0
    %3711 = vmatpush1.msra.mxu0 0.0
    %3712 = vmatprep.subr.mxu0 0.0
    %3713 = vmatpush1.msra.mxu0 0.0
    %3714 = vmatprep.subr.mxu0 0.0
    %3715 = vmatpush1.msra.mxu0 0.0
    %3716 = vmatprep.subr.mxu0 0.0
    %3717 = vmatpush1.msra.mxu0 0.0
    %3718 = vmatprep.subr.mxu0 0.0
    %3719 = vmatpush1.msra.mxu0 0.0
    %3720 = vmatprep.subr.mxu0 0.0
    %3721 = vmatpush1.msra.mxu0 0.0
    %3722 = vmatprep.subr.mxu0 0.0
    %3723 = vmatpush1.msra.mxu0 0.0
    %3724 = vmatprep.subr.mxu0 0.0
    %3725 = vmatpush1.msra.mxu0 0.0
    %3726 = vmatprep.subr.mxu0 0.0
    %3727 = vmatpush1.msra.mxu0 0.0
    %3728 = vmatprep.subr.mxu0 0.0
    %3729 = vmatpush1.msra.mxu0 0.0
    %3730 = vmatprep.subr.mxu0 0.0
    %3731 = vmatpush1.msra.mxu0 0.0
    %3732 = vmatprep.subr.mxu0 0.0
    %3733 = vmatpush1.msra.mxu0 0.0
    %3734 = vmatprep.subr.mxu0 0.0
    %3735 = vmatpush1.msra.mxu0 0.0
    %3736 = vmatprep.subr.mxu0 0.0
    %3737 = vmatpush1.msra.mxu0 0.0
    %3738 = vmatprep.subr.mxu0 0.0
    %3739 = vmatpush1.msra.mxu0 0.0
    %3740 = vmatprep.subr.mxu0 0.0
    %3741 = vmatpush1.msra.mxu0 0.0
    %3742 = vmatprep.subr.mxu0 0.0
    %3743 = vmatpush1.msra.mxu0 0.0
    %3744 = vmatprep.subr.mxu0 0.0
    %3745 = vmatpush1.msra.mxu0 0.0
    %3746 = vmatprep.subr.mxu0 0.0
    %3747 = vmatpush1.msra.mxu0 0.0
    %3748 = vmatprep.subr.mxu0 0.0
    %3749 = vmatpush1.msra.mxu0 0.0
    %3750 = vmatprep.mubr.f32.mxu0 0.0
    %3751 = vmatmul.mubr.f32.gmra.mrb[0].mxu0 %v3680
    %v3752 = vpop.f32.mrb[0].mxu0
    %v3753 = vadd.f32 0.0, %v3752
    %v3754 = vpop.f32.mrb[0].mxu0
    %3755 = vdwg.mxu0
    %v3756 = vmul.f32 %v3753, %v3592
    %v3757 = vadd.f32 %v3756, 0.0
    %v3758 = vmul.f32 %v207, %v3757
    %v3759 = vmul.f32 %v312, %v3757
    %v3760 = vmul.f32 %v417, %v3757
    %v3761 = vmul.f32 %v522, %v3757
    %v3762 = vmul.f32 %v627, %v3757
    %v3763 = vmul.f32 %v732, %v3757
    %v3764 = vmul.f32 %v837, %v3757
    %v3765 = vmul.f32 %v942, %v3757
    %v3766 = vmul.f32 %v1047, %v3757
    %v3767 = vmul.f32 %v1152, %v3757
    %v3768 = vmul.f32 %v1257, %v3757
    %v3769 = vmul.f32 %v1362, %v3757
    %v3770 = vmul.f32 %v1467, %v3757
    %v3771 = vmul.f32 %v1572, %v3757
    %v3772 = vmul.f32 %v1677, %v3757
    %v3773 = vmul.f32 %v1782, %v3757
    %v3774 = vmul.f32 %v1887, %v3757
    %v3775 = vmul.f32 %v1992, %v3757
    %v3776 = vmul.f32 %v2097, %v3757
    %v3777 = vmul.f32 %v2202, %v3757
    %v3778 = vmul.f32 %v2307, %v3757
    %v3779 = vmul.f32 %v2412, %v3757
    %v3780 = vmul.f32 %v2517, %v3757
    %v3781 = vmul.f32 %v2622, %v3757
    %v3782 = vmul.f32 %v2727, %v3757
    %v3783 = vmul.f32 %v2832, %v3757
    %v3784 = vmul.f32 %v2937, %v3757
    %v3785 = vmul.f32 %v3042, %v3757
    %v3786 = vmul.f32 %v3147, %v3757
    %v3787 = vmul.f32 %v3252, %v3757
    %v3788 = vmul.f32 %v3357, %v3757
    %v3789 = vmul.f32 %v3462, %v3757
    %v3791 = vsel %vm3527, %v3758, 0
    %v3794 = vsel %vm3527, %v3759, 0
    %v3797 = vsel %vm3527, %v3760, 0
    %v3800 = vsel %vm3527, %v3761, 0
    %v3803 = vsel %vm3527, %v3762, 0
    %v3806 = vsel %vm3527, %v3763, 0
    %v3809 = vsel %vm3527, %v3764, 0
    %v3812 = vsel %vm3527, %v3765, 0
    %v3815 = vsel %vm3527, %v3766, 0
    %v3818 = vsel %vm3527, %v3767, 0
    %v3821 = vsel %vm3527, %v3768, 0
    %v3824 = vsel %vm3527, %v3769, 0
    %v3827 = vsel %vm3527, %v3770, 0
    %v3830 = vsel %vm3527, %v3771, 0
    %v3833 = vsel %vm3527, %v3772, 0
    %v3836 = vsel %vm3527, %v3773, 0
    %v3839 = vsel %vm3527, %v3774, 0
    %v3842 = vsel %vm3527, %v3775, 0
    %v3845 = vsel %vm3527, %v3776, 0
    %v3848 = vsel %vm3527, %v3777, 0
    %v3851 = vsel %vm3527, %v3778, 0
    %v3854 = vsel %vm3527, %v3779, 0
    %v3857 = vsel %vm3527, %v3780, 0
    %v3860 = vsel %vm3527, %v3781, 0
    %v3863 = vsel %vm3527, %v3782, 0
    %v3866 = vsel %vm3527, %v3783, 0
    %v3869 = vsel %vm3527, %v3784, 0
    %v3872 = vsel %vm3527, %v3785, 0
    %v3875 = vsel %vm3527, %v3786, 0
    %v3878 = vsel %vm3527, %v3787, 0
    %v3881 = vsel %vm3527, %v3788, 0
    %v3884 = vsel %vm3527, %v3789, 0
    %3886 = vmatprep.subr.mxu0 0.0
    %3887 = vmatpush1.msra.mxu0 %v3511
    %3888 = vmatprep.subr.mxu0 0.0
    %3889 = vmatpush1.msra.mxu0 %v3512
    %3890 = vmatprep.subr.mxu0 0.0
    %3891 = vmatpush1.msra.mxu0 %v3513
    %3892 = vmatprep.subr.mxu0 0.0
    %3893 = vmatpush1.msra.mxu0 %v3514
    %3894 = vmatprep.subr.mxu0 0.0
    %3895 = vmatpush1.msra.mxu0 %v3515
    %3896 = vmatprep.subr.mxu0 0.0
    %3897 = vmatpush1.msra.mxu0 %v3516
    %3898 = vmatprep.subr.mxu0 0.0
    %3899 = vmatpush1.msra.mxu0 %v3517
    %3900 = vmatprep.subr.mxu0 0.0
    %3901 = vmatpush1.msra.mxu0 %v3518
    %3902 = vmatprep.subr.mxu0 0.0
    %3903 = vmatpush1.msra.mxu0 0.0
    %3904 = vmatprep.subr.mxu0 0.0
    %3905 = vmatpush1.msra.mxu0 0.0
    %3906 = vmatprep.subr.mxu0 0.0
    %3907 = vmatpush1.msra.mxu0 0.0
    %3908 = vmatprep.subr.mxu0 0.0
    %3909 = vmatpush1.msra.mxu0 0.0
    %3910 = vmatprep.subr.mxu0 0.0
    %3911 = vmatpush1.msra.mxu0 0.0
    %3912 = vmatprep.subr.mxu0 0.0
    %3913 = vmatpush1.msra.mxu0 0.0
    %3914 = vmatprep.subr.mxu0 0.0
    %3915 = vmatpush1.msra.mxu0 0.0
    %3916 = vmatprep.subr.mxu0 0.0
    %3917 = vmatpush1.msra.mxu0 0.0
    %3918 = vmatprep.subr.mxu0 0.0
    %3919 = vmatpush1.msra.mxu0 0.0
    %3920 = vmatprep.subr.mxu0 0.0
    %3921 = vmatpush1.msra.mxu0 0.0
    %3922 = vmatprep.subr.mxu0 0.0
    %3923 = vmatpush1.msra.mxu0 0.0
    %3924 = vmatprep.subr.mxu0 0.0
    %3925 = vmatpush1.msra.mxu0 0.0
    %3926 = vmatprep.subr.mxu0 0.0
    %3927 = vmatpush1.msra.mxu0 0.0
    %3928 = vmatprep.subr.mxu0 0.0
    %3929 = vmatpush1.msra.mxu0 0.0
    %3930 = vmatprep.subr.mxu0 0.0
    %3931 = vmatpush1.msra.mxu0 0.0
    %3932 = vmatprep.subr.mxu0 0.0
    %3933 = vmatpush1.msra.mxu0 0.0
    %3934 = vmatprep.subr.mxu0 0.0
    %3935 = vmatpush1.msra.mxu0 0.0
    %3936 = vmatprep.subr.mxu0 0.0
    %3937 = vmatpush1.msra.mxu0 0.0
    %3938 = vmatprep.subr.mxu0 0.0
    %3939 = vmatpush1.msra.mxu0 0.0
    %3940 = vmatprep.subr.mxu0 0.0
    %3941 = vmatpush1.msra.mxu0 0.0
    %3942 = vmatprep.subr.mxu0 0.0
    %3943 = vmatpush1.msra.mxu0 0.0
    %3944 = vmatprep.subr.mxu0 0.0
    %3945 = vmatpush1.msra.mxu0 0.0
    %3946 = vmatprep.subr.mxu0 0.0
    %3947 = vmatpush1.msra.mxu0 0.0
    %3948 = vmatprep.subr.mxu0 0.0
    %3949 = vmatpush1.msra.mxu0 0.0
    %3950 = vmatprep.mubr.f32.mxu0 0.0
    %3951 = vmatmul.mubr.f32.gmra.mrb[0].mxu0 %v3791
    %v3952 = vpop.f32.mrb[0].mxu0
    %v3953 = vadd.f32 0.0, %v3952
    %v3954 = vpop.f32.mrb[0].mxu0
    %3955 = vmatprep.mubr.f32.mxu0 0.0
    %3956 = vmatmul.mubr.f32.gmra.mrb[0].mxu0 %v3794
    %v3957 = vpop.f32.mrb[0].mxu0
    %v3958 = vadd.f32 0.0, %v3957
    %v3959 = vpop.f32.mrb[0].mxu0
    %3960 = vmatprep.mubr.f32.mxu0 0.0
    %3961 = vmatmul.mubr.f32.gmra.mrb[0].mxu0 %v3797
    %v3962 = vpop.f32.mrb[0].mxu0
    %v3963 = vadd.f32 0.0, %v3962
    %v3964 = vpop.f32.mrb[0].mxu0
    %3965 = vmatprep.mubr.f32.mxu0 0.0
    %3966 = vmatmul.mubr.f32.gmra.mrb[0].mxu0 %v3800
    %v3967 = vpop.f32.mrb[0].mxu0
    %v3968 = vadd.f32 0.0, %v3967
    %v3969 = vpop.f32.mrb[0].mxu0
    %3970 = vmatprep.mubr.f32.mxu0 0.0
    %3971 = vmatmul.mubr.f32.gmra.mrb[0].mxu0 %v3803
    %v3972 = vpop.f32.mrb[0].mxu0
    %v3973 = vadd.f32 0.0, %v3972
    %v3974 = vpop.f32.mrb[0].mxu0
    %3975 = vmatprep.mubr.f32.mxu0 0.0
    %3976 = vmatmul.mubr.f32.gmra.mrb[0].mxu0 %v3806
    %v3977 = vpop.f32.mrb[0].mxu0
    %v3978 = vadd.f32 0.0, %v3977
    %v3979 = vpop.f32.mrb[0].mxu0
    %3980 = vmatprep.mubr.f32.mxu0 0.0
    %3981 = vmatmul.mubr.f32.gmra.mrb[0].mxu0 %v3809
    %v3982 = vpop.f32.mrb[0].mxu0
    %v3983 = vadd.f32 0.0, %v3982
    %v3984 = vpop.f32.mrb[0].mxu0
    %3985 = vmatprep.mubr.f32.mxu0 0.0
    %3986 = vmatmul.mubr.f32.gmra.mrb[0].mxu0 %v3812
    %v3987 = vpop.f32.mrb[0].mxu0
    %v3988 = vadd.f32 0.0, %v3987
    %v3989 = vpop.f32.mrb[0].mxu0
    %3990 = vmatprep.mubr.f32.mxu0 0.0
    %3991 = vmatmul.mubr.f32.gmra.mrb[0].mxu0 %v3815
    %v3992 = vpop.f32.mrb[0].mxu0
    %v3993 = vadd.f32 0.0, %v3992
    %v3994 = vpop.f32.mrb[0].mxu0
    %3995 = vmatprep.mubr.f32.mxu0 0.0
    %3996 = vmatmul.mubr.f32.gmra.mrb[0].mxu0 %v3818
    %v3997 = vpop.f32.mrb[0].mxu0
    %v3998 = vadd.f32 0.0, %v3997
    %v3999 = vpop.f32.mrb[0].mxu0
    %4000 = vmatprep.mubr.f32.mxu0 0.0
    %4001 = vmatmul.mubr.f32.gmra.mrb[0].mxu0 %v3821
    %v4002 = vpop.f32.mrb[0].mxu0
    %v4003 = vadd.f32 0.0, %v4002
    %v4004 = vpop.f32.mrb[0].mxu0
    %4005 = vmatprep.mubr.f32.mxu0 0.0
    %4006 = vmatmul.mubr.f32.gmra.mrb[0].mxu0 %v3824
    %v4007 = vpop.f32.mrb[0].mxu0
    %v4008 = vadd.f32 0.0, %v4007
    %v4009 = vpop.f32.mrb[0].mxu0
    %4010 = vmatprep.mubr.f32.mxu0 0.0
    %4011 = vmatmul.mubr.f32.gmra.mrb[0].mxu0 %v3827
    %v4012 = vpop.f32.mrb[0].mxu0
    %v4013 = vadd.f32 0.0, %v4012
    %v4014 = vpop.f32.mrb[0].mxu0
    %4015 = vmatprep.mubr.f32.mxu0 0.0
    %4016 = vmatmul.mubr.f32.gmra.mrb[0].mxu0 %v3830
    %v4017 = vpop.f32.mrb[0].mxu0
    %v4018 = vadd.f32 0.0, %v4017
    %v4019 = vpop.f32.mrb[0].mxu0
    %4020 = vmatprep.mubr.f32.mxu0 0.0
    %4021 = vmatmul.mubr.f32.gmra.mrb[0].mxu0 %v3833
    %v4022 = vpop.f32.mrb[0].mxu0
    %v4023 = vadd.f32 0.0, %v4022
    %v4024 = vpop.f32.mrb[0].mxu0
    %4025 = vmatprep.mubr.f32.mxu0 0.0
    %4026 = vmatmul.mubr.f32.gmra.mrb[0].mxu0 %v3836
    %v4027 = vpop.f32.mrb[0].mxu0
    %v4028 = vadd.f32 0.0, %v4027
    %v4029 = vpop.f32.mrb[0].mxu0
    %4030 = vmatprep.mubr.f32.mxu0 0.0
    %4031 = vmatmul.mubr.f32.gmra.mrb[0].mxu0 %v3839
    %v4032 = vpop.f32.mrb[0].mxu0
    %v4033 = vadd.f32 0.0, %v4032
    %v4034 = vpop.f32.mrb[0].mxu0
    %4035 = vmatprep.mubr.f32.mxu0 0.0
    %4036 = vmatmul.mubr.f32.gmra.mrb[0].mxu0 %v3842
    %v4037 = vpop.f32.mrb[0].mxu0
    %v4038 = vadd.f32 0.0, %v4037
    %v4039 = vpop.f32.mrb[0].mxu0
    %4040 = vmatprep.mubr.f32.mxu0 0.0
    %4041 = vmatmul.mubr.f32.gmra.mrb[0].mxu0 %v3845
    %v4042 = vpop.f32.mrb[0].mxu0
    %v4043 = vadd.f32 0.0, %v4042
    %v4044 = vpop.f32.mrb[0].mxu0
    %4045 = vmatprep.mubr.f32.mxu0 0.0
    %4046 = vmatmul.mubr.f32.gmra.mrb[0].mxu0 %v3848
    %v4047 = vpop.f32.mrb[0].mxu0
    %v4048 = vadd.f32 0.0, %v4047
    %v4049 = vpop.f32.mrb[0].mxu0
    %4050 = vmatprep.mubr.f32.mxu0 0.0
    %4051 = vmatmul.mubr.f32.gmra.mrb[0].mxu0 %v3851
    %v4052 = vpop.f32.mrb[0].mxu0
    %v4053 = vadd.f32 0.0, %v4052
    %v4054 = vpop.f32.mrb[0].mxu0
    %4055 = vmatprep.mubr.f32.mxu0 0.0
    %4056 = vmatmul.mubr.f32.gmra.mrb[0].mxu0 %v3854
    %v4057 = vpop.f32.mrb[0].mxu0
    %v4058 = vadd.f32 0.0, %v4057
    %v4059 = vpop.f32.mrb[0].mxu0
    %4060 = vmatprep.mubr.f32.mxu0 0.0
    %4061 = vmatmul.mubr.f32.gmra.mrb[0].mxu0 %v3857
    %v4062 = vpop.f32.mrb[0].mxu0
    %v4063 = vadd.f32 0.0, %v4062
    %v4064 = vpop.f32.mrb[0].mxu0
    %4065 = vmatprep.mubr.f32.mxu0 0.0
    %4066 = vmatmul.mubr.f32.gmra.mrb[0].mxu0 %v3860
    %v4067 = vpop.f32.mrb[0].mxu0
    %v4068 = vadd.f32 0.0, %v4067
    %v4069 = vpop.f32.mrb[0].mxu0
    %4070 = vmatprep.mubr.f32.mxu0 0.0
    %4071 = vmatmul.mubr.f32.gmra.mrb[0].mxu0 %v3863
    %v4072 = vpop.f32.mrb[0].mxu0
    %v4073 = vadd.f32 0.0, %v4072
    %v4074 = vpop.f32.mrb[0].mxu0
    %4075 = vmatprep.mubr.f32.mxu0 0.0
    %4076 = vmatmul.mubr.f32.gmra.mrb[0].mxu0 %v3866
    %v4077 = vpop.f32.mrb[0].mxu0
    %v4078 = vadd.f32 0.0, %v4077
    %v4079 = vpop.f32.mrb[0].mxu0
    %4080 = vmatprep.mubr.f32.mxu0 0.0
    %4081 = vmatmul.mubr.f32.gmra.mrb[0].mxu0 %v3869
    %v4082 = vpop.f32.mrb[0].mxu0
    %v4083 = vadd.f32 0.0, %v4082
    %v4084 = vpop.f32.mrb[0].mxu0
    %4085 = vmatprep.mubr.f32.mxu0 0.0
    %4086 = vmatmul.mubr.f32.gmra.mrb[0].mxu0 %v3872
    %v4087 = vpop.f32.mrb[0].mxu0
    %v4088 = vadd.f32 0.0, %v4087
    %v4089 = vpop.f32.mrb[0].mxu0
    %4090 = vmatprep.mubr.f32.mxu0 0.0
    %4091 = vmatmul.mubr.f32.gmra.mrb[0].mxu0 %v3875
    %v4092 = vpop.f32.mrb[0].mxu0
    %v4093 = vadd.f32 0.0, %v4092
    %v4094 = vpop.f32.mrb[0].mxu0
    %4095 = vmatprep.mubr.f32.mxu0 0.0
    %4096 = vmatmul.mubr.f32.gmra.mrb[0].mxu0 %v3878
    %v4097 = vpop.f32.mrb[0].mxu0
    %v4098 = vadd.f32 0.0, %v4097
    %v4099 = vpop.f32.mrb[0].mxu0
    %4100 = vmatprep.mubr.f32.mxu0 0.0
    %4101 = vmatmul.mubr.f32.gmra.mrb[0].mxu0 %v3881
    %v4102 = vpop.f32.mrb[0].mxu0
    %v4103 = vadd.f32 0.0, %v4102
    %v4104 = vpop.f32.mrb[0].mxu0
    %4105 = vmatprep.mubr.f32.mxu0 0.0
    %4106 = vmatmul.mubr.f32.gmra.mrb[0].mxu0 %v3884
    %v4107 = vpop.f32.mrb[0].mxu0
    %v4108 = vadd.f32 0.0, %v4107
    %v4109 = vpop.f32.mrb[0].mxu0
    %4110 = vdwg.mxu0
    %v4111 = vsel %vm3678, %v3953, -inf
    %v4112 = vsel %vm3678, %v3958, -inf
    %v4113 = vsel %vm3678, %v3963, -inf
    %v4114 = vsel %vm3678, %v3968, -inf
    %v4115 = vsel %vm3678, %v3973, -inf
    %v4116 = vmax.f32 %v4111, %v4115
    %v4117 = vsel %vm3678, %v3978, -inf
    %v4118 = vmax.f32 %v4112, %v4117
    %v4119 = vsel %vm3678, %v3983, -inf
    %v4120 = vmax.f32 %v4113, %v4119
    %v4121 = vsel %vm3678, %v3988, -inf
    %v4122 = vmax.f32 %v4114, %v4121
    %v4123 = vsel %vm3678, %v3993, -inf
    %v4124 = vmax.f32 %v4116, %v4123
    %v4125 = vsel %vm3678, %v3998, -inf
    %v4126 = vmax.f32 %v4118, %v4125
    %v4127 = vsel %vm3678, %v4003, -inf
    %v4128 = vmax.f32 %v4120, %v4127
    %v4129 = vsel %vm3678, %v4008, -inf
    %v4130 = vmax.f32 %v4122, %v4129
    %v4131 = vsel %vm3678, %v4013, -inf
    %v4132 = vmax.f32 %v4124, %v4131
    %v4133 = vsel %vm3678, %v4018, -inf
    %v4134 = vmax.f32 %v4126, %v4133
    %v4135 = vsel %vm3678, %v4023, -inf
    %v4136 = vmax.f32 %v4128, %v4135
    %v4137 = vsel %vm3678, %v4028, -inf
    %v4138 = vmax.f32 %v4130, %v4137
    %v4139 = vsel %vm3678, %v4033, -inf
    %v4140 = vmax.f32 %v4132, %v4139
    %v4141 = vsel %vm3678, %v4038, -inf
    %v4142 = vmax.f32 %v4134, %v4141
    %v4143 = vsel %vm3678, %v4043, -inf
    %v4144 = vmax.f32 %v4136, %v4143
    %v4145 = vsel %vm3678, %v4048, -inf
    %v4146 = vmax.f32 %v4138, %v4145
    %v4147 = vsel %vm3678, %v4053, -inf
    %v4148 = vmax.f32 %v4140, %v4147
    %v4149 = vsel %vm3678, %v4058, -inf
    %v4150 = vmax.f32 %v4142, %v4149
    %v4151 = vsel %vm3678, %v4063, -inf
    %v4152 = vmax.f32 %v4144, %v4151
    %v4153 = vsel %vm3678, %v4068, -inf
    %v4154 = vmax.f32 %v4146, %v4153
    %v4155 = vsel %vm3678, %v4073, -inf
    %v4156 = vmax.f32 %v4148, %v4155
    %v4157 = vsel %vm3678, %v4078, -inf
    %v4158 = vmax.f32 %v4150, %v4157
    %v4159 = vsel %vm3678, %v4083, -inf
    %v4160 = vmax.f32 %v4152, %v4159
    %v4161 = vsel %vm3678, %v4088, -inf
    %v4162 = vmax.f32 %v4154, %v4161
    %v4163 = vsel %vm3678, %v4093, -inf
    %v4164 = vmax.f32 %v4156, %v4163
    %v4165 = vsel %vm3678, %v4098, -inf
    %v4166 = vmax.f32 %v4158, %v4165
    %v4167 = vsel %vm3678, %v4103, -inf
    %v4168 = vmax.f32 %v4160, %v4167
    %v4169 = vsel %vm3678, %v4108, -inf
    %v4170 = vmax.f32 %v4162, %v4169
    %v4171 = vmax.f32 %v4164, %v4166
    %v4172 = vmax.f32 %v4168, %v4170
    %v4173 = vmax.f32 %v4171, %v4172
    %v4174 = vsub.f32 %v3953, %v4173
    %v4175 = vsub.f32 %v3958, %v4173
    %v4176 = vsub.f32 %v3963, %v4173
    %v4177 = vsub.f32 %v3968, %v4173
    %v4178 = vsub.f32 %v3973, %v4173
    %v4179 = vsub.f32 %v3978, %v4173
    %v4180 = vsub.f32 %v3983, %v4173
    %v4181 = vsub.f32 %v3988, %v4173
    %v4182 = vsub.f32 %v3993, %v4173
    %v4183 = vsub.f32 %v3998, %v4173
    %v4184 = vsub.f32 %v4003, %v4173
    %v4185 = vsub.f32 %v4008, %v4173
    %v4186 = vsub.f32 %v4013, %v4173
    %v4187 = vsub.f32 %v4018, %v4173
    %v4188 = vsub.f32 %v4023, %v4173
    %v4189 = vsub.f32 %v4028, %v4173
    %v4190 = vsub.f32 %v4033, %v4173
    %v4191 = vsub.f32 %v4038, %v4173
    %v4192 = vsub.f32 %v4043, %v4173
    %v4193 = vsub.f32 %v4048, %v4173
    %v4194 = vsub.f32 %v4053, %v4173
    %v4195 = vsub.f32 %v4058, %v4173
    %v4196 = vsub.f32 %v4063, %v4173
    %v4197 = vsub.f32 %v4068, %v4173
    %v4198 = vsub.f32 %v4073, %v4173
    %v4199 = vsub.f32 %v4078, %v4173
    %v4200 = vsub.f32 %v4083, %v4173
    %v4201 = vsub.f32 %v4088, %v4173
    %v4202 = vsub.f32 %v4093, %v4173
    %v4203 = vsub.f32 %v4098, %v4173
    %v4204 = vsub.f32 %v4103, %v4173
    %v4205 = vsub.f32 %v4108, %v4173
    %v4206 = vmul.f32 %v4174, 1.442695
    %v4207 = vpow.pop %v4206
    %v4208 = vmul.f32 %v4175, 1.442695
    %v4209 = vpow.pop %v4208
    %v4210 = vmul.f32 %v4176, 1.442695
    %v4211 = vpow.pop %v4210
    %v4212 = vmul.f32 %v4177, 1.442695
    %v4213 = vpow.pop %v4212
    %v4214 = vmul.f32 %v4178, 1.442695
    %v4215 = vpow.pop %v4214
    %v4216 = vmul.f32 %v4179, 1.442695
    %v4217 = vpow.pop %v4216
    %v4218 = vmul.f32 %v4180, 1.442695
    %v4219 = vpow.pop %v4218
    %v4220 = vmul.f32 %v4181, 1.442695
    %v4221 = vpow.pop %v4220
    %v4222 = vmul.f32 %v4182, 1.442695
    %v4223 = vpow.pop %v4222
    %v4224 = vmul.f32 %v4183, 1.442695
    %v4225 = vpow.pop %v4224
    %v4226 = vmul.f32 %v4184, 1.442695
    %v4227 = vpow.pop %v4226
    %v4228 = vmul.f32 %v4185, 1.442695
    %v4229 = vpow.pop %v4228
    %v4230 = vmul.f32 %v4186, 1.442695
    %v4231 = vpow.pop %v4230
    %v4232 = vmul.f32 %v4187, 1.442695
    %v4233 = vpow.pop %v4232
    %v4234 = vmul.f32 %v4188, 1.442695
    %v4235 = vpow.pop %v4234
    %v4236 = vmul.f32 %v4189, 1.442695
    %v4237 = vpow.pop %v4236
    %v4238 = vmul.f32 %v4190, 1.442695
    %v4239 = vpow.pop %v4238
    %v4240 = vmul.f32 %v4191, 1.442695
    %v4241 = vpow.pop %v4240
    %v4242 = vmul.f32 %v4192, 1.442695
    %v4243 = vpow.pop %v4242
    %v4244 = vmul.f32 %v4193, 1.442695
    %v4245 = vpow.pop %v4244
    %v4246 = vmul.f32 %v4194, 1.442695
    %v4247 = vpow.pop %v4246
    %v4248 = vmul.f32 %v4195, 1.442695
    %v4249 = vpow.pop %v4248
    %v4250 = vmul.f32 %v4196, 1.442695
    %v4251 = vpow.pop %v4250
    %v4252 = vmul.f32 %v4197, 1.442695
    %v4253 = vpow.pop %v4252
    %v4254 = vmul.f32 %v4198, 1.442695
    %v4255 = vpow.pop %v4254
    %v4256 = vmul.f32 %v4199, 1.442695
    %v4257 = vpow.pop %v4256
    %v4258 = vmul.f32 %v4200, 1.442695
    %v4259 = vpow.pop %v4258
    %v4260 = vmul.f32 %v4201, 1.442695
    %v4261 = vpow.pop %v4260
    %v4262 = vmul.f32 %v4202, 1.442695
    %v4263 = vpow.pop %v4262
    %v4264 = vmul.f32 %v4203, 1.442695
    %v4265 = vpow.pop %v4264
    %v4266 = vmul.f32 %v4204, 1.442695
    %v4267 = vpow.pop %v4266
    %v4268 = vmul.f32 %v4205, 1.442695
    %v4269 = vpow.pop %v4268
    %v4270 = vsel %vm3678, %v4207, 0.0
    %v4271 = vsel %vm3678, %v4209, 0.0
    %v4272 = vadd.f32 %v4270, %v4271
    %v4273 = vsel %vm3678, %v4211, 0.0
    %v4274 = vadd.f32 %v4272, %v4273
    %v4275 = vsel %vm3678, %v4213, 0.0
    %v4276 = vadd.f32 %v4274, %v4275
    %v4277 = vsel %vm3678, %v4215, 0.0
    %v4278 = vadd.f32 %v4276, %v4277
    %v4279 = vsel %vm3678, %v4217, 0.0
    %v4280 = vadd.f32 %v4278, %v4279
    %v4281 = vsel %vm3678, %v4219, 0.0
    %v4282 = vadd.f32 %v4280, %v4281
    %v4283 = vsel %vm3678, %v4221, 0.0
    %v4284 = vadd.f32 %v4282, %v4283
    %v4285 = vsel %vm3678, %v4223, 0.0
    %v4286 = vadd.f32 %v4284, %v4285
    %v4287 = vsel %vm3678, %v4225, 0.0
    %v4288 = vadd.f32 %v4286, %v4287
    %v4289 = vsel %vm3678, %v4227, 0.0
    %v4290 = vadd.f32 %v4288, %v4289
    %v4291 = vsel %vm3678, %v4229, 0.0
    %v4292 = vadd.f32 %v4290, %v4291
    %v4293 = vsel %vm3678, %v4231, 0.0
    %v4294 = vadd.f32 %v4292, %v4293
    %v4295 = vsel %vm3678, %v4233, 0.0
    %v4296 = vadd.f32 %v4294, %v4295
    %v4297 = vsel %vm3678, %v4235, 0.0
    %v4298 = vadd.f32 %v4296, %v4297
    %v4299 = vsel %vm3678, %v4237, 0.0
    %v4300 = vadd.f32 %v4298, %v4299
    %v4301 = vsel %vm3678, %v4239, 0.0
    %v4302 = vadd.f32 %v4300, %v4301
    %v4303 = vsel %vm3678, %v4241, 0.0
    %v4304 = vadd.f32 %v4302, %v4303
    %v4305 = vsel %vm3678, %v4243, 0.0
    %v4306 = vadd.f32 %v4304, %v4305
    %v4307 = vsel %vm3678, %v4245, 0.0
    %v4308 = vadd.f32 %v4306, %v4307
    %v4309 = vsel %vm3678, %v4247, 0.0
    %v4310 = vadd.f32 %v4308, %v4309
    %v4311 = vsel %vm3678, %v4249, 0.0
    %v4312 = vadd.f32 %v4310, %v4311
    %v4313 = vsel %vm3678, %v4251, 0.0
    %v4314 = vadd.f32 %v4312, %v4313
    %v4315 = vsel %vm3678, %v4253, 0.0
    %v4316 = vadd.f32 %v4314, %v4315
    %v4317 = vsel %vm3678, %v4255, 0.0
    %v4318 = vadd.f32 %v4316, %v4317
    %v4319 = vsel %vm3678, %v4257, 0.0
    %v4320 = vadd.f32 %v4318, %v4319
    %v4321 = vsel %vm3678, %v4259, 0.0
    %v4322 = vadd.f32 %v4320, %v4321
    %v4323 = vsel %vm3678, %v4261, 0.0
    %v4324 = vadd.f32 %v4322, %v4323
    %v4325 = vsel %vm3678, %v4263, 0.0
    %v4326 = vadd.f32 %v4324, %v4325
    %v4327 = vsel %vm3678, %v4265, 0.0
    %v4328 = vadd.f32 %v4326, %v4327
    %v4329 = vsel %vm3678, %v4267, 0.0
    %v4330 = vadd.f32 %v4328, %v4329
    %v4331 = vsel %vm3678, %v4269, 0.0
    %v4332 = vadd.f32 %v4330, %v4331
    %v4334 = vsel %vm3678, %v4207, 0
    %v4337 = vsel %vm3678, %v4209, 0
    %v4340 = vsel %vm3678, %v4211, 0
    %v4343 = vsel %vm3678, %v4213, 0
    %v4346 = vsel %vm3678, %v4215, 0
    %v4349 = vsel %vm3678, %v4217, 0
    %v4352 = vsel %vm3678, %v4219, 0
    %v4355 = vsel %vm3678, %v4221, 0
    %v4358 = vsel %vm3678, %v4223, 0
    %v4361 = vsel %vm3678, %v4225, 0
    %v4364 = vsel %vm3678, %v4227, 0
    %v4367 = vsel %vm3678, %v4229, 0
    %v4370 = vsel %vm3678, %v4231, 0
    %v4373 = vsel %vm3678, %v4233, 0
    %v4376 = vsel %vm3678, %v4235, 0
    %v4379 = vsel %vm3678, %v4237, 0
    %v4382 = vsel %vm3678, %v4239, 0
    %v4385 = vsel %vm3678, %v4241, 0
    %v4388 = vsel %vm3678, %v4243, 0
    %v4391 = vsel %vm3678, %v4245, 0
    %v4394 = vsel %vm3678, %v4247, 0
    %v4397 = vsel %vm3678, %v4249, 0
    %v4400 = vsel %vm3678, %v4251, 0
    %v4403 = vsel %vm3678, %v4253, 0
    %v4406 = vsel %vm3678, %v4255, 0
    %v4409 = vsel %vm3678, %v4257, 0
    %v4412 = vsel %vm3678, %v4259, 0
    %v4415 = vsel %vm3678, %v4261, 0
    %v4418 = vsel %vm3678, %v4263, 0
    %v4421 = vsel %vm3678, %v4265, 0
    %v4424 = vsel %vm3678, %v4267, 0
    %v4427 = vsel %vm3678, %v4269, 0
    %4429 = vmatprep.subr.mxu0 0.0
    %4430 = vmatpush1.msra.mxu0 %v3684
    %4431 = vmatprep.subr.mxu0 0.0
    %4432 = vmatpush1.msra.mxu0 0.0
    %4433 = vmatprep.subr.mxu0 0.0
    %4434 = vmatpush1.msra.mxu0 0.0
    %4435 = vmatprep.subr.mxu0 0.0
    %4436 = vmatpush1.msra.mxu0 0.0
    %4437 = vmatprep.subr.mxu0 0.0
    %4438 = vmatpush1.msra.mxu0 0.0
    %4439 = vmatprep.subr.mxu0 0.0
    %4440 = vmatpush1.msra.mxu0 0.0
    %4441 = vmatprep.subr.mxu0 0.0
    %4442 = vmatpush1.msra.mxu0 0.0
    %4443 = vmatprep.subr.mxu0 0.0
    %4444 = vmatpush1.msra.mxu0 0.0
    %4445 = vmatprep.subr.mxu0 0.0
    %4446 = vmatpush1.msra.mxu0 0.0
    %4447 = vmatprep.subr.mxu0 0.0
    %4448 = vmatpush1.msra.mxu0 0.0
    %4449 = vmatprep.subr.mxu0 0.0
    %4450 = vmatpush1.msra.mxu0 0.0
    %4451 = vmatprep.subr.mxu0 0.0
    %4452 = vmatpush1.msra.mxu0 0.0
    %4453 = vmatprep.subr.mxu0 0.0
    %4454 = vmatpush1.msra.mxu0 0.0
    %4455 = vmatprep.subr.mxu0 0.0
    %4456 = vmatpush1.msra.mxu0 0.0
    %4457 = vmatprep.subr.mxu0 0.0
    %4458 = vmatpush1.msra.mxu0 0.0
    %4459 = vmatprep.subr.mxu0 0.0
    %4460 = vmatpush1.msra.mxu0 0.0
    %4461 = vmatprep.subr.mxu0 0.0
    %4462 = vmatpush1.msra.mxu0 0.0
    %4463 = vmatprep.subr.mxu0 0.0
    %4464 = vmatpush1.msra.mxu0 0.0
    %4465 = vmatprep.subr.mxu0 0.0
    %4466 = vmatpush1.msra.mxu0 0.0
    %4467 = vmatprep.subr.mxu0 0.0
    %4468 = vmatpush1.msra.mxu0 0.0
    %4469 = vmatprep.subr.mxu0 0.0
    %4470 = vmatpush1.msra.mxu0 0.0
    %4471 = vmatprep.subr.mxu0 0.0
    %4472 = vmatpush1.msra.mxu0 0.0
    %4473 = vmatprep.subr.mxu0 0.0
    %4474 = vmatpush1.msra.mxu0 0.0
    %4475 = vmatprep.subr.mxu0 0.0
    %4476 = vmatpush1.msra.mxu0 0.0
    %4477 = vmatprep.subr.mxu0 0.0
    %4478 = vmatpush1.msra.mxu0 0.0
    %4479 = vmatprep.subr.mxu0 0.0
    %4480 = vmatpush1.msra.mxu0 0.0
    %4481 = vmatprep.subr.mxu0 0.0
    %4482 = vmatpush1.msra.mxu0 0.0
    %4483 = vmatprep.subr.mxu0 0.0
    %4484 = vmatpush1.msra.mxu0 0.0
    %4485 = vmatprep.subr.mxu0 0.0
    %4486 = vmatpush1.msra.mxu0 0.0
    %4487 = vmatprep.subr.mxu0 0.0
    %4488 = vmatpush1.msra.mxu0 0.0
    %4489 = vmatprep.subr.mxu0 0.0
    %4490 = vmatpush1.msra.mxu0 0.0
    %4491 = vmatprep.subr.mxu0 0.0
    %4492 = vmatpush1.msra.mxu0 0.0
    %4493 = vmatprep.mubr.f32.mxu0 0.0
    %4494 = vmatmul.mubr.f32.gmra.mrb[0].mxu0 %v4334
    %v4495 = vpop.f32.mrb[0].mxu0
    %v4496 = vadd.f32 0.0, %v4495
    %v4497 = vpop.f32.mrb[0].mxu0
    %4498 = vmatprep.mubr.f32.mxu0 0.0
    %4499 = vmatmul.mubr.f32.gmra.mrb[0].mxu0 %v4337
    %v4500 = vpop.f32.mrb[0].mxu0
    %v4501 = vadd.f32 0.0, %v4500
    %v4502 = vpop.f32.mrb[0].mxu0
    %4503 = vmatprep.mubr.f32.mxu0 0.0
    %4504 = vmatmul.mubr.f32.gmra.mrb[0].mxu0 %v4340
    %v4505 = vpop.f32.mrb[0].mxu0
    %v4506 = vadd.f32 0.0, %v4505
    %v4507 = vpop.f32.mrb[0].mxu0
    %4508 = vmatprep.mubr.f32.mxu0 0.0
    %4509 = vmatmul.mubr.f32.gmra.mrb[0].mxu0 %v4343
    %v4510 = vpop.f32.mrb[0].mxu0
    %v4511 = vadd.f32 0.0, %v4510
    %v4512 = vpop.f32.mrb[0].mxu0
    %4513 = vmatprep.mubr.f32.mxu0 0.0
    %4514 = vmatmul.mubr.f32.gmra.mrb[0].mxu0 %v4346
    %v4515 = vpop.f32.mrb[0].mxu0
    %v4516 = vadd.f32 0.0, %v4515
    %v4517 = vpop.f32.mrb[0].mxu0
    %4518 = vmatprep.mubr.f32.mxu0 0.0
    %4519 = vmatmul.mubr.f32.gmra.mrb[0].mxu0 %v4349
    %v4520 = vpop.f32.mrb[0].mxu0
    %v4521 = vadd.f32 0.0, %v4520
    %v4522 = vpop.f32.mrb[0].mxu0
    %4523 = vmatprep.mubr.f32.mxu0 0.0
    %4524 = vmatmul.mubr.f32.gmra.mrb[0].mxu0 %v4352
    %v4525 = vpop.f32.mrb[0].mxu0
    %v4526 = vadd.f32 0.0, %v4525
    %v4527 = vpop.f32.mrb[0].mxu0
    %4528 = vmatprep.mubr.f32.mxu0 0.0
    %4529 = vmatmul.mubr.f32.gmra.mrb[0].mxu0 %v4355
    %v4530 = vpop.f32.mrb[0].mxu0
    %v4531 = vadd.f32 0.0, %v4530
    %v4532 = vpop.f32.mrb[0].mxu0
    %4533 = vmatprep.mubr.f32.mxu0 0.0
    %4534 = vmatmul.mubr.f32.gmra.mrb[0].mxu0 %v4358
    %v4535 = vpop.f32.mrb[0].mxu0
    %v4536 = vadd.f32 0.0, %v4535
    %v4537 = vpop.f32.mrb[0].mxu0
    %4538 = vmatprep.mubr.f32.mxu0 0.0
    %4539 = vmatmul.mubr.f32.gmra.mrb[0].mxu0 %v4361
    %v4540 = vpop.f32.mrb[0].mxu0
    %v4541 = vadd.f32 0.0, %v4540
    %v4542 = vpop.f32.mrb[0].mxu0
    %4543 = vmatprep.mubr.f32.mxu0 0.0
    %4544 = vmatmul.mubr.f32.gmra.mrb[0].mxu0 %v4364
    %v4545 = vpop.f32.mrb[0].mxu0
    %v4546 = vadd.f32 0.0, %v4545
    %v4547 = vpop.f32.mrb[0].mxu0
    %4548 = vmatprep.mubr.f32.mxu0 0.0
    %4549 = vmatmul.mubr.f32.gmra.mrb[0].mxu0 %v4367
    %v4550 = vpop.f32.mrb[0].mxu0
    %v4551 = vadd.f32 0.0, %v4550
    %v4552 = vpop.f32.mrb[0].mxu0
    %4553 = vmatprep.mubr.f32.mxu0 0.0
    %4554 = vmatmul.mubr.f32.gmra.mrb[0].mxu0 %v4370
    %v4555 = vpop.f32.mrb[0].mxu0
    %v4556 = vadd.f32 0.0, %v4555
    %v4557 = vpop.f32.mrb[0].mxu0
    %4558 = vmatprep.mubr.f32.mxu0 0.0
    %4559 = vmatmul.mubr.f32.gmra.mrb[0].mxu0 %v4373
    %v4560 = vpop.f32.mrb[0].mxu0
    %v4561 = vadd.f32 0.0, %v4560
    %v4562 = vpop.f32.mrb[0].mxu0
    %4563 = vmatprep.mubr.f32.mxu0 0.0
    %4564 = vmatmul.mubr.f32.gmra.mrb[0].mxu0 %v4376
    %v4565 = vpop.f32.mrb[0].mxu0
    %v4566 = vadd.f32 0.0, %v4565
    %v4567 = vpop.f32.mrb[0].mxu0
    %4568 = vmatprep.mubr.f32.mxu0 0.0
    %4569 = vmatmul.mubr.f32.gmra.mrb[0].mxu0 %v4379
    %v4570 = vpop.f32.mrb[0].mxu0
    %v4571 = vadd.f32 0.0, %v4570
    %v4572 = vpop.f32.mrb[0].mxu0
    %4573 = vmatprep.mubr.f32.mxu0 0.0
    %4574 = vmatmul.mubr.f32.gmra.mrb[0].mxu0 %v4382
    %v4575 = vpop.f32.mrb[0].mxu0
    %v4576 = vadd.f32 0.0, %v4575
    %v4577 = vpop.f32.mrb[0].mxu0
    %4578 = vmatprep.mubr.f32.mxu0 0.0
    %4579 = vmatmul.mubr.f32.gmra.mrb[0].mxu0 %v4385
    %v4580 = vpop.f32.mrb[0].mxu0
    %v4581 = vadd.f32 0.0, %v4580
    %v4582 = vpop.f32.mrb[0].mxu0
    %4583 = vmatprep.mubr.f32.mxu0 0.0
    %4584 = vmatmul.mubr.f32.gmra.mrb[0].mxu0 %v4388
    %v4585 = vpop.f32.mrb[0].mxu0
    %v4586 = vadd.f32 0.0, %v4585
    %v4587 = vpop.f32.mrb[0].mxu0
    %4588 = vmatprep.mubr.f32.mxu0 0.0
    %4589 = vmatmul.mubr.f32.gmra.mrb[0].mxu0 %v4391
    %v4590 = vpop.f32.mrb[0].mxu0
    %v4591 = vadd.f32 0.0, %v4590
    %v4592 = vpop.f32.mrb[0].mxu0
    %4593 = vmatprep.mubr.f32.mxu0 0.0
    %4594 = vmatmul.mubr.f32.gmra.mrb[0].mxu0 %v4394
    %v4595 = vpop.f32.mrb[0].mxu0
    %v4596 = vadd.f32 0.0, %v4595
    %v4597 = vpop.f32.mrb[0].mxu0
    %4598 = vmatprep.mubr.f32.mxu0 0.0
    %4599 = vmatmul.mubr.f32.gmra.mrb[0].mxu0 %v4397
    %v4600 = vpop.f32.mrb[0].mxu0
    %v4601 = vadd.f32 0.0, %v4600
    %v4602 = vpop.f32.mrb[0].mxu0
    %4603 = vmatprep.mubr.f32.mxu0 0.0
    %4604 = vmatmul.mubr.f32.gmra.mrb[0].mxu0 %v4400
    %v4605 = vpop.f32.mrb[0].mxu0
    %v4606 = vadd.f32 0.0, %v4605
    %v4607 = vpop.f32.mrb[0].mxu0
    %4608 = vmatprep.mubr.f32.mxu0 0.0
    %4609 = vmatmul.mubr.f32.gmra.mrb[0].mxu0 %v4403
    %v4610 = vpop.f32.mrb[0].mxu0
    %v4611 = vadd.f32 0.0, %v4610
    %v4612 = vpop.f32.mrb[0].mxu0
    %4613 = vmatprep.mubr.f32.mxu0 0.0
    %4614 = vmatmul.mubr.f32.gmra.mrb[0].mxu0 %v4406
    %v4615 = vpop.f32.mrb[0].mxu0
    %v4616 = vadd.f32 0.0, %v4615
    %v4617 = vpop.f32.mrb[0].mxu0
    %4618 = vmatprep.mubr.f32.mxu0 0.0
    %4619 = vmatmul.mubr.f32.gmra.mrb[0].mxu0 %v4409
    %v4620 = vpop.f32.mrb[0].mxu0
    %v4621 = vadd.f32 0.0, %v4620
    %v4622 = vpop.f32.mrb[0].mxu0
    %4623 = vmatprep.mubr.f32.mxu0 0.0
    %4624 = vmatmul.mubr.f32.gmra.mrb[0].mxu0 %v4412
    %v4625 = vpop.f32.mrb[0].mxu0
    %v4626 = vadd.f32 0.0, %v4625
    %v4627 = vpop.f32.mrb[0].mxu0
    %4628 = vmatprep.mubr.f32.mxu0 0.0
    %4629 = vmatmul.mubr.f32.gmra.mrb[0].mxu0 %v4415
    %v4630 = vpop.f32.mrb[0].mxu0
    %v4631 = vadd.f32 0.0, %v4630
    %v4632 = vpop.f32.mrb[0].mxu0
    %4633 = vmatprep.mubr.f32.mxu0 0.0
    %4634 = vmatmul.mubr.f32.gmra.mrb[0].mxu0 %v4418
    %v4635 = vpop.f32.mrb[0].mxu0
    %v4636 = vadd.f32 0.0, %v4635
    %v4637 = vpop.f32.mrb[0].mxu0
    %4638 = vmatprep.mubr.f32.mxu0 0.0
    %4639 = vmatmul.mubr.f32.gmra.mrb[0].mxu0 %v4421
    %v4640 = vpop.f32.mrb[0].mxu0
    %v4641 = vadd.f32 0.0, %v4640
    %v4642 = vpop.f32.mrb[0].mxu0
    %4643 = vmatprep.mubr.f32.mxu0 0.0
    %4644 = vmatmul.mubr.f32.gmra.mrb[0].mxu0 %v4424
    %v4645 = vpop.f32.mrb[0].mxu0
    %v4646 = vadd.f32 0.0, %v4645
    %v4647 = vpop.f32.mrb[0].mxu0
    %4648 = vmatprep.mubr.f32.mxu0 0.0
    %4649 = vmatmul.mubr.f32.gmra.mrb[0].mxu0 %v4427
    %v4650 = vpop.f32.mrb[0].mxu0
    %v4651 = vadd.f32 0.0, %v4650
    %v4652 = vpop.f32.mrb[0].mxu0
    %4653 = vdwg.mxu0
    %v4654 = vmul.f32 %v4496, %v207
    %v4655 = vmul.f32 %v4501, %v312
    %v4656 = vmul.f32 %v4506, %v417
    %v4657 = vmul.f32 %v4511, %v522
    %v4658 = vmul.f32 %v4516, %v627
    %v4659 = vmul.f32 %v4521, %v732
    %v4660 = vmul.f32 %v4526, %v837
    %v4661 = vmul.f32 %v4531, %v942
    %v4662 = vmul.f32 %v4536, %v1047
    %v4663 = vmul.f32 %v4541, %v1152
    %v4664 = vmul.f32 %v4546, %v1257
    %v4665 = vmul.f32 %v4551, %v1362
    %v4666 = vmul.f32 %v4556, %v1467
    %v4667 = vmul.f32 %v4561, %v1572
    %v4668 = vmul.f32 %v4566, %v1677
    %v4669 = vmul.f32 %v4571, %v1782
    %v4670 = vmul.f32 %v4576, %v1887
    %v4671 = vmul.f32 %v4581, %v1992
    %v4672 = vmul.f32 %v4586, %v2097
    %v4673 = vmul.f32 %v4591, %v2202
    %v4674 = vmul.f32 %v4596, %v2307
    %v4675 = vmul.f32 %v4601, %v2412
    %v4676 = vmul.f32 %v4606, %v2517
    %v4677 = vmul.f32 %v4611, %v2622
    %v4678 = vmul.f32 %v4616, %v2727
    %v4679 = vmul.f32 %v4621, %v2832
    %v4680 = vmul.f32 %v4626, %v2937
    %v4681 = vmul.f32 %v4631, %v3042
    %v4682 = vmul.f32 %v4636, %v3147
    %v4683 = vmul.f32 %v4641, %v3252
    %v4684 = vmul.f32 %v4646, %v3357
    %v4685 = vmul.f32 %v4651, %v3462
    %v4686 = vsel %vm3527, %v4654, 0.0
    %v4687 = vsel %vm3527, %v4655, 0.0
    %v4688 = vadd.f32 %v4686, %v4687
    %v4689 = vsel %vm3527, %v4656, 0.0
    %v4690 = vadd.f32 %v4688, %v4689
    %v4691 = vsel %vm3527, %v4657, 0.0
    %v4692 = vadd.f32 %v4690, %v4691
    %v4693 = vsel %vm3527, %v4658, 0.0
    %v4694 = vadd.f32 %v4692, %v4693
    %v4695 = vsel %vm3527, %v4659, 0.0
    %v4696 = vadd.f32 %v4694, %v4695
    %v4697 = vsel %vm3527, %v4660, 0.0
    %v4698 = vadd.f32 %v4696, %v4697
    %v4699 = vsel %vm3527, %v4661, 0.0
    %v4700 = vadd.f32 %v4698, %v4699
    %v4701 = vsel %vm3527, %v4662, 0.0
    %v4702 = vadd.f32 %v4700, %v4701
    %v4703 = vsel %vm3527, %v4663, 0.0
    %v4704 = vadd.f32 %v4702, %v4703
    %v4705 = vsel %vm3527, %v4664, 0.0
    %v4706 = vadd.f32 %v4704, %v4705
    %v4707 = vsel %vm3527, %v4665, 0.0
    %v4708 = vadd.f32 %v4706, %v4707
    %v4709 = vsel %vm3527, %v4666, 0.0
    %v4710 = vadd.f32 %v4708, %v4709
    %v4711 = vsel %vm3527, %v4667, 0.0
    %v4712 = vadd.f32 %v4710, %v4711
    %v4713 = vsel %vm3527, %v4668, 0.0
    %v4714 = vadd.f32 %v4712, %v4713
    %v4715 = vsel %vm3527, %v4669, 0.0
    %v4716 = vadd.f32 %v4714, %v4715
    %v4717 = vsel %vm3527, %v4670, 0.0
    %v4718 = vadd.f32 %v4716, %v4717
    %v4719 = vsel %vm3527, %v4671, 0.0
    %v4720 = vadd.f32 %v4718, %v4719
    %v4721 = vsel %vm3527, %v4672, 0.0
    %v4722 = vadd.f32 %v4720, %v4721
    %v4723 = vsel %vm3527, %v4673, 0.0
    %v4724 = vadd.f32 %v4722, %v4723
    %v4725 = vsel %vm3527, %v4674, 0.0
    %v4726 = vadd.f32 %v4724, %v4725
    %v4727 = vsel %vm3527, %v4675, 0.0
    %v4728 = vadd.f32 %v4726, %v4727
    %v4729 = vsel %vm3527, %v4676, 0.0
    %v4730 = vadd.f32 %v4728, %v4729
    %v4731 = vsel %vm3527, %v4677, 0.0
    %v4732 = vadd.f32 %v4730, %v4731
    %v4733 = vsel %vm3527, %v4678, 0.0
    %v4734 = vadd.f32 %v4732, %v4733
    %v4735 = vsel %vm3527, %v4679, 0.0
    %v4736 = vadd.f32 %v4734, %v4735
    %v4737 = vsel %vm3527, %v4680, 0.0
    %v4738 = vadd.f32 %v4736, %v4737
    %v4739 = vsel %vm3527, %v4681, 0.0
    %v4740 = vadd.f32 %v4738, %v4739
    %v4741 = vsel %vm3527, %v4682, 0.0
    %v4742 = vadd.f32 %v4740, %v4741
    %v4743 = vsel %vm3527, %v4683, 0.0
    %v4744 = vadd.f32 %v4742, %v4743
    %v4745 = vsel %vm3527, %v4684, 0.0
    %v4746 = vadd.f32 %v4744, %v4745
    %v4747 = vsel %vm3527, %v4685, 0.0
    %v4748 = vadd.f32 %v4746, %v4747
    %v4749 = vrcp.pop %v4332
    %v4751 = vsel %vm3678, %v4749, 0
    %4753 = vmatprep.subr.mxu0 0.0
    %4754 = vmatpush1.msra.mxu0 %v3684
    %4755 = vmatprep.subr.mxu0 0.0
    %4756 = vmatpush1.msra.mxu0 0.0
    %4757 = vmatprep.subr.mxu0 0.0
    %4758 = vmatpush1.msra.mxu0 0.0
    %4759 = vmatprep.subr.mxu0 0.0
    %4760 = vmatpush1.msra.mxu0 0.0
    %4761 = vmatprep.subr.mxu0 0.0
    %4762 = vmatpush1.msra.mxu0 0.0
    %4763 = vmatprep.subr.mxu0 0.0
    %4764 = vmatpush1.msra.mxu0 0.0
    %4765 = vmatprep.subr.mxu0 0.0
    %4766 = vmatpush1.msra.mxu0 0.0
    %4767 = vmatprep.subr.mxu0 0.0
    %4768 = vmatpush1.msra.mxu0 0.0
    %4769 = vmatprep.subr.mxu0 0.0
    %4770 = vmatpush1.msra.mxu0 0.0
    %4771 = vmatprep.subr.mxu0 0.0
    %4772 = vmatpush1.msra.mxu0 0.0
    %4773 = vmatprep.subr.mxu0 0.0
    %4774 = vmatpush1.msra.mxu0 0.0
    %4775 = vmatprep.subr.mxu0 0.0
    %4776 = vmatpush1.msra.mxu0 0.0
    %4777 = vmatprep.subr.mxu0 0.0
    %4778 = vmatpush1.msra.mxu0 0.0
    %4779 = vmatprep.subr.mxu0 0.0
    %4780 = vmatpush1.msra.mxu0 0.0
    %4781 = vmatprep.subr.mxu0 0.0
    %4782 = vmatpush1.msra.mxu0 0.0
    %4783 = vmatprep.subr.mxu0 0.0
    %4784 = vmatpush1.msra.mxu0 0.0
    %4785 = vmatprep.subr.mxu0 0.0
    %4786 = vmatpush1.msra.mxu0 0.0
    %4787 = vmatprep.subr.mxu0 0.0
    %4788 = vmatpush1.msra.mxu0 0.0
    %4789 = vmatprep.subr.mxu0 0.0
    %4790 = vmatpush1.msra.mxu0 0.0
    %4791 = vmatprep.subr.mxu0 0.0
    %4792 = vmatpush1.msra.mxu0 0.0
    %4793 = vmatprep.subr.mxu0 0.0
    %4794 = vmatpush1.msra.mxu0 0.0
    %4795 = vmatprep.subr.mxu0 0.0
    %4796 = vmatpush1.msra.mxu0 0.0
    %4797 = vmatprep.subr.mxu0 0.0
    %4798 = vmatpush1.msra.mxu0 0.0
    %4799 = vmatprep.subr.mxu0 0.0
    %4800 = vmatpush1.msra.mxu0 0.0
    %4801 = vmatprep.subr.mxu0 0.0
    %4802 = vmatpush1.msra.mxu0 0.0
    %4803 = vmatprep.subr.mxu0 0.0
    %4804 = vmatpush1.msra.mxu0 0.0
    %4805 = vmatprep.subr.mxu0 0.0
    %4806 = vmatpush1.msra.mxu0 0.0
    %4807 = vmatprep.subr.mxu0 0.0
    %4808 = vmatpush1.msra.mxu0 0.0
    %4809 = vmatprep.subr.mxu0 0.0
    %4810 = vmatpush1.msra.mxu0 0.0
    %4811 = vmatprep.subr.mxu0 0.0
    %4812 = vmatpush1.msra.mxu0 0.0
    %4813 = vmatprep.subr.mxu0 0.0
    %4814 = vmatpush1.msra.mxu0 0.0
    %4815 = vmatprep.subr.mxu0 0.0
    %4816 = vmatpush1.msra.mxu0 0.0
    %4817 = vmatprep.mubr.f32.mxu0 0.0
    %4818 = vmatmul.mubr.f32.gmra.mrb[0].mxu0 %v4751
    %v4819 = vpop.f32.mrb[0].mxu0
    %v4820 = vadd.f32 0.0, %v4819
    %v4821 = vpop.f32.mrb[0].mxu0
    %4822 = vdwg.mxu0
    %v4823 = vmul.f32 %v4748, %v4820
    %v4824 = vmul.f32 %v4823, %v4823
    %v4826 = vsel %vm3527, %v4824, 0
    %4828 = vmatprep.subr.mxu0 0.0
    %4829 = vmatpush1.msra.mxu0 %v3511
    %4830 = vmatprep.subr.mxu0 0.0
    %4831 = vmatpush1.msra.mxu0 %v3512
    %4832 = vmatprep.subr.mxu0 0.0
    %4833 = vmatpush1.msra.mxu0 %v3513
    %4834 = vmatprep.subr.mxu0 0.0
    %4835 = vmatpush1.msra.mxu0 %v3514
    %4836 = vmatprep.subr.mxu0 0.0
    %4837 = vmatpush1.msra.mxu0 %v3515
    %4838 = vmatprep.subr.mxu0 0.0
    %4839 = vmatpush1.msra.mxu0 %v3516
    %4840 = vmatprep.subr.mxu0 0.0
    %4841 = vmatpush1.msra.mxu0 %v3517
    %4842 = vmatprep.subr.mxu0 0.0
    %4843 = vmatpush1.msra.mxu0 %v3518
    %4844 = vmatprep.subr.mxu0 0.0
    %4845 = vmatpush1.msra.mxu0 0.0
    %4846 = vmatprep.subr.mxu0 0.0
    %4847 = vmatpush1.msra.mxu0 0.0
    %4848 = vmatprep.subr.mxu0 0.0
    %4849 = vmatpush1.msra.mxu0 0.0
    %4850 = vmatprep.subr.mxu0 0.0
    %4851 = vmatpush1.msra.mxu0 0.0
    %4852 = vmatprep.subr.mxu0 0.0
    %4853 = vmatpush1.msra.mxu0 0.0
    %4854 = vmatprep.subr.mxu0 0.0
    %4855 = vmatpush1.msra.mxu0 0.0
    %4856 = vmatprep.subr.mxu0 0.0
    %4857 = vmatpush1.msra.mxu0 0.0
    %4858 = vmatprep.subr.mxu0 0.0
    %4859 = vmatpush1.msra.mxu0 0.0
    %4860 = vmatprep.subr.mxu0 0.0
    %4861 = vmatpush1.msra.mxu0 0.0
    %4862 = vmatprep.subr.mxu0 0.0
    %4863 = vmatpush1.msra.mxu0 0.0
    %4864 = vmatprep.subr.mxu0 0.0
    %4865 = vmatpush1.msra.mxu0 0.0
    %4866 = vmatprep.subr.mxu0 0.0
    %4867 = vmatpush1.msra.mxu0 0.0
    %4868 = vmatprep.subr.mxu0 0.0
    %4869 = vmatpush1.msra.mxu0 0.0
    %4870 = vmatprep.subr.mxu0 0.0
    %4871 = vmatpush1.msra.mxu0 0.0
    %4872 = vmatprep.subr.mxu0 0.0
    %4873 = vmatpush1.msra.mxu0 0.0
    %4874 = vmatprep.subr.mxu0 0.0
    %4875 = vmatpush1.msra.mxu0 0.0
    %4876 = vmatprep.subr.mxu0 0.0
    %4877 = vmatpush1.msra.mxu0 0.0
    %4878 = vmatprep.subr.mxu0 0.0
    %4879 = vmatpush1.msra.mxu0 0.0
    %4880 = vmatprep.subr.mxu0 0.0
    %4881 = vmatpush1.msra.mxu0 0.0
    %4882 = vmatprep.subr.mxu0 0.0
    %4883 = vmatpush1.msra.mxu0 0.0
    %4884 = vmatprep.subr.mxu0 0.0
    %4885 = vmatpush1.msra.mxu0 0.0
    %4886 = vmatprep.subr.mxu0 0.0
    %4887 = vmatpush1.msra.mxu0 0.0
    %4888 = vmatprep.subr.mxu0 0.0
    %4889 = vmatpush1.msra.mxu0 0.0
    %4890 = vmatprep.subr.mxu0 0.0
    %4891 = vmatpush1.msra.mxu0 0.0
    %4892 = vmatprep.mubr.f32.mxu0 0.0
    %4893 = vmatmul.mubr.f32.gmra.mrb[0].mxu0 %v4826
    %v4894 = vpop.f32.mrb[0].mxu0
    %v4895 = vadd.f32 0.0, %v4894
    %v4896 = vpop.f32.mrb[0].mxu0
    %4897 = vdwg.mxu0
    %v4898 = vadd.f32 %v4895, 1e-12
    %v4899 = vrsqrt.pop %v4898
    %v4900 = vmul.f32 %v4898, %v4899
    %vm4901 = vcmp.eq.f32.partialorder %v4898, inf
    %v4902 = vsel %vm4901, %v4898, %v4900
    %vm4903 = vcmp.eq.f32.partialorder %v4898, 0.0
    %v4904 = vand.u32 %v4898, 2147483648
    %v4905 = vsel %vm4903, %v4904, %v4902
    %v4906 = vadd.f32 %v4895, 1.0
    %v4907 = vrcp.pop %v4906
    %v4908 = vmul.f32 %v4905, %v4907
    %v4910 = vsel %vm3678, %v4908, 0
    %4912 = vmatprep.subr.mxu0 0.0
    %4913 = vmatpush1.msra.mxu0 %v3684
    %4914 = vmatprep.subr.mxu0 0.0
    %4915 = vmatpush1.msra.mxu0 0.0
    %4916 = vmatprep.subr.mxu0 0.0
    %4917 = vmatpush1.msra.mxu0 0.0
    %4918 = vmatprep.subr.mxu0 0.0
    %4919 = vmatpush1.msra.mxu0 0.0
    %4920 = vmatprep.subr.mxu0 0.0
    %4921 = vmatpush1.msra.mxu0 0.0
    %4922 = vmatprep.subr.mxu0 0.0
    %4923 = vmatpush1.msra.mxu0 0.0
    %4924 = vmatprep.subr.mxu0 0.0
    %4925 = vmatpush1.msra.mxu0 0.0
    %4926 = vmatprep.subr.mxu0 0.0
    %4927 = vmatpush1.msra.mxu0 0.0
    %4928 = vmatprep.subr.mxu0 0.0
    %4929 = vmatpush1.msra.mxu0 0.0
    %4930 = vmatprep.subr.mxu0 0.0
    %4931 = vmatpush1.msra.mxu0 0.0
    %4932 = vmatprep.subr.mxu0 0.0
    %4933 = vmatpush1.msra.mxu0 0.0
    %4934 = vmatprep.subr.mxu0 0.0
    %4935 = vmatpush1.msra.mxu0 0.0
    %4936 = vmatprep.subr.mxu0 0.0
    %4937 = vmatpush1.msra.mxu0 0.0
    %4938 = vmatprep.subr.mxu0 0.0
    %4939 = vmatpush1.msra.mxu0 0.0
    %4940 = vmatprep.subr.mxu0 0.0
    %4941 = vmatpush1.msra.mxu0 0.0
    %4942 = vmatprep.subr.mxu0 0.0
    %4943 = vmatpush1.msra.mxu0 0.0
    %4944 = vmatprep.subr.mxu0 0.0
    %4945 = vmatpush1.msra.mxu0 0.0
    %4946 = vmatprep.subr.mxu0 0.0
    %4947 = vmatpush1.msra.mxu0 0.0
    %4948 = vmatprep.subr.mxu0 0.0
    %4949 = vmatpush1.msra.mxu0 0.0
    %4950 = vmatprep.subr.mxu0 0.0
    %4951 = vmatpush1.msra.mxu0 0.0
    %4952 = vmatprep.subr.mxu0 0.0
    %4953 = vmatpush1.msra.mxu0 0.0
    %4954 = vmatprep.subr.mxu0 0.0
    %4955 = vmatpush1.msra.mxu0 0.0
    %4956 = vmatprep.subr.mxu0 0.0
    %4957 = vmatpush1.msra.mxu0 0.0
    %4958 = vmatprep.subr.mxu0 0.0
    %4959 = vmatpush1.msra.mxu0 0.0
    %4960 = vmatprep.subr.mxu0 0.0
    %4961 = vmatpush1.msra.mxu0 0.0
    %4962 = vmatprep.subr.mxu0 0.0
    %4963 = vmatpush1.msra.mxu0 0.0
    %4964 = vmatprep.subr.mxu0 0.0
    %4965 = vmatpush1.msra.mxu0 0.0
    %4966 = vmatprep.subr.mxu0 0.0
    %4967 = vmatpush1.msra.mxu0 0.0
    %4968 = vmatprep.subr.mxu0 0.0
    %4969 = vmatpush1.msra.mxu0 0.0
    %4970 = vmatprep.subr.mxu0 0.0
    %4971 = vmatpush1.msra.mxu0 0.0
    %4972 = vmatprep.subr.mxu0 0.0
    %4973 = vmatpush1.msra.mxu0 0.0
    %4974 = vmatprep.subr.mxu0 0.0
    %4975 = vmatpush1.msra.mxu0 0.0
    %4976 = vmatprep.mubr.f32.mxu0 0.0
    %4977 = vmatmul.mubr.f32.gmra.mrb[0].mxu0 %v4910
    %v4978 = vpop.f32.mrb[0].mxu0
    %v4979 = vadd.f32 0.0, %v4978
    %v4980 = vpop.f32.mrb[0].mxu0
    %4981 = vdwg.mxu0
    %v4982 = vmul.f32 %v4979, %v4823
    %v4983 = vadd.f32 %v3757, %v4982
    %v4984 = vmul.f32 %v207, %v4983
    %v4985 = vmul.f32 %v312, %v4983
    %v4986 = vmul.f32 %v417, %v4983
    %v4987 = vmul.f32 %v522, %v4983
    %v4988 = vmul.f32 %v627, %v4983
    %v4989 = vmul.f32 %v732, %v4983
    %v4990 = vmul.f32 %v837, %v4983
    %v4991 = vmul.f32 %v942, %v4983
    %v4992 = vmul.f32 %v1047, %v4983
    %v4993 = vmul.f32 %v1152, %v4983
    %v4994 = vmul.f32 %v1257, %v4983
    %v4995 = vmul.f32 %v1362, %v4983
    %v4996 = vmul.f32 %v1467, %v4983
    %v4997 = vmul.f32 %v1572, %v4983
    %v4998 = vmul.f32 %v1677, %v4983
    %v4999 = vmul.f32 %v1782, %v4983
    %v5000 = vmul.f32 %v1887, %v4983
    %v5001 = vmul.f32 %v1992, %v4983
    %v5002 = vmul.f32 %v2097, %v4983
    %v5003 = vmul.f32 %v2202, %v4983
    %v5004 = vmul.f32 %v2307, %v4983
    %v5005 = vmul.f32 %v2412, %v4983
    %v5006 = vmul.f32 %v2517, %v4983
    %v5007 = vmul.f32 %v2622, %v4983
    %v5008 = vmul.f32 %v2727, %v4983
    %v5009 = vmul.f32 %v2832, %v4983
    %v5010 = vmul.f32 %v2937, %v4983
    %v5011 = vmul.f32 %v3042, %v4983
    %v5012 = vmul.f32 %v3147, %v4983
    %v5013 = vmul.f32 %v3252, %v4983
    %v5014 = vmul.f32 %v3357, %v4983
    %v5015 = vmul.f32 %v3462, %v4983
    %v5017 = vsel %vm3527, %v4984, 0
    %v5020 = vsel %vm3527, %v4985, 0
    %v5023 = vsel %vm3527, %v4986, 0
    %v5026 = vsel %vm3527, %v4987, 0
    %v5029 = vsel %vm3527, %v4988, 0
    %v5032 = vsel %vm3527, %v4989, 0
    %v5035 = vsel %vm3527, %v4990, 0
    %v5038 = vsel %vm3527, %v4991, 0
    %v5041 = vsel %vm3527, %v4992, 0
    %v5044 = vsel %vm3527, %v4993, 0
    %v5047 = vsel %vm3527, %v4994, 0
    %v5050 = vsel %vm3527, %v4995, 0
    %v5053 = vsel %vm3527, %v4996, 0
    %v5056 = vsel %vm3527, %v4997, 0
    %v5059 = vsel %vm3527, %v4998, 0
    %v5062 = vsel %vm3527, %v4999, 0
    %v5065 = vsel %vm3527, %v5000, 0
    %v5068 = vsel %vm3527, %v5001, 0
    %v5071 = vsel %vm3527, %v5002, 0
    %v5074 = vsel %vm3527, %v5003, 0
    %v5077 = vsel %vm3527, %v5004, 0
    %v5080 = vsel %vm3527, %v5005, 0
    %v5083 = vsel %vm3527, %v5006, 0
    %v5086 = vsel %vm3527, %v5007, 0
    %v5089 = vsel %vm3527, %v5008, 0
    %v5092 = vsel %vm3527, %v5009, 0
    %v5095 = vsel %vm3527, %v5010, 0
    %v5098 = vsel %vm3527, %v5011, 0
    %v5101 = vsel %vm3527, %v5012, 0
    %v5104 = vsel %vm3527, %v5013, 0
    %v5107 = vsel %vm3527, %v5014, 0
    %v5110 = vsel %vm3527, %v5015, 0
    %5112 = vmatprep.subr.mxu0 0.0
    %5113 = vmatpush1.msra.mxu0 %v3511
    %5114 = vmatprep.subr.mxu0 0.0
    %5115 = vmatpush1.msra.mxu0 %v3512
    %5116 = vmatprep.subr.mxu0 0.0
    %5117 = vmatpush1.msra.mxu0 %v3513
    %5118 = vmatprep.subr.mxu0 0.0
    %5119 = vmatpush1.msra.mxu0 %v3514
    %5120 = vmatprep.subr.mxu0 0.0
    %5121 = vmatpush1.msra.mxu0 %v3515
    %5122 = vmatprep.subr.mxu0 0.0
    %5123 = vmatpush1.msra.mxu0 %v3516
    %5124 = vmatprep.subr.mxu0 0.0
    %5125 = vmatpush1.msra.mxu0 %v3517
    %5126 = vmatprep.subr.mxu0 0.0
    %5127 = vmatpush1.msra.mxu0 %v3518
    %5128 = vmatprep.subr.mxu0 0.0
    %5129 = vmatpush1.msra.mxu0 0.0
    %5130 = vmatprep.subr.mxu0 0.0
    %5131 = vmatpush1.msra.mxu0 0.0
    %5132 = vmatprep.subr.mxu0 0.0
    %5133 = vmatpush1.msra.mxu0 0.0
    %5134 = vmatprep.subr.mxu0 0.0
    %5135 = vmatpush1.msra.mxu0 0.0
    %5136 = vmatprep.subr.mxu0 0.0
    %5137 = vmatpush1.msra.mxu0 0.0
    %5138 = vmatprep.subr.mxu0 0.0
    %5139 = vmatpush1.msra.mxu0 0.0
    %5140 = vmatprep.subr.mxu0 0.0
    %5141 = vmatpush1.msra.mxu0 0.0
    %5142 = vmatprep.subr.mxu0 0.0
    %5143 = vmatpush1.msra.mxu0 0.0
    %5144 = vmatprep.subr.mxu0 0.0
    %5145 = vmatpush1.msra.mxu0 0.0
    %5146 = vmatprep.subr.mxu0 0.0
    %5147 = vmatpush1.msra.mxu0 0.0
    %5148 = vmatprep.subr.mxu0 0.0
    %5149 = vmatpush1.msra.mxu0 0.0
    %5150 = vmatprep.subr.mxu0 0.0
    %5151 = vmatpush1.msra.mxu0 0.0
    %5152 = vmatprep.subr.mxu0 0.0
    %5153 = vmatpush1.msra.mxu0 0.0
    %5154 = vmatprep.subr.mxu0 0.0
    %5155 = vmatpush1.msra.mxu0 0.0
    %5156 = vmatprep.subr.mxu0 0.0
    %5157 = vmatpush1.msra.mxu0 0.0
    %5158 = vmatprep.subr.mxu0 0.0
    %5159 = vmatpush1.msra.mxu0 0.0
    %5160 = vmatprep.subr.mxu0 0.0
    %5161 = vmatpush1.msra.mxu0 0.0
    %5162 = vmatprep.subr.mxu0 0.0
    %5163 = vmatpush1.msra.mxu0 0.0
    %5164 = vmatprep.subr.mxu0 0.0
    %5165 = vmatpush1.msra.mxu0 0.0
    %5166 = vmatprep.subr.mxu0 0.0
    %5167 = vmatpush1.msra.mxu0 0.0
    %5168 = vmatprep.subr.mxu0 0.0
    %5169 = vmatpush1.msra.mxu0 0.0
    %5170 = vmatprep.subr.mxu0 0.0
    %5171 = vmatpush1.msra.mxu0 0.0
    %5172 = vmatprep.subr.mxu0 0.0
    %5173 = vmatpush1.msra.mxu0 0.0
    %5174 = vmatprep.subr.mxu0 0.0
    %5175 = vmatpush1.msra.mxu0 0.0
    %5176 = vmatprep.mubr.f32.mxu0 0.0
    %5177 = vmatmul.mubr.f32.gmra.mrb[0].mxu0 %v5017
    %v5178 = vpop.f32.mrb[0].mxu0
    %v5179 = vadd.f32 0.0, %v5178
    %v5180 = vpop.f32.mrb[0].mxu0
    %5181 = vmatprep.mubr.f32.mxu0 0.0
    %5182 = vmatmul.mubr.f32.gmra.mrb[0].mxu0 %v5020
    %v5183 = vpop.f32.mrb[0].mxu0
    %v5184 = vadd.f32 0.0, %v5183
    %v5185 = vpop.f32.mrb[0].mxu0
    %5186 = vmatprep.mubr.f32.mxu0 0.0
    %5187 = vmatmul.mubr.f32.gmra.mrb[0].mxu0 %v5023
    %v5188 = vpop.f32.mrb[0].mxu0
    %v5189 = vadd.f32 0.0, %v5188
    %v5190 = vpop.f32.mrb[0].mxu0
    %5191 = vmatprep.mubr.f32.mxu0 0.0
    %5192 = vmatmul.mubr.f32.gmra.mrb[0].mxu0 %v5026
    %v5193 = vpop.f32.mrb[0].mxu0
    %v5194 = vadd.f32 0.0, %v5193
    %v5195 = vpop.f32.mrb[0].mxu0
    %5196 = vmatprep.mubr.f32.mxu0 0.0
    %5197 = vmatmul.mubr.f32.gmra.mrb[0].mxu0 %v5029
    %v5198 = vpop.f32.mrb[0].mxu0
    %v5199 = vadd.f32 0.0, %v5198
    %v5200 = vpop.f32.mrb[0].mxu0
    %5201 = vmatprep.mubr.f32.mxu0 0.0
    %5202 = vmatmul.mubr.f32.gmra.mrb[0].mxu0 %v5032
    %v5203 = vpop.f32.mrb[0].mxu0
    %v5204 = vadd.f32 0.0, %v5203
    %v5205 = vpop.f32.mrb[0].mxu0
    %5206 = vmatprep.mubr.f32.mxu0 0.0
    %5207 = vmatmul.mubr.f32.gmra.mrb[0].mxu0 %v5035
    %v5208 = vpop.f32.mrb[0].mxu0
    %v5209 = vadd.f32 0.0, %v5208
    %v5210 = vpop.f32.mrb[0].mxu0
    %5211 = vmatprep.mubr.f32.mxu0 0.0
    %5212 = vmatmul.mubr.f32.gmra.mrb[0].mxu0 %v5038
    %v5213 = vpop.f32.mrb[0].mxu0
    %v5214 = vadd.f32 0.0, %v5213
    %v5215 = vpop.f32.mrb[0].mxu0
    %5216 = vmatprep.mubr.f32.mxu0 0.0
    %5217 = vmatmul.mubr.f32.gmra.mrb[0].mxu0 %v5041
    %v5218 = vpop.f32.mrb[0].mxu0
    %v5219 = vadd.f32 0.0, %v5218
    %v5220 = vpop.f32.mrb[0].mxu0
    %5221 = vmatprep.mubr.f32.mxu0 0.0
    %5222 = vmatmul.mubr.f32.gmra.mrb[0].mxu0 %v5044
    %v5223 = vpop.f32.mrb[0].mxu0
    %v5224 = vadd.f32 0.0, %v5223
    %v5225 = vpop.f32.mrb[0].mxu0
    %5226 = vmatprep.mubr.f32.mxu0 0.0
    %5227 = vmatmul.mubr.f32.gmra.mrb[0].mxu0 %v5047
    %v5228 = vpop.f32.mrb[0].mxu0
    %v5229 = vadd.f32 0.0, %v5228
    %v5230 = vpop.f32.mrb[0].mxu0
    %5231 = vmatprep.mubr.f32.mxu0 0.0
    %5232 = vmatmul.mubr.f32.gmra.mrb[0].mxu0 %v5050
    %v5233 = vpop.f32.mrb[0].mxu0
    %v5234 = vadd.f32 0.0, %v5233
    %v5235 = vpop.f32.mrb[0].mxu0
    %5236 = vmatprep.mubr.f32.mxu0 0.0
    %5237 = vmatmul.mubr.f32.gmra.mrb[0].mxu0 %v5053
    %v5238 = vpop.f32.mrb[0].mxu0
    %v5239 = vadd.f32 0.0, %v5238
    %v5240 = vpop.f32.mrb[0].mxu0
    %5241 = vmatprep.mubr.f32.mxu0 0.0
    %5242 = vmatmul.mubr.f32.gmra.mrb[0].mxu0 %v5056
    %v5243 = vpop.f32.mrb[0].mxu0
    %v5244 = vadd.f32 0.0, %v5243
    %v5245 = vpop.f32.mrb[0].mxu0
    %5246 = vmatprep.mubr.f32.mxu0 0.0
    %5247 = vmatmul.mubr.f32.gmra.mrb[0].mxu0 %v5059
    %v5248 = vpop.f32.mrb[0].mxu0
    %v5249 = vadd.f32 0.0, %v5248
    %v5250 = vpop.f32.mrb[0].mxu0
    %5251 = vmatprep.mubr.f32.mxu0 0.0
    %5252 = vmatmul.mubr.f32.gmra.mrb[0].mxu0 %v5062
    %v5253 = vpop.f32.mrb[0].mxu0
    %v5254 = vadd.f32 0.0, %v5253
    %v5255 = vpop.f32.mrb[0].mxu0
    %5256 = vmatprep.mubr.f32.mxu0 0.0
    %5257 = vmatmul.mubr.f32.gmra.mrb[0].mxu0 %v5065
    %v5258 = vpop.f32.mrb[0].mxu0
    %v5259 = vadd.f32 0.0, %v5258
    %v5260 = vpop.f32.mrb[0].mxu0
    %5261 = vmatprep.mubr.f32.mxu0 0.0
    %5262 = vmatmul.mubr.f32.gmra.mrb[0].mxu0 %v5068
    %v5263 = vpop.f32.mrb[0].mxu0
    %v5264 = vadd.f32 0.0, %v5263
    %v5265 = vpop.f32.mrb[0].mxu0
    %5266 = vmatprep.mubr.f32.mxu0 0.0
    %5267 = vmatmul.mubr.f32.gmra.mrb[0].mxu0 %v5071
    %v5268 = vpop.f32.mrb[0].mxu0
    %v5269 = vadd.f32 0.0, %v5268
    %v5270 = vpop.f32.mrb[0].mxu0
    %5271 = vmatprep.mubr.f32.mxu0 0.0
    %5272 = vmatmul.mubr.f32.gmra.mrb[0].mxu0 %v5074
    %v5273 = vpop.f32.mrb[0].mxu0
    %v5274 = vadd.f32 0.0, %v5273
    %v5275 = vpop.f32.mrb[0].mxu0
    %5276 = vmatprep.mubr.f32.mxu0 0.0
    %5277 = vmatmul.mubr.f32.gmra.mrb[0].mxu0 %v5077
    %v5278 = vpop.f32.mrb[0].mxu0
    %v5279 = vadd.f32 0.0, %v5278
    %v5280 = vpop.f32.mrb[0].mxu0
    %5281 = vmatprep.mubr.f32.mxu0 0.0
    %5282 = vmatmul.mubr.f32.gmra.mrb[0].mxu0 %v5080
    %v5283 = vpop.f32.mrb[0].mxu0
    %v5284 = vadd.f32 0.0, %v5283
    %v5285 = vpop.f32.mrb[0].mxu0
    %5286 = vmatprep.mubr.f32.mxu0 0.0
    %5287 = vmatmul.mubr.f32.gmra.mrb[0].mxu0 %v5083
    %v5288 = vpop.f32.mrb[0].mxu0
    %v5289 = vadd.f32 0.0, %v5288
    %v5290 = vpop.f32.mrb[0].mxu0
    %5291 = vmatprep.mubr.f32.mxu0 0.0
    %5292 = vmatmul.mubr.f32.gmra.mrb[0].mxu0 %v5086
    %v5293 = vpop.f32.mrb[0].mxu0
    %v5294 = vadd.f32 0.0, %v5293
    %v5295 = vpop.f32.mrb[0].mxu0
    %5296 = vmatprep.mubr.f32.mxu0 0.0
    %5297 = vmatmul.mubr.f32.gmra.mrb[0].mxu0 %v5089
    %v5298 = vpop.f32.mrb[0].mxu0
    %v5299 = vadd.f32 0.0, %v5298
    %v5300 = vpop.f32.mrb[0].mxu0
    %5301 = vmatprep.mubr.f32.mxu0 0.0
    %5302 = vmatmul.mubr.f32.gmra.mrb[0].mxu0 %v5092
    %v5303 = vpop.f32.mrb[0].mxu0
    %v5304 = vadd.f32 0.0, %v5303
    %v5305 = vpop.f32.mrb[0].mxu0
    %5306 = vmatprep.mubr.f32.mxu0 0.0
    %5307 = vmatmul.mubr.f32.gmra.mrb[0].mxu0 %v5095
    %v5308 = vpop.f32.mrb[0].mxu0
    %v5309 = vadd.f32 0.0, %v5308
    %v5310 = vpop.f32.mrb[0].mxu0
    %5311 = vmatprep.mubr.f32.mxu0 0.0
    %5312 = vmatmul.mubr.f32.gmra.mrb[0].mxu0 %v5098
    %v5313 = vpop.f32.mrb[0].mxu0
    %v5314 = vadd.f32 0.0, %v5313
    %v5315 = vpop.f32.mrb[0].mxu0
    %5316 = vmatprep.mubr.f32.mxu0 0.0
    %5317 = vmatmul.mubr.f32.gmra.mrb[0].mxu0 %v5101
    %v5318 = vpop.f32.mrb[0].mxu0
    %v5319 = vadd.f32 0.0, %v5318
    %v5320 = vpop.f32.mrb[0].mxu0
    %5321 = vmatprep.mubr.f32.mxu0 0.0
    %5322 = vmatmul.mubr.f32.gmra.mrb[0].mxu0 %v5104
    %v5323 = vpop.f32.mrb[0].mxu0
    %v5324 = vadd.f32 0.0, %v5323
    %v5325 = vpop.f32.mrb[0].mxu0
    %5326 = vmatprep.mubr.f32.mxu0 0.0
    %5327 = vmatmul.mubr.f32.gmra.mrb[0].mxu0 %v5107
    %v5328 = vpop.f32.mrb[0].mxu0
    %v5329 = vadd.f32 0.0, %v5328
    %v5330 = vpop.f32.mrb[0].mxu0
    %5331 = vmatprep.mubr.f32.mxu0 0.0
    %5332 = vmatmul.mubr.f32.gmra.mrb[0].mxu0 %v5110
    %v5333 = vpop.f32.mrb[0].mxu0
    %v5334 = vadd.f32 0.0, %v5333
    %v5335 = vpop.f32.mrb[0].mxu0
    %5336 = vdwg.mxu0
    %v5337 = vsel %vm3678, %v5179, -inf
    %v5338 = vsel %vm3678, %v5184, -inf
    %v5339 = vsel %vm3678, %v5189, -inf
    %v5340 = vsel %vm3678, %v5194, -inf
    %v5341 = vsel %vm3678, %v5199, -inf
    %v5342 = vmax.f32 %v5337, %v5341
    %v5343 = vsel %vm3678, %v5204, -inf
    %v5344 = vmax.f32 %v5338, %v5343
    %v5345 = vsel %vm3678, %v5209, -inf
    %v5346 = vmax.f32 %v5339, %v5345
    %v5347 = vsel %vm3678, %v5214, -inf
    %v5348 = vmax.f32 %v5340, %v5347
    %v5349 = vsel %vm3678, %v5219, -inf
    %v5350 = vmax.f32 %v5342, %v5349
    %v5351 = vsel %vm3678, %v5224, -inf
    %v5352 = vmax.f32 %v5344, %v5351
    %v5353 = vsel %vm3678, %v5229, -inf
    %v5354 = vmax.f32 %v5346, %v5353
    %v5355 = vsel %vm3678, %v5234, -inf
    %v5356 = vmax.f32 %v5348, %v5355
    %v5357 = vsel %vm3678, %v5239, -inf
    %v5358 = vmax.f32 %v5350, %v5357
    %v5359 = vsel %vm3678, %v5244, -inf
    %v5360 = vmax.f32 %v5352, %v5359
    %v5361 = vsel %vm3678, %v5249, -inf
    %v5362 = vmax.f32 %v5354, %v5361
    %v5363 = vsel %vm3678, %v5254, -inf
    %v5364 = vmax.f32 %v5356, %v5363
    %v5365 = vsel %vm3678, %v5259, -inf
    %v5366 = vmax.f32 %v5358, %v5365
    %v5367 = vsel %vm3678, %v5264, -inf
    %v5368 = vmax.f32 %v5360, %v5367
    %v5369 = vsel %vm3678, %v5269, -inf
    %v5370 = vmax.f32 %v5362, %v5369
    %v5371 = vsel %vm3678, %v5274, -inf
    %v5372 = vmax.f32 %v5364, %v5371
    %v5373 = vsel %vm3678, %v5279, -inf
    %v5374 = vmax.f32 %v5366, %v5373
    %v5375 = vsel %vm3678, %v5284, -inf
    %v5376 = vmax.f32 %v5368, %v5375
    %v5377 = vsel %vm3678, %v5289, -inf
    %v5378 = vmax.f32 %v5370, %v5377
    %v5379 = vsel %vm3678, %v5294, -inf
    %v5380 = vmax.f32 %v5372, %v5379
    %v5381 = vsel %vm3678, %v5299, -inf
    %v5382 = vmax.f32 %v5374, %v5381
    %v5383 = vsel %vm3678, %v5304, -inf
    %v5384 = vmax.f32 %v5376, %v5383
    %v5385 = vsel %vm3678, %v5309, -inf
    %v5386 = vmax.f32 %v5378, %v5385
    %v5387 = vsel %vm3678, %v5314, -inf
    %v5388 = vmax.f32 %v5380, %v5387
    %v5389 = vsel %vm3678, %v5319, -inf
    %v5390 = vmax.f32 %v5382, %v5389
    %v5391 = vsel %vm3678, %v5324, -inf
    %v5392 = vmax.f32 %v5384, %v5391
    %v5393 = vsel %vm3678, %v5329, -inf
    %v5394 = vmax.f32 %v5386, %v5393
    %v5395 = vsel %vm3678, %v5334, -inf
    %v5396 = vmax.f32 %v5388, %v5395
    %v5397 = vmax.f32 %v5390, %v5392
    %v5398 = vmax.f32 %v5394, %v5396
    %v5399 = vmax.f32 %v5397, %v5398
    %v5400 = vsub.f32 %v5179, %v5399
    %v5401 = vsub.f32 %v5184, %v5399
    %v5402 = vsub.f32 %v5189, %v5399
    %v5403 = vsub.f32 %v5194, %v5399
    %v5404 = vsub.f32 %v5199, %v5399
    %v5405 = vsub.f32 %v5204, %v5399
    %v5406 = vsub.f32 %v5209, %v5399
    %v5407 = vsub.f32 %v5214, %v5399
    %v5408 = vsub.f32 %v5219, %v5399
    %v5409 = vsub.f32 %v5224, %v5399
    %v5410 = vsub.f32 %v5229, %v5399
    %v5411 = vsub.f32 %v5234, %v5399
    %v5412 = vsub.f32 %v5239, %v5399
    %v5413 = vsub.f32 %v5244, %v5399
    %v5414 = vsub.f32 %v5249, %v5399
    %v5415 = vsub.f32 %v5254, %v5399
    %v5416 = vsub.f32 %v5259, %v5399
    %v5417 = vsub.f32 %v5264, %v5399
    %v5418 = vsub.f32 %v5269, %v5399
    %v5419 = vsub.f32 %v5274, %v5399
    %v5420 = vsub.f32 %v5279, %v5399
    %v5421 = vsub.f32 %v5284, %v5399
    %v5422 = vsub.f32 %v5289, %v5399
    %v5423 = vsub.f32 %v5294, %v5399
    %v5424 = vsub.f32 %v5299, %v5399
    %v5425 = vsub.f32 %v5304, %v5399
    %v5426 = vsub.f32 %v5309, %v5399
    %v5427 = vsub.f32 %v5314, %v5399
    %v5428 = vsub.f32 %v5319, %v5399
    %v5429 = vsub.f32 %v5324, %v5399
    %v5430 = vsub.f32 %v5329, %v5399
    %v5431 = vsub.f32 %v5334, %v5399
    %v5432 = vmul.f32 %v5400, 1.442695
    %v5433 = vpow.pop %v5432
    %v5434 = vmul.f32 %v5401, 1.442695
    %v5435 = vpow.pop %v5434
    %v5436 = vmul.f32 %v5402, 1.442695
    %v5437 = vpow.pop %v5436
    %v5438 = vmul.f32 %v5403, 1.442695
    %v5439 = vpow.pop %v5438
    %v5440 = vmul.f32 %v5404, 1.442695
    %v5441 = vpow.pop %v5440
    %v5442 = vmul.f32 %v5405, 1.442695
    %v5443 = vpow.pop %v5442
    %v5444 = vmul.f32 %v5406, 1.442695
    %v5445 = vpow.pop %v5444
    %v5446 = vmul.f32 %v5407, 1.442695
    %v5447 = vpow.pop %v5446
    %v5448 = vmul.f32 %v5408, 1.442695
    %v5449 = vpow.pop %v5448
    %v5450 = vmul.f32 %v5409, 1.442695
    %v5451 = vpow.pop %v5450
    %v5452 = vmul.f32 %v5410, 1.442695
    %v5453 = vpow.pop %v5452
    %v5454 = vmul.f32 %v5411, 1.442695
    %v5455 = vpow.pop %v5454
    %v5456 = vmul.f32 %v5412, 1.442695
    %v5457 = vpow.pop %v5456
    %v5458 = vmul.f32 %v5413, 1.442695
    %v5459 = vpow.pop %v5458
    %v5460 = vmul.f32 %v5414, 1.442695
    %v5461 = vpow.pop %v5460
    %v5462 = vmul.f32 %v5415, 1.442695
    %v5463 = vpow.pop %v5462
    %v5464 = vmul.f32 %v5416, 1.442695
    %v5465 = vpow.pop %v5464
    %v5466 = vmul.f32 %v5417, 1.442695
    %v5467 = vpow.pop %v5466
    %v5468 = vmul.f32 %v5418, 1.442695
    %v5469 = vpow.pop %v5468
    %v5470 = vmul.f32 %v5419, 1.442695
    %v5471 = vpow.pop %v5470
    %v5472 = vmul.f32 %v5420, 1.442695
    %v5473 = vpow.pop %v5472
    %v5474 = vmul.f32 %v5421, 1.442695
    %v5475 = vpow.pop %v5474
    %v5476 = vmul.f32 %v5422, 1.442695
    %v5477 = vpow.pop %v5476
    %v5478 = vmul.f32 %v5423, 1.442695
    %v5479 = vpow.pop %v5478
    %v5480 = vmul.f32 %v5424, 1.442695
    %v5481 = vpow.pop %v5480
    %v5482 = vmul.f32 %v5425, 1.442695
    %v5483 = vpow.pop %v5482
    %v5484 = vmul.f32 %v5426, 1.442695
    %v5485 = vpow.pop %v5484
    %v5486 = vmul.f32 %v5427, 1.442695
    %v5487 = vpow.pop %v5486
    %v5488 = vmul.f32 %v5428, 1.442695
    %v5489 = vpow.pop %v5488
    %v5490 = vmul.f32 %v5429, 1.442695
    %v5491 = vpow.pop %v5490
    %v5492 = vmul.f32 %v5430, 1.442695
    %v5493 = vpow.pop %v5492
    %v5494 = vmul.f32 %v5431, 1.442695
    %v5495 = vpow.pop %v5494
    %v5496 = vsel %vm3678, %v5433, 0.0
    %v5497 = vsel %vm3678, %v5435, 0.0
    %v5498 = vadd.f32 %v5496, %v5497
    %v5499 = vsel %vm3678, %v5437, 0.0
    %v5500 = vadd.f32 %v5498, %v5499
    %v5501 = vsel %vm3678, %v5439, 0.0
    %v5502 = vadd.f32 %v5500, %v5501
    %v5503 = vsel %vm3678, %v5441, 0.0
    %v5504 = vadd.f32 %v5502, %v5503
    %v5505 = vsel %vm3678, %v5443, 0.0
    %v5506 = vadd.f32 %v5504, %v5505
    %v5507 = vsel %vm3678, %v5445, 0.0
    %v5508 = vadd.f32 %v5506, %v5507
    %v5509 = vsel %vm3678, %v5447, 0.0
    %v5510 = vadd.f32 %v5508, %v5509
    %v5511 = vsel %vm3678, %v5449, 0.0
    %v5512 = vadd.f32 %v5510, %v5511
    %v5513 = vsel %vm3678, %v5451, 0.0
    %v5514 = vadd.f32 %v5512, %v5513
    %v5515 = vsel %vm3678, %v5453, 0.0
    %v5516 = vadd.f32 %v5514, %v5515
    %v5517 = vsel %vm3678, %v5455, 0.0
    %v5518 = vadd.f32 %v5516, %v5517
    %v5519 = vsel %vm3678, %v5457, 0.0
    %v5520 = vadd.f32 %v5518, %v5519
    %v5521 = vsel %vm3678, %v5459, 0.0
    %v5522 = vadd.f32 %v5520, %v5521
    %v5523 = vsel %vm3678, %v5461, 0.0
    %v5524 = vadd.f32 %v5522, %v5523
    %v5525 = vsel %vm3678, %v5463, 0.0
    %v5526 = vadd.f32 %v5524, %v5525
    %v5527 = vsel %vm3678, %v5465, 0.0
    %v5528 = vadd.f32 %v5526, %v5527
    %v5529 = vsel %vm3678, %v5467, 0.0
    %v5530 = vadd.f32 %v5528, %v5529
    %v5531 = vsel %vm3678, %v5469, 0.0
    %v5532 = vadd.f32 %v5530, %v5531
    %v5533 = vsel %vm3678, %v5471, 0.0
    %v5534 = vadd.f32 %v5532, %v5533
    %v5535 = vsel %vm3678, %v5473, 0.0
    %v5536 = vadd.f32 %v5534, %v5535
    %v5537 = vsel %vm3678, %v5475, 0.0
    %v5538 = vadd.f32 %v5536, %v5537
    %v5539 = vsel %vm3678, %v5477, 0.0
    %v5540 = vadd.f32 %v5538, %v5539
    %v5541 = vsel %vm3678, %v5479, 0.0
    %v5542 = vadd.f32 %v5540, %v5541
    %v5543 = vsel %vm3678, %v5481, 0.0
    %v5544 = vadd.f32 %v5542, %v5543
    %v5545 = vsel %vm3678, %v5483, 0.0
    %v5546 = vadd.f32 %v5544, %v5545
    %v5547 = vsel %vm3678, %v5485, 0.0
    %v5548 = vadd.f32 %v5546, %v5547
    %v5549 = vsel %vm3678, %v5487, 0.0
    %v5550 = vadd.f32 %v5548, %v5549
    %v5551 = vsel %vm3678, %v5489, 0.0
    %v5552 = vadd.f32 %v5550, %v5551
    %v5553 = vsel %vm3678, %v5491, 0.0
    %v5554 = vadd.f32 %v5552, %v5553
    %v5555 = vsel %vm3678, %v5493, 0.0
    %v5556 = vadd.f32 %v5554, %v5555
    %v5557 = vsel %vm3678, %v5495, 0.0
    %v5558 = vadd.f32 %v5556, %v5557
    %v5560 = vsel %vm3678, %v5433, 0
    %v5563 = vsel %vm3678, %v5435, 0
    %v5566 = vsel %vm3678, %v5437, 0
    %v5569 = vsel %vm3678, %v5439, 0
    %v5572 = vsel %vm3678, %v5441, 0
    %v5575 = vsel %vm3678, %v5443, 0
    %v5578 = vsel %vm3678, %v5445, 0
    %v5581 = vsel %vm3678, %v5447, 0
    %v5584 = vsel %vm3678, %v5449, 0
    %v5587 = vsel %vm3678, %v5451, 0
    %v5590 = vsel %vm3678, %v5453, 0
    %v5593 = vsel %vm3678, %v5455, 0
    %v5596 = vsel %vm3678, %v5457, 0
    %v5599 = vsel %vm3678, %v5459, 0
    %v5602 = vsel %vm3678, %v5461, 0
    %v5605 = vsel %vm3678, %v5463, 0
    %v5608 = vsel %vm3678, %v5465, 0
    %v5611 = vsel %vm3678, %v5467, 0
    %v5614 = vsel %vm3678, %v5469, 0
    %v5617 = vsel %vm3678, %v5471, 0
    %v5620 = vsel %vm3678, %v5473, 0
    %v5623 = vsel %vm3678, %v5475, 0
    %v5626 = vsel %vm3678, %v5477, 0
    %v5629 = vsel %vm3678, %v5479, 0
    %v5632 = vsel %vm3678, %v5481, 0
    %v5635 = vsel %vm3678, %v5483, 0
    %v5638 = vsel %vm3678, %v5485, 0
    %v5641 = vsel %vm3678, %v5487, 0
    %v5644 = vsel %vm3678, %v5489, 0
    %v5647 = vsel %vm3678, %v5491, 0
    %v5650 = vsel %vm3678, %v5493, 0
    %v5653 = vsel %vm3678, %v5495, 0
    %5655 = vmatprep.subr.mxu0 0.0
    %5656 = vmatpush1.msra.mxu0 %v3684
    %5657 = vmatprep.subr.mxu0 0.0
    %5658 = vmatpush1.msra.mxu0 0.0
    %5659 = vmatprep.subr.mxu0 0.0
    %5660 = vmatpush1.msra.mxu0 0.0
    %5661 = vmatprep.subr.mxu0 0.0
    %5662 = vmatpush1.msra.mxu0 0.0
    %5663 = vmatprep.subr.mxu0 0.0
    %5664 = vmatpush1.msra.mxu0 0.0
    %5665 = vmatprep.subr.mxu0 0.0
    %5666 = vmatpush1.msra.mxu0 0.0
    %5667 = vmatprep.subr.mxu0 0.0
    %5668 = vmatpush1.msra.mxu0 0.0
    %5669 = vmatprep.subr.mxu0 0.0
    %5670 = vmatpush1.msra.mxu0 0.0
    %5671 = vmatprep.subr.mxu0 0.0
    %5672 = vmatpush1.msra.mxu0 0.0
    %5673 = vmatprep.subr.mxu0 0.0
    %5674 = vmatpush1.msra.mxu0 0.0
    %5675 = vmatprep.subr.mxu0 0.0
    %5676 = vmatpush1.msra.mxu0 0.0
    %5677 = vmatprep.subr.mxu0 0.0
    %5678 = vmatpush1.msra.mxu0 0.0
    %5679 = vmatprep.subr.mxu0 0.0
    %5680 = vmatpush1.msra.mxu0 0.0
    %5681 = vmatprep.subr.mxu0 0.0
    %5682 = vmatpush1.msra.mxu0 0.0
    %5683 = vmatprep.subr.mxu0 0.0
    %5684 = vmatpush1.msra.mxu0 0.0
    %5685 = vmatprep.subr.mxu0 0.0
    %5686 = vmatpush1.msra.mxu0 0.0
    %5687 = vmatprep.subr.mxu0 0.0
    %5688 = vmatpush1.msra.mxu0 0.0
    %5689 = vmatprep.subr.mxu0 0.0
    %5690 = vmatpush1.msra.mxu0 0.0
    %5691 = vmatprep.subr.mxu0 0.0
    %5692 = vmatpush1.msra.mxu0 0.0
    %5693 = vmatprep.subr.mxu0 0.0
    %5694 = vmatpush1.msra.mxu0 0.0
    %5695 = vmatprep.subr.mxu0 0.0
    %5696 = vmatpush1.msra.mxu0 0.0
    %5697 = vmatprep.subr.mxu0 0.0
    %5698 = vmatpush1.msra.mxu0 0.0
    %5699 = vmatprep.subr.mxu0 0.0
    %5700 = vmatpush1.msra.mxu0 0.0
    %5701 = vmatprep.subr.mxu0 0.0
    %5702 = vmatpush1.msra.mxu0 0.0
    %5703 = vmatprep.subr.mxu0 0.0
    %5704 = vmatpush1.msra.mxu0 0.0
    %5705 = vmatprep.subr.mxu0 0.0
    %5706 = vmatpush1.msra.mxu0 0.0
    %5707 = vmatprep.subr.mxu0 0.0
    %5708 = vmatpush1.msra.mxu0 0.0
    %5709 = vmatprep.subr.mxu0 0.0
    %5710 = vmatpush1.msra.mxu0 0.0
    %5711 = vmatprep.subr.mxu0 0.0
    %5712 = vmatpush1.msra.mxu0 0.0
    %5713 = vmatprep.subr.mxu0 0.0
    %5714 = vmatpush1.msra.mxu0 0.0
    %5715 = vmatprep.subr.mxu0 0.0
    %5716 = vmatpush1.msra.mxu0 0.0
    %5717 = vmatprep.subr.mxu0 0.0
    %5718 = vmatpush1.msra.mxu0 0.0
    %5719 = vmatprep.mubr.f32.mxu0 0.0
    %5720 = vmatmul.mubr.f32.gmra.mrb[0].mxu0 %v5560
    %v5721 = vpop.f32.mrb[0].mxu0
    %v5722 = vadd.f32 0.0, %v5721
    %v5723 = vpop.f32.mrb[0].mxu0
    %5724 = vmatprep.mubr.f32.mxu0 0.0
    %5725 = vmatmul.mubr.f32.gmra.mrb[0].mxu0 %v5563
    %v5726 = vpop.f32.mrb[0].mxu0
    %v5727 = vadd.f32 0.0, %v5726
    %v5728 = vpop.f32.mrb[0].mxu0
    %5729 = vmatprep.mubr.f32.mxu0 0.0
    %5730 = vmatmul.mubr.f32.gmra.mrb[0].mxu0 %v5566
    %v5731 = vpop.f32.mrb[0].mxu0
    %v5732 = vadd.f32 0.0, %v5731
    %v5733 = vpop.f32.mrb[0].mxu0
    %5734 = vmatprep.mubr.f32.mxu0 0.0
    %5735 = vmatmul.mubr.f32.gmra.mrb[0].mxu0 %v5569
    %v5736 = vpop.f32.mrb[0].mxu0
    %v5737 = vadd.f32 0.0, %v5736
    %v5738 = vpop.f32.mrb[0].mxu0
    %5739 = vmatprep.mubr.f32.mxu0 0.0
    %5740 = vmatmul.mubr.f32.gmra.mrb[0].mxu0 %v5572
    %v5741 = vpop.f32.mrb[0].mxu0
    %v5742 = vadd.f32 0.0, %v5741
    %v5743 = vpop.f32.mrb[0].mxu0
    %5744 = vmatprep.mubr.f32.mxu0 0.0
    %5745 = vmatmul.mubr.f32.gmra.mrb[0].mxu0 %v5575
    %v5746 = vpop.f32.mrb[0].mxu0
    %v5747 = vadd.f32 0.0, %v5746
    %v5748 = vpop.f32.mrb[0].mxu0
    %5749 = vmatprep.mubr.f32.mxu0 0.0
    %5750 = vmatmul.mubr.f32.gmra.mrb[0].mxu0 %v5578
    %v5751 = vpop.f32.mrb[0].mxu0
    %v5752 = vadd.f32 0.0, %v5751
    %v5753 = vpop.f32.mrb[0].mxu0
    %5754 = vmatprep.mubr.f32.mxu0 0.0
    %5755 = vmatmul.mubr.f32.gmra.mrb[0].mxu0 %v5581
    %v5756 = vpop.f32.mrb[0].mxu0
    %v5757 = vadd.f32 0.0, %v5756
    %v5758 = vpop.f32.mrb[0].mxu0
    %5759 = vmatprep.mubr.f32.mxu0 0.0
    %5760 = vmatmul.mubr.f32.gmra.mrb[0].mxu0 %v5584
    %v5761 = vpop.f32.mrb[0].mxu0
    %v5762 = vadd.f32 0.0, %v5761
    %v5763 = vpop.f32.mrb[0].mxu0
    %5764 = vmatprep.mubr.f32.mxu0 0.0
    %5765 = vmatmul.mubr.f32.gmra.mrb[0].mxu0 %v5587
    %v5766 = vpop.f32.mrb[0].mxu0
    %v5767 = vadd.f32 0.0, %v5766
    %v5768 = vpop.f32.mrb[0].mxu0
    %5769 = vmatprep.mubr.f32.mxu0 0.0
    %5770 = vmatmul.mubr.f32.gmra.mrb[0].mxu0 %v5590
    %v5771 = vpop.f32.mrb[0].mxu0
    %v5772 = vadd.f32 0.0, %v5771
    %v5773 = vpop.f32.mrb[0].mxu0
    %5774 = vmatprep.mubr.f32.mxu0 0.0
    %5775 = vmatmul.mubr.f32.gmra.mrb[0].mxu0 %v5593
    %v5776 = vpop.f32.mrb[0].mxu0
    %v5777 = vadd.f32 0.0, %v5776
    %v5778 = vpop.f32.mrb[0].mxu0
    %5779 = vmatprep.mubr.f32.mxu0 0.0
    %5780 = vmatmul.mubr.f32.gmra.mrb[0].mxu0 %v5596
    %v5781 = vpop.f32.mrb[0].mxu0
    %v5782 = vadd.f32 0.0, %v5781
    %v5783 = vpop.f32.mrb[0].mxu0
    %5784 = vmatprep.mubr.f32.mxu0 0.0
    %5785 = vmatmul.mubr.f32.gmra.mrb[0].mxu0 %v5599
    %v5786 = vpop.f32.mrb[0].mxu0
    %v5787 = vadd.f32 0.0, %v5786
    %v5788 = vpop.f32.mrb[0].mxu0
    %5789 = vmatprep.mubr.f32.mxu0 0.0
    %5790 = vmatmul.mubr.f32.gmra.mrb[0].mxu0 %v5602
    %v5791 = vpop.f32.mrb[0].mxu0
    %v5792 = vadd.f32 0.0, %v5791
    %v5793 = vpop.f32.mrb[0].mxu0
    %5794 = vmatprep.mubr.f32.mxu0 0.0
    %5795 = vmatmul.mubr.f32.gmra.mrb[0].mxu0 %v5605
    %v5796 = vpop.f32.mrb[0].mxu0
    %v5797 = vadd.f32 0.0, %v5796
    %v5798 = vpop.f32.mrb[0].mxu0
    %5799 = vmatprep.mubr.f32.mxu0 0.0
    %5800 = vmatmul.mubr.f32.gmra.mrb[0].mxu0 %v5608
    %v5801 = vpop.f32.mrb[0].mxu0
    %v5802 = vadd.f32 0.0, %v5801
    %v5803 = vpop.f32.mrb[0].mxu0
    %5804 = vmatprep.mubr.f32.mxu0 0.0
    %5805 = vmatmul.mubr.f32.gmra.mrb[0].mxu0 %v5611
    %v5806 = vpop.f32.mrb[0].mxu0
    %v5807 = vadd.f32 0.0, %v5806
    %v5808 = vpop.f32.mrb[0].mxu0
    %5809 = vmatprep.mubr.f32.mxu0 0.0
    %5810 = vmatmul.mubr.f32.gmra.mrb[0].mxu0 %v5614
    %v5811 = vpop.f32.mrb[0].mxu0
    %v5812 = vadd.f32 0.0, %v5811
    %v5813 = vpop.f32.mrb[0].mxu0
    %5814 = vmatprep.mubr.f32.mxu0 0.0
    %5815 = vmatmul.mubr.f32.gmra.mrb[0].mxu0 %v5617
    %v5816 = vpop.f32.mrb[0].mxu0
    %v5817 = vadd.f32 0.0, %v5816
    %v5818 = vpop.f32.mrb[0].mxu0
    %5819 = vmatprep.mubr.f32.mxu0 0.0
    %5820 = vmatmul.mubr.f32.gmra.mrb[0].mxu0 %v5620
    %v5821 = vpop.f32.mrb[0].mxu0
    %v5822 = vadd.f32 0.0, %v5821
    %v5823 = vpop.f32.mrb[0].mxu0
    %5824 = vmatprep.mubr.f32.mxu0 0.0
    %5825 = vmatmul.mubr.f32.gmra.mrb[0].mxu0 %v5623
    %v5826 = vpop.f32.mrb[0].mxu0
    %v5827 = vadd.f32 0.0, %v5826
    %v5828 = vpop.f32.mrb[0].mxu0
    %5829 = vmatprep.mubr.f32.mxu0 0.0
    %5830 = vmatmul.mubr.f32.gmra.mrb[0].mxu0 %v5626
    %v5831 = vpop.f32.mrb[0].mxu0
    %v5832 = vadd.f32 0.0, %v5831
    %v5833 = vpop.f32.mrb[0].mxu0
    %5834 = vmatprep.mubr.f32.mxu0 0.0
    %5835 = vmatmul.mubr.f32.gmra.mrb[0].mxu0 %v5629
    %v5836 = vpop.f32.mrb[0].mxu0
    %v5837 = vadd.f32 0.0, %v5836
    %v5838 = vpop.f32.mrb[0].mxu0
    %5839 = vmatprep.mubr.f32.mxu0 0.0
    %5840 = vmatmul.mubr.f32.gmra.mrb[0].mxu0 %v5632
    %v5841 = vpop.f32.mrb[0].mxu0
    %v5842 = vadd.f32 0.0, %v5841
    %v5843 = vpop.f32.mrb[0].mxu0
    %5844 = vmatprep.mubr.f32.mxu0 0.0
    %5845 = vmatmul.mubr.f32.gmra.mrb[0].mxu0 %v5635
    %v5846 = vpop.f32.mrb[0].mxu0
    %v5847 = vadd.f32 0.0, %v5846
    %v5848 = vpop.f32.mrb[0].mxu0
    %5849 = vmatprep.mubr.f32.mxu0 0.0
    %5850 = vmatmul.mubr.f32.gmra.mrb[0].mxu0 %v5638
    %v5851 = vpop.f32.mrb[0].mxu0
    %v5852 = vadd.f32 0.0, %v5851
    %v5853 = vpop.f32.mrb[0].mxu0
    %5854 = vmatprep.mubr.f32.mxu0 0.0
    %5855 = vmatmul.mubr.f32.gmra.mrb[0].mxu0 %v5641
    %v5856 = vpop.f32.mrb[0].mxu0
    %v5857 = vadd.f32 0.0, %v5856
    %v5858 = vpop.f32.mrb[0].mxu0
    %5859 = vmatprep.mubr.f32.mxu0 0.0
    %5860 = vmatmul.mubr.f32.gmra.mrb[0].mxu0 %v5644
    %v5861 = vpop.f32.mrb[0].mxu0
    %v5862 = vadd.f32 0.0, %v5861
    %v5863 = vpop.f32.mrb[0].mxu0
    %5864 = vmatprep.mubr.f32.mxu0 0.0
    %5865 = vmatmul.mubr.f32.gmra.mrb[0].mxu0 %v5647
    %v5866 = vpop.f32.mrb[0].mxu0
    %v5867 = vadd.f32 0.0, %v5866
    %v5868 = vpop.f32.mrb[0].mxu0
    %5869 = vmatprep.mubr.f32.mxu0 0.0
    %5870 = vmatmul.mubr.f32.gmra.mrb[0].mxu0 %v5650
    %v5871 = vpop.f32.mrb[0].mxu0
    %v5872 = vadd.f32 0.0, %v5871
    %v5873 = vpop.f32.mrb[0].mxu0
    %5874 = vmatprep.mubr.f32.mxu0 0.0
    %5875 = vmatmul.mubr.f32.gmra.mrb[0].mxu0 %v5653
    %v5876 = vpop.f32.mrb[0].mxu0
    %v5877 = vadd.f32 0.0, %v5876
    %v5878 = vpop.f32.mrb[0].mxu0
    %5879 = vdwg.mxu0
    %v5880 = vmul.f32 %v5722, %v207
    %v5881 = vmul.f32 %v5727, %v312
    %v5882 = vmul.f32 %v5732, %v417
    %v5883 = vmul.f32 %v5737, %v522
    %v5884 = vmul.f32 %v5742, %v627
    %v5885 = vmul.f32 %v5747, %v732
    %v5886 = vmul.f32 %v5752, %v837
    %v5887 = vmul.f32 %v5757, %v942
    %v5888 = vmul.f32 %v5762, %v1047
    %v5889 = vmul.f32 %v5767, %v1152
    %v5890 = vmul.f32 %v5772, %v1257
    %v5891 = vmul.f32 %v5777, %v1362
    %v5892 = vmul.f32 %v5782, %v1467
    %v5893 = vmul.f32 %v5787, %v1572
    %v5894 = vmul.f32 %v5792, %v1677
    %v5895 = vmul.f32 %v5797, %v1782
    %v5896 = vmul.f32 %v5802, %v1887
    %v5897 = vmul.f32 %v5807, %v1992
    %v5898 = vmul.f32 %v5812, %v2097
    %v5899 = vmul.f32 %v5817, %v2202
    %v5900 = vmul.f32 %v5822, %v2307
    %v5901 = vmul.f32 %v5827, %v2412
    %v5902 = vmul.f32 %v5832, %v2517
    %v5903 = vmul.f32 %v5837, %v2622
    %v5904 = vmul.f32 %v5842, %v2727
    %v5905 = vmul.f32 %v5847, %v2832
    %v5906 = vmul.f32 %v5852, %v2937
    %v5907 = vmul.f32 %v5857, %v3042
    %v5908 = vmul.f32 %v5862, %v3147
    %v5909 = vmul.f32 %v5867, %v3252
    %v5910 = vmul.f32 %v5872, %v3357
    %v5911 = vmul.f32 %v5877, %v3462
    %v5912 = vsel %vm3527, %v5880, 0.0
    %v5913 = vsel %vm3527, %v5881, 0.0
    %v5914 = vadd.f32 %v5912, %v5913
    %v5915 = vsel %vm3527, %v5882, 0.0
    %v5916 = vadd.f32 %v5914, %v5915
    %v5917 = vsel %vm3527, %v5883, 0.0
    %v5918 = vadd.f32 %v5916, %v5917
    %v5919 = vsel %vm3527, %v5884, 0.0
    %v5920 = vadd.f32 %v5918, %v5919
    %v5921 = vsel %vm3527, %v5885, 0.0
    %v5922 = vadd.f32 %v5920, %v5921
    %v5923 = vsel %vm3527, %v5886, 0.0
    %v5924 = vadd.f32 %v5922, %v5923
    %v5925 = vsel %vm3527, %v5887, 0.0
    %v5926 = vadd.f32 %v5924, %v5925
    %v5927 = vsel %vm3527, %v5888, 0.0
    %v5928 = vadd.f32 %v5926, %v5927
    %v5929 = vsel %vm3527, %v5889, 0.0
    %v5930 = vadd.f32 %v5928, %v5929
    %v5931 = vsel %vm3527, %v5890, 0.0
    %v5932 = vadd.f32 %v5930, %v5931
    %v5933 = vsel %vm3527, %v5891, 0.0
    %v5934 = vadd.f32 %v5932, %v5933
    %v5935 = vsel %vm3527, %v5892, 0.0
    %v5936 = vadd.f32 %v5934, %v5935
    %v5937 = vsel %vm3527, %v5893, 0.0
    %v5938 = vadd.f32 %v5936, %v5937
    %v5939 = vsel %vm3527, %v5894, 0.0
    %v5940 = vadd.f32 %v5938, %v5939
    %v5941 = vsel %vm3527, %v5895, 0.0
    %v5942 = vadd.f32 %v5940, %v5941
    %v5943 = vsel %vm3527, %v5896, 0.0
    %v5944 = vadd.f32 %v5942, %v5943
    %v5945 = vsel %vm3527, %v5897, 0.0
    %v5946 = vadd.f32 %v5944, %v5945
    %v5947 = vsel %vm3527, %v5898, 0.0
    %v5948 = vadd.f32 %v5946, %v5947
    %v5949 = vsel %vm3527, %v5899, 0.0
    %v5950 = vadd.f32 %v5948, %v5949
    %v5951 = vsel %vm3527, %v5900, 0.0
    %v5952 = vadd.f32 %v5950, %v5951
    %v5953 = vsel %vm3527, %v5901, 0.0
    %v5954 = vadd.f32 %v5952, %v5953
    %v5955 = vsel %vm3527, %v5902, 0.0
    %v5956 = vadd.f32 %v5954, %v5955
    %v5957 = vsel %vm3527, %v5903, 0.0
    %v5958 = vadd.f32 %v5956, %v5957
    %v5959 = vsel %vm3527, %v5904, 0.0
    %v5960 = vadd.f32 %v5958, %v5959
    %v5961 = vsel %vm3527, %v5905, 0.0
    %v5962 = vadd.f32 %v5960, %v5961
    %v5963 = vsel %vm3527, %v5906, 0.0
    %v5964 = vadd.f32 %v5962, %v5963
    %v5965 = vsel %vm3527, %v5907, 0.0
    %v5966 = vadd.f32 %v5964, %v5965
    %v5967 = vsel %vm3527, %v5908, 0.0
    %v5968 = vadd.f32 %v5966, %v5967
    %v5969 = vsel %vm3527, %v5909, 0.0
    %v5970 = vadd.f32 %v5968, %v5969
    %v5971 = vsel %vm3527, %v5910, 0.0
    %v5972 = vadd.f32 %v5970, %v5971
    %v5973 = vsel %vm3527, %v5911, 0.0
    %v5974 = vadd.f32 %v5972, %v5973
    %v5975 = vrcp.pop %v5558
    %v5977 = vsel %vm3678, %v5975, 0
    %5979 = vmatprep.subr.mxu0 0.0
    %5980 = vmatpush1.msra.mxu0 %v3684
    %5981 = vmatprep.subr.mxu0 0.0
    %5982 = vmatpush1.msra.mxu0 0.0
    %5983 = vmatprep.subr.mxu0 0.0
    %5984 = vmatpush1.msra.mxu0 0.0
    %5985 = vmatprep.subr.mxu0 0.0
    %5986 = vmatpush1.msra.mxu0 0.0
    %5987 = vmatprep.subr.mxu0 0.0
    %5988 = vmatpush1.msra.mxu0 0.0
    %5989 = vmatprep.subr.mxu0 0.0
    %5990 = vmatpush1.msra.mxu0 0.0
    %5991 = vmatprep.subr.mxu0 0.0
    %5992 = vmatpush1.msra.mxu0 0.0
    %5993 = vmatprep.subr.mxu0 0.0
    %5994 = vmatpush1.msra.mxu0 0.0
    %5995 = vmatprep.subr.mxu0 0.0
    %5996 = vmatpush1.msra.mxu0 0.0
    %5997 = vmatprep.subr.mxu0 0.0
    %5998 = vmatpush1.msra.mxu0 0.0
    %5999 = vmatprep.subr.mxu0 0.0
    %6000 = vmatpush1.msra.mxu0 0.0
    %6001 = vmatprep.subr.mxu0 0.0
    %6002 = vmatpush1.msra.mxu0 0.0
    %6003 = vmatprep.subr.mxu0 0.0
    %6004 = vmatpush1.msra.mxu0 0.0
    %6005 = vmatprep.subr.mxu0 0.0
    %6006 = vmatpush1.msra.mxu0 0.0
    %6007 = vmatprep.subr.mxu0 0.0
    %6008 = vmatpush1.msra.mxu0 0.0
    %6009 = vmatprep.subr.mxu0 0.0
    %6010 = vmatpush1.msra.mxu0 0.0
    %6011 = vmatprep.subr.mxu0 0.0
    %6012 = vmatpush1.msra.mxu0 0.0
    %6013 = vmatprep.subr.mxu0 0.0
    %6014 = vmatpush1.msra.mxu0 0.0
    %6015 = vmatprep.subr.mxu0 0.0
    %6016 = vmatpush1.msra.mxu0 0.0
    %6017 = vmatprep.subr.mxu0 0.0
    %6018 = vmatpush1.msra.mxu0 0.0
    %6019 = vmatprep.subr.mxu0 0.0
    %6020 = vmatpush1.msra.mxu0 0.0
    %6021 = vmatprep.subr.mxu0 0.0
    %6022 = vmatpush1.msra.mxu0 0.0
    %6023 = vmatprep.subr.mxu0 0.0
    %6024 = vmatpush1.msra.mxu0 0.0
    %6025 = vmatprep.subr.mxu0 0.0
    %6026 = vmatpush1.msra.mxu0 0.0
    %6027 = vmatprep.subr.mxu0 0.0
    %6028 = vmatpush1.msra.mxu0 0.0
    %6029 = vmatprep.subr.mxu0 0.0
    %6030 = vmatpush1.msra.mxu0 0.0
    %6031 = vmatprep.subr.mxu0 0.0
    %6032 = vmatpush1.msra.mxu0 0.0
    %6033 = vmatprep.subr.mxu0 0.0
    %6034 = vmatpush1.msra.mxu0 0.0
    %6035 = vmatprep.subr.mxu0 0.0
    %6036 = vmatpush1.msra.mxu0 0.0
    %6037 = vmatprep.subr.mxu0 0.0
    %6038 = vmatpush1.msra.mxu0 0.0
    %6039 = vmatprep.subr.mxu0 0.0
    %6040 = vmatpush1.msra.mxu0 0.0
    %6041 = vmatprep.subr.mxu0 0.0
    %6042 = vmatpush1.msra.mxu0 0.0
    %6043 = vmatprep.mubr.f32.mxu0 0.0
    %6044 = vmatmul.mubr.f32.gmra.mrb[0].mxu0 %v5977
    %v6045 = vpop.f32.mrb[0].mxu0
    %v6046 = vadd.f32 0.0, %v6045
    %v6047 = vpop.f32.mrb[0].mxu0
    %6048 = vdwg.mxu0
    %v6049 = vmul.f32 %v5974, %v6046
    %v6050 = vmul.f32 %v6049, %v6049
    %v6052 = vsel %vm3527, %v6050, 0
    %6054 = vmatprep.subr.mxu0 0.0
    %6055 = vmatpush1.msra.mxu0 %v3511
    %6056 = vmatprep.subr.mxu0 0.0
    %6057 = vmatpush1.msra.mxu0 %v3512
    %6058 = vmatprep.subr.mxu0 0.0
    %6059 = vmatpush1.msra.mxu0 %v3513
    %6060 = vmatprep.subr.mxu0 0.0
    %6061 = vmatpush1.msra.mxu0 %v3514
    %6062 = vmatprep.subr.mxu0 0.0
    %6063 = vmatpush1.msra.mxu0 %v3515
    %6064 = vmatprep.subr.mxu0 0.0
    %6065 = vmatpush1.msra.mxu0 %v3516
    %6066 = vmatprep.subr.mxu0 0.0
    %6067 = vmatpush1.msra.mxu0 %v3517
    %6068 = vmatprep.subr.mxu0 0.0
    %6069 = vmatpush1.msra.mxu0 %v3518
    %6070 = vmatprep.subr.mxu0 0.0
    %6071 = vmatpush1.msra.mxu0 0.0
    %6072 = vmatprep.subr.mxu0 0.0
    %6073 = vmatpush1.msra.mxu0 0.0
    %6074 = vmatprep.subr.mxu0 0.0
    %6075 = vmatpush1.msra.mxu0 0.0
    %6076 = vmatprep.subr.mxu0 0.0
    %6077 = vmatpush1.msra.mxu0 0.0
    %6078 = vmatprep.subr.mxu0 0.0
    %6079 = vmatpush1.msra.mxu0 0.0
    %6080 = vmatprep.subr.mxu0 0.0
    %6081 = vmatpush1.msra.mxu0 0.0
    %6082 = vmatprep.subr.mxu0 0.0
    %6083 = vmatpush1.msra.mxu0 0.0
    %6084 = vmatprep.subr.mxu0 0.0
    %6085 = vmatpush1.msra.mxu0 0.0
    %6086 = vmatprep.subr.mxu0 0.0
    %6087 = vmatpush1.msra.mxu0 0.0
    %6088 = vmatprep.subr.mxu0 0.0
    %6089 = vmatpush1.msra.mxu0 0.0
    %6090 = vmatprep.subr.mxu0 0.0
    %6091 = vmatpush1.msra.mxu0 0.0
    %6092 = vmatprep.subr.mxu0 0.0
    %6093 = vmatpush1.msra.mxu0 0.0
    %6094 = vmatprep.subr.mxu0 0.0
    %6095 = vmatpush1.msra.mxu0 0.0
    %6096 = vmatprep.subr.mxu0 0.0
    %6097 = vmatpush1.msra.mxu0 0.0
    %6098 = vmatprep.subr.mxu0 0.0
    %6099 = vmatpush1.msra.mxu0 0.0
    %6100 = vmatprep.subr.mxu0 0.0
    %6101 = vmatpush1.msra.mxu0 0.0
    %6102 = vmatprep.subr.mxu0 0.0
    %6103 = vmatpush1.msra.mxu0 0.0
    %6104 = vmatprep.subr.mxu0 0.0
    %6105 = vmatpush1.msra.mxu0 0.0
    %6106 = vmatprep.subr.mxu0 0.0
    %6107 = vmatpush1.msra.mxu0 0.0
    %6108 = vmatprep.subr.mxu0 0.0
    %6109 = vmatpush1.msra.mxu0 0.0
    %6110 = vmatprep.subr.mxu0 0.0
    %6111 = vmatpush1.msra.mxu0 0.0
    %6112 = vmatprep.subr.mxu0 0.0
    %6113 = vmatpush1.msra.mxu0 0.0
    %6114 = vmatprep.subr.mxu0 0.0
    %6115 = vmatpush1.msra.mxu0 0.0
    %6116 = vmatprep.subr.mxu0 0.0
    %6117 = vmatpush1.msra.mxu0 0.0
    %6118 = vmatprep.mubr.f32.mxu0 0.0
    %6119 = vmatmul.mubr.f32.gmra.mrb[0].mxu0 %v6052
    %v6120 = vpop.f32.mrb[0].mxu0
    %v6121 = vadd.f32 0.0, %v6120
    %v6122 = vpop.f32.mrb[0].mxu0
    %6123 = vdwg.mxu0
    %v6124 = vadd.f32 %v6121, 1e-12
    %v6125 = vrsqrt.pop %v6124
    %v6126 = vmul.f32 %v6124, %v6125
    %vm6127 = vcmp.eq.f32.partialorder %v6124, inf
    %v6128 = vsel %vm6127, %v6124, %v6126
    %vm6129 = vcmp.eq.f32.partialorder %v6124, 0.0
    %v6130 = vand.u32 %v6124, 2147483648
    %v6131 = vsel %vm6129, %v6130, %v6128
    %v6132 = vadd.f32 %v6121, 1.0
    %v6133 = vrcp.pop %v6132
    %v6134 = vmul.f32 %v6131, %v6133
    %v6136 = vsel %vm3678, %v6134, 0
    %6138 = vmatprep.subr.mxu0 0.0
    %6139 = vmatpush1.msra.mxu0 %v3684
    %6140 = vmatprep.subr.mxu0 0.0
    %6141 = vmatpush1.msra.mxu0 0.0
    %6142 = vmatprep.subr.mxu0 0.0
    %6143 = vmatpush1.msra.mxu0 0.0
    %6144 = vmatprep.subr.mxu0 0.0
    %6145 = vmatpush1.msra.mxu0 0.0
    %6146 = vmatprep.subr.mxu0 0.0
    %6147 = vmatpush1.msra.mxu0 0.0
    %6148 = vmatprep.subr.mxu0 0.0
    %6149 = vmatpush1.msra.mxu0 0.0
    %6150 = vmatprep.subr.mxu0 0.0
    %6151 = vmatpush1.msra.mxu0 0.0
    %6152 = vmatprep.subr.mxu0 0.0
    %6153 = vmatpush1.msra.mxu0 0.0
    %6154 = vmatprep.subr.mxu0 0.0
    %6155 = vmatpush1.msra.mxu0 0.0
    %6156 = vmatprep.subr.mxu0 0.0
    %6157 = vmatpush1.msra.mxu0 0.0
    %6158 = vmatprep.subr.mxu0 0.0
    %6159 = vmatpush1.msra.mxu0 0.0
    %6160 = vmatprep.subr.mxu0 0.0
    %6161 = vmatpush1.msra.mxu0 0.0
    %6162 = vmatprep.subr.mxu0 0.0
    %6163 = vmatpush1.msra.mxu0 0.0
    %6164 = vmatprep.subr.mxu0 0.0
    %6165 = vmatpush1.msra.mxu0 0.0
    %6166 = vmatprep.subr.mxu0 0.0
    %6167 = vmatpush1.msra.mxu0 0.0
    %6168 = vmatprep.subr.mxu0 0.0
    %6169 = vmatpush1.msra.mxu0 0.0
    %6170 = vmatprep.subr.mxu0 0.0
    %6171 = vmatpush1.msra.mxu0 0.0
    %6172 = vmatprep.subr.mxu0 0.0
    %6173 = vmatpush1.msra.mxu0 0.0
    %6174 = vmatprep.subr.mxu0 0.0
    %6175 = vmatpush1.msra.mxu0 0.0
    %6176 = vmatprep.subr.mxu0 0.0
    %6177 = vmatpush1.msra.mxu0 0.0
    %6178 = vmatprep.subr.mxu0 0.0
    %6179 = vmatpush1.msra.mxu0 0.0
    %6180 = vmatprep.subr.mxu0 0.0
    %6181 = vmatpush1.msra.mxu0 0.0
    %6182 = vmatprep.subr.mxu0 0.0
    %6183 = vmatpush1.msra.mxu0 0.0
    %6184 = vmatprep.subr.mxu0 0.0
    %6185 = vmatpush1.msra.mxu0 0.0
    %6186 = vmatprep.subr.mxu0 0.0
    %6187 = vmatpush1.msra.mxu0 0.0
    %6188 = vmatprep.subr.mxu0 0.0
    %6189 = vmatpush1.msra.mxu0 0.0
    %6190 = vmatprep.subr.mxu0 0.0
    %6191 = vmatpush1.msra.mxu0 0.0
    %6192 = vmatprep.subr.mxu0 0.0
    %6193 = vmatpush1.msra.mxu0 0.0
    %6194 = vmatprep.subr.mxu0 0.0
    %6195 = vmatpush1.msra.mxu0 0.0
    %6196 = vmatprep.subr.mxu0 0.0
    %6197 = vmatpush1.msra.mxu0 0.0
    %6198 = vmatprep.subr.mxu0 0.0
    %6199 = vmatpush1.msra.mxu0 0.0
    %6200 = vmatprep.subr.mxu0 0.0
    %6201 = vmatpush1.msra.mxu0 0.0
    %6202 = vmatprep.mubr.f32.mxu0 0.0
    %6203 = vmatmul.mubr.f32.gmra.mrb[0].mxu0 %v6136
    %v6204 = vpop.f32.mrb[0].mxu0
    %v6205 = vadd.f32 0.0, %v6204
    %v6206 = vpop.f32.mrb[0].mxu0
    %6207 = vdwg.mxu0
    %v6208 = vmul.f32 %v6205, %v6049
    %6209 = vst.msk [vmem:[#allocation7] sm:$0xff] %vm3527, %v6208
    // Predicated region
    $region18: #{tpu_custom_call.1} parent=1 // pred_check
      _
    $region19: #{tpu_custom_call.1} parent=1 // pred_check_branch
      %6211 = sbr.rel (0) target = $region21
    $region20: #{tpu_custom_call.1} parent=1 // pred_region
      %s6213 = ssub.s32 128, 128
      %6214 = vsyncadd [#allocation4], %s6213
      %s6216 = sshll.u32 [#allocation7], 4
      %s6217 = int_to_ptr.vmem [resolvable:$true] %s6216
      %6219 = dma.vmem_to_hbm [thread:$0]  %s6217, 128, %s2, [#allocation4]
    $region21: #{tpu_custom_call.1} parent=1 // pred_fallthru
      _
    // Predicated region
    $region22: #{tpu_custom_call.1} parent=1 // pred_check
      _
    $region23: #{tpu_custom_call.1} parent=1 // pred_check_branch
      %6221 = sbr.rel (0) target = $region25
    $region24: #{tpu_custom_call.1} parent=1 // pred_region
      %6222 = dma.done [#allocation4], 128
    $region25: #{tpu_custom_call.1} parent=1 // pred_fallthru
      _
    %6223 = vsyncpa [#allocation3], 1
    %6224 = vsyncpa [#allocation6], 1
    %6225 = vsyncpa [#allocation4], 1

</llo_original>
